<compile_context>
chip_gen: v5e
topology: v5e:2x2
jax: 0.10.0
libtpu: 0.0.40
codegen_flags: <defaults>
</compile_context>

<pallas_src>
import math

import jax
import jax.numpy as jnp
import numpy as np
from jax.experimental import pallas as pl
from jax.experimental.pallas import tpu as pltpu

# Keep f32 matmul passes everywhere so the tolerance check is not polluted by
# default bf16 matmul passes on TPU (applies to the pure-JAX reference too).
jax.config.update("jax_default_matmul_precision", "float32")


def make_pma_kernel(block_b: int, seq: int, num_seeds: int, dim: int,
                    num_heads: int):
    assert dim % num_heads == 0, "dim must divide evenly into heads"
    head_dim = dim // num_heads
    scale = 1.0 / math.sqrt(dim)  # PyTorch MAB divides by sqrt(dim_V), NOT sqrt(head_dim)

    def kernel(seed_ref, x_ref, wq_ref, bq_ref, wkv_ref, bkv_ref,
               wo_ref, bo_ref, o_ref):
        f32 = jnp.float32

        # ---- projections -------------------------------------------------
        # fc_q(S): batch independent -> one tiny (M, D) matmul per grid step.
        q = jnp.dot(seed_ref[...], wq_ref[...].astype(f32),
                    preferred_element_type=f32) + bq_ref[...]          # (M, D)
        qs = q * scale            # scale hoisted out of the head loop

        # Fused fc_k | fc_v: one lane-dense (block_b*N, 2D) MXU matmul.
        x2 = x_ref[...].reshape(block_b * seq, dim)                    # (bb*N, D)
        kv = jnp.dot(x2, wkv_ref[...].astype(f32),
                     preferred_element_type=f32) + bkv_ref[...]        # (bb*N, 2D)

        # ---- scaled dot-product attention (static loops, all 2-D math) ----
        rows = []
        for b in range(block_b):
            r0 = b * seq
            heads = []
            for h in range(num_heads):
                lo = h * head_dim
                q_h = q[:, lo:lo + head_dim]                            # (M, hd)
                k_h = kv[r0:r0 + seq, lo:lo + head_dim]                 # (N, hd)
                v_h = kv[r0:r0 + seq, dim + lo:dim + lo + head_dim]     # (N, hd)

                s = jnp.einsum("md,nd->mn", qs[:, lo:lo + head_dim], k_h,
                               preferred_element_type=f32)              # (M, N)
                s = s - jnp.max(s, axis=-1, keepdims=True)
                p = jnp.exp(s)
                a = p * pl.reciprocal(jnp.sum(p, axis=-1, keepdims=True),
                                      approx=True)                      # softmax
                heads.append(q_h + jnp.dot(a, v_h,
                                           preferred_element_type=f32)) # (M, hd)
            rows.append(jnp.concatenate(heads, axis=-1))                # (M, D)
        o = jnp.concatenate(rows, axis=0)                               # (bb*M, D)

        # ---- O = O + relu(fc_o(O)) -> one sublane/lane-dense slab ---------
        ff = jnp.dot(o, wo_ref[...].astype(f32),
                     preferred_element_type=f32) + bo_ref[...]
        o_ref[...] = (o + jnp.maximum(ff, 0.0)).astype(o_ref.dtype)

    return kernel


def _pick_block_b(batch: int, num_seeds: int) -> int:
    """Smallest batch block whose output rows fill whole 8-sublane vregs."""
    bb = max(1, -(-8 // num_seeds))          # ceil(8 / num_seeds)
    while bb < batch and (batch % bb != 0 or (bb * num_seeds) % 8 != 0):
        bb += 1
    if bb >= batch:
        return batch                         # single step: block == full output
    return bb


def pma_forward(x, params, num_heads, *, block_b=None,
                weight_dtype=jnp.bfloat16):
    """PMA forward.  x: (B, N, dim) float32 -> (B, num_seeds, dim) float32."""
    B, N, dim = x.shape
    M = params["seed"].shape[0]
    assert dim % 128 == 0, "dim must be lane-dense (multiple of 128)"
    assert dim % num_heads == 0, "dim must divide evenly into heads"
    if block_b is None:
        block_b = _pick_block_b(B, M)
    assert B % block_b == 0
    grid_b = B // block_b

    kernel = make_pma_kernel(block_b, N, M, dim, num_heads)

    # Fuse K|V projection weights wrapper-side; cast weight matrices to bf16 to
    # halve the weight DMA (they dominate bytes moved at small B*N).  Matmul
    # math stays f32 in the kernel; biases/seeds/x stay f32.
    wq = params["wq"].astype(weight_dtype)
    wkv = jnp.concatenate([params["wk"], params["wv"]], axis=1).astype(weight_dtype)
    bkv = jnp.concatenate([params["bk"], params["bv"]], axis=1)
    wo = params["wo"].astype(weight_dtype)

    def const(shape):
        return pl.BlockSpec(shape, lambda i: (0,) * len(shape))

    out_flat = pl.pallas_call(
        kernel,
        out_shape=jax.ShapeDtypeStruct((B * M, dim), jnp.float32),
        grid=(grid_b,),
        in_specs=[
            const((M, dim)),                                       # seed
            pl.BlockSpec((block_b, N, dim), lambda i: (i, 0, 0)),  # x (tiled)
            const((dim, dim)),                                     # wq
            const((1, dim)),                                       # bq
            const((dim, 2 * dim)),                                 # wkv
            const((1, 2 * dim)),                                   # bkv
            const((dim, dim)),                                     # wo
            const((1, dim)),                                       # bo
        ],
        out_specs=pl.BlockSpec((block_b * M, dim), lambda i: (i, 0)),
        compiler_params=pltpu.CompilerParams(
            dimension_semantics=("parallel",),
            # Tiny working set here; at large B*N keep the x tile + the f32 kv
            # intermediate (2x the tile) + output, double-buffered, under the
            # scoped limit (v5e default 16 MiB, v6e/v7x 32 MiB; v7x physical
            # VMEM is 64 MiB).
            vmem_limit_bytes=32 * 1024 * 1024,
        ),
    )(params["seed"], x, wq, params["bq"], wkv, bkv, wo, params["bo"])
    return out_flat.reshape(B, M, dim)


def init_pma_params(key, dim, num_seeds):
    """Deterministic synthetic params (PyTorch-like init), weights as (in, out)."""
    ks = jax.random.split(key, 9)

    def linear(kw, kb, fan_in, fan_out):
        bound = 1.0 / math.sqrt(fan_in)
        w = jax.random.uniform(kw, (fan_in, fan_out), jnp.float32, -bound, bound)
        b = jax.random.uniform(kb, (1, fan_out), jnp.float32, -bound, bound)
        return w, b

    wq, bq = linear(ks[0], ks[1], dim, dim)
    wk, bk = linear(ks[2], ks[3], dim, dim)
    wv, bv = linear(ks[4], ks[5], dim, dim)
    wo, bo = linear(ks[6], ks[7], dim, dim)
    xb = math.sqrt(6.0 / (num_seeds * dim + dim))        # xavier_uniform-ish
    seed = jax.random.uniform(ks[8], (num_seeds, dim), jnp.float32, -xb, xb)
    return dict(seed=seed, wq=wq, bq=bq, wk=wk, bk=bk, wv=wv, bv=bv,
                wo=wo, bo=bo)


# ---- pure-JAX reference (mirrors the PyTorch module, bn=False) -------------
def pma_ref(x, p, num_heads):
    B = x.shape[0]
    dim = p["wq"].shape[1]
    hd = dim // num_heads
    S = jnp.broadcast_to(p["seed"][None], (B,) + p["seed"].shape)   # (B, M, dim)
    q = S @ p["wq"] + p["bq"]
    k = x @ p["wk"] + p["bk"]
    v = x @ p["wv"] + p["bv"]
    outs = []
    for h in range(num_heads):
        lo, hi = h * hd, (h + 1) * hd
        s = jnp.einsum("bmd,bnd->bmn", q[..., lo:hi], k[..., lo:hi]) / math.sqrt(dim)
        a = jax.nn.softmax(s, axis=-1)
        outs.append(q[..., lo:hi] + jnp.einsum("bmn,bnd->bmd", a, v[..., lo:hi]))
    o = jnp.concatenate(outs, axis=-1)
    return o + jax.nn.relu(o @ p["wo"] + p["bo"])


if __name__ == "__main__":
    B, N = 4, 8                 # batch, set (sequence) size
    DIM, HEADS, SEEDS = 128, 4, 4

    root = jax.random.PRNGKey(0)
    k_x, k_p = jax.random.split(root)

    x = jax.random.normal(k_x, (B, N, DIM), jnp.float32)
    params = init_pma_params(k_p, DIM, SEEDS)

    pma = jax.jit(lambda xx, pp: pma_forward(xx, pp, num_heads=HEADS))
    out = jax.block_until_ready(pma(x, params))
    assert out.shape == (B, SEEDS, DIM), out.shape

    # Primary check: same math as the module using the SAME (bf16-rounded)
    # weights the kernel actually consumes -> tight tolerance on kernel math.
    params_q = dict(params)
    for kname in ("wq", "wk", "wv", "wo"):
        params_q[kname] = params[kname].astype(jnp.bfloat16).astype(jnp.float32)
    ref_q = pma_ref(x, params_q, HEADS)
    np.testing.assert_allclose(np.asarray(out), np.asarray(ref_q),
                               rtol=2e-3, atol=2e-3)

    # Secondary check: full-f32 module semantics; the only difference is the
    # wrapper-side bf16 weight quantization recommended by the perf review.
    ref = pma_ref(x, params, HEADS)
    np.testing.assert_allclose(np.asarray(out), np.asarray(ref),
                               rtol=1e-2, atol=5e-3)

    print("KERNEL_OK")
</pallas_src>

<mosaic_0001>
module attributes {stable_mosaic.version = 11 : i64} {
  func.func @kernel(%arg0: i32, %arg1: memref<4x128xf32, #tpu.memory_space<vmem>>, %arg2: memref<2x8x128xf32, #tpu.memory_space<vmem>>, %arg3: memref<128x128xbf16, #tpu.memory_space<vmem>>, %arg4: memref<1x128xf32, #tpu.memory_space<vmem>>, %arg5: memref<128x256xbf16, #tpu.memory_space<vmem>>, %arg6: memref<1x256xf32, #tpu.memory_space<vmem>>, %arg7: memref<128x128xbf16, #tpu.memory_space<vmem>>, %arg8: memref<1x128xf32, #tpu.memory_space<vmem>>, %arg9: memref<8x128xf32, #tpu.memory_space<vmem>>) attributes {dimension_semantics = [#tpu.dimension_semantics<parallel>], iteration_bounds = array<i64: 2>, scalar_prefetch = 0 : i64, scratch_operands = 0 : i64, tpu.core_type = #tpu.core_type<tc>, window_params = [{pipeline_mode = #tpu.pipeline_mode<synchronous>, transform_indices = @transform_0, window_bounds = array<i64: 4, 128>}, {transform_indices = @transform_1, window_bounds = array<i64: 2, 8, 128>}, {pipeline_mode = #tpu.pipeline_mode<synchronous>, transform_indices = @transform_2, window_bounds = array<i64: 128, 128>}, {pipeline_mode = #tpu.pipeline_mode<synchronous>, transform_indices = @transform_3, window_bounds = array<i64: 1, 128>}, {pipeline_mode = #tpu.pipeline_mode<synchronous>, transform_indices = @transform_4, window_bounds = array<i64: 128, 256>}, {pipeline_mode = #tpu.pipeline_mode<synchronous>, transform_indices = @transform_5, window_bounds = array<i64: 1, 256>}, {pipeline_mode = #tpu.pipeline_mode<synchronous>, transform_indices = @transform_6, window_bounds = array<i64: 128, 128>}, {pipeline_mode = #tpu.pipeline_mode<synchronous>, transform_indices = @transform_7, window_bounds = array<i64: 1, 128>}, {transform_indices = @transform_8, window_bounds = array<i64: 8, 128>}]} {
    %c0 = arith.constant 0 : index
    %c0_0 = arith.constant 0 : index
    %0 = vector.load %arg1[%c0, %c0_0] : memref<4x128xf32, #tpu.memory_space<vmem>>, vector<4x128xf32>
    %c0_1 = arith.constant 0 : index
    %c0_2 = arith.constant 0 : index
    %1 = vector.load %arg3[%c0_1, %c0_2] : memref<128x128xbf16, #tpu.memory_space<vmem>>, vector<128x128xbf16>
    %2 = arith.extf %1 : vector<128x128xbf16> to vector<128x128xf32>
    %cst = arith.constant dense<0.000000e+00> : vector<4x128xf32>
    %3 = tpu.matmul %0, %2, %cst {dimension_numbers = #tpu.dot_dimension_numbers<[1], [0], [0], [1], [0, 0, 1, 1], [], []>, precision = #tpu.contract_precision<fp32>} : vector<4x128xf32>, vector<128x128xf32>, vector<4x128xf32> -> vector<4x128xf32>
    %c0_3 = arith.constant 0 : index
    %c0_4 = arith.constant 0 : index
    %4 = vector.load %arg4[%c0_3, %c0_4] : memref<1x128xf32, #tpu.memory_space<vmem>>, vector<1x128xf32>
    %5 = vector.broadcast %4 : vector<1x128xf32> to vector<4x128xf32>
    %6 = arith.addf %3, %5 : vector<4x128xf32>
    %cst_5 = arith.constant 0.0883883461 : f32
    %7 = vector.broadcast %cst_5 : f32 to vector<4x128xf32>
    %8 = arith.mulf %6, %7 : vector<4x128xf32>
    %c0_6 = arith.constant 0 : index
    %c0_7 = arith.constant 0 : index
    %c0_8 = arith.constant 0 : index
    %9 = vector.load %arg2[%c0_6, %c0_7, %c0_8] : memref<2x8x128xf32, #tpu.memory_space<vmem>>, vector<2x8x128xf32>
    %10 = vector.shape_cast %9 : vector<2x8x128xf32> to vector<16x128xf32>
    %c0_9 = arith.constant 0 : index
    %c0_10 = arith.constant 0 : index
    %11 = vector.load %arg5[%c0_9, %c0_10] : memref<128x256xbf16, #tpu.memory_space<vmem>>, vector<128x256xbf16>
    %12 = arith.extf %11 : vector<128x256xbf16> to vector<128x256xf32>
    %cst_11 = arith.constant dense<0.000000e+00> : vector<16x256xf32>
    %13 = tpu.matmul %10, %12, %cst_11 {dimension_numbers = #tpu.dot_dimension_numbers<[1], [0], [0], [1], [0, 0, 1, 1], [], []>, precision = #tpu.contract_precision<fp32>} : vector<16x128xf32>, vector<128x256xf32>, vector<16x256xf32> -> vector<16x256xf32>
    %c0_12 = arith.constant 0 : index
    %c0_13 = arith.constant 0 : index
    %14 = vector.load %arg6[%c0_12, %c0_13] : memref<1x256xf32, #tpu.memory_space<vmem>>, vector<1x256xf32>
    %15 = vector.broadcast %14 : vector<1x256xf32> to vector<16x256xf32>
    %16 = arith.addf %13, %15 : vector<16x256xf32>
    %17 = vector.extract_strided_slice %6 {offsets = [0, 0], sizes = [4, 32], strides = [1, 1]} : vector<4x128xf32> to vector<4x32xf32>
    %18 = vector.extract_strided_slice %16 {offsets = [0, 0], sizes = [8, 32], strides = [1, 1]} : vector<16x256xf32> to vector<8x32xf32>
    %19 = vector.extract_strided_slice %16 {offsets = [0, 128], sizes = [8, 32], strides = [1, 1]} : vector<16x256xf32> to vector<8x32xf32>
    %20 = vector.extract_strided_slice %8 {offsets = [0, 0], sizes = [4, 32], strides = [1, 1]} : vector<4x128xf32> to vector<4x32xf32>
    "tpu.trace_start"() <{level = 10 : i32, message = "md,nd->mn"}> : () -> ()
    %cst_14 = arith.constant dense<0.000000e+00> : vector<4x8xf32>
    %21 = tpu.matmul %20, %18, %cst_14 {dimension_numbers = #tpu.dot_dimension_numbers<[1], [1], [0], [0], [0, 0, 1, 0], [], []>, precision = #tpu.contract_precision<fp32>} : vector<4x32xf32>, vector<8x32xf32>, vector<4x8xf32> -> vector<4x8xf32>
    "tpu.trace_stop"() : () -> ()
    %cst_15 = arith.constant dense<0xFF800000> : vector<4xf32>
    %22 = vector.multi_reduction <maximumf>, %21, %cst_15 [1] : vector<4x8xf32> to vector<4xf32>
    %23 = vector.shape_cast %22 : vector<4xf32> to vector<4x1xf32>
    %24 = vector.broadcast %23 : vector<4x1xf32> to vector<4x8xf32>
    %25 = arith.subf %21, %24 : vector<4x8xf32>
    %26 = math.exp %25 : vector<4x8xf32>
    %cst_16 = arith.constant dense<0.000000e+00> : vector<4xf32>
    %27 = vector.multi_reduction <add>, %26, %cst_16 [1] : vector<4x8xf32> to vector<4xf32>
    %28 = vector.shape_cast %27 : vector<4xf32> to vector<4x1xf32>
    %29 = tpu.reciprocal %28 {approx = true} : vector<4x1xf32> -> vector<4x1xf32>
    %30 = vector.broadcast %29 : vector<4x1xf32> to vector<4x8xf32>
    %31 = arith.mulf %26, %30 : vector<4x8xf32>
    %cst_17 = arith.constant dense<0.000000e+00> : vector<4x32xf32>
    %32 = tpu.matmul %31, %19, %cst_17 {dimension_numbers = #tpu.dot_dimension_numbers<[1], [0], [0], [1], [0, 0, 1, 1], [], []>, precision = #tpu.contract_precision<fp32>} : vector<4x8xf32>, vector<8x32xf32>, vector<4x32xf32> -> vector<4x32xf32>
    %33 = arith.addf %17, %32 : vector<4x32xf32>
    %34 = vector.extract_strided_slice %6 {offsets = [0, 32], sizes = [4, 32], strides = [1, 1]} : vector<4x128xf32> to vector<4x32xf32>
    %35 = vector.extract_strided_slice %16 {offsets = [0, 32], sizes = [8, 32], strides = [1, 1]} : vector<16x256xf32> to vector<8x32xf32>
    %36 = vector.extract_strided_slice %16 {offsets = [0, 160], sizes = [8, 32], strides = [1, 1]} : vector<16x256xf32> to vector<8x32xf32>
    %37 = vector.extract_strided_slice %8 {offsets = [0, 32], sizes = [4, 32], strides = [1, 1]} : vector<4x128xf32> to vector<4x32xf32>
    "tpu.trace_start"() <{level = 10 : i32, message = "md,nd->mn"}> : () -> ()
    %cst_18 = arith.constant dense<0.000000e+00> : vector<4x8xf32>
    %38 = tpu.matmul %37, %35, %cst_18 {dimension_numbers = #tpu.dot_dimension_numbers<[1], [1], [0], [0], [0, 0, 1, 0], [], []>, precision = #tpu.contract_precision<fp32>} : vector<4x32xf32>, vector<8x32xf32>, vector<4x8xf32> -> vector<4x8xf32>
    "tpu.trace_stop"() : () -> ()
    %cst_19 = arith.constant dense<0xFF800000> : vector<4xf32>
    %39 = vector.multi_reduction <maximumf>, %38, %cst_19 [1] : vector<4x8xf32> to vector<4xf32>
    %40 = vector.shape_cast %39 : vector<4xf32> to vector<4x1xf32>
    %41 = vector.broadcast %40 : vector<4x1xf32> to vector<4x8xf32>
    %42 = arith.subf %38, %41 : vector<4x8xf32>
    %43 = math.exp %42 : vector<4x8xf32>
    %cst_20 = arith.constant dense<0.000000e+00> : vector<4xf32>
    %44 = vector.multi_reduction <add>, %43, %cst_20 [1] : vector<4x8xf32> to vector<4xf32>
    %45 = vector.shape_cast %44 : vector<4xf32> to vector<4x1xf32>
    %46 = tpu.reciprocal %45 {approx = true} : vector<4x1xf32> -> vector<4x1xf32>
    %47 = vector.broadcast %46 : vector<4x1xf32> to vector<4x8xf32>
    %48 = arith.mulf %43, %47 : vector<4x8xf32>
    %cst_21 = arith.constant dense<0.000000e+00> : vector<4x32xf32>
    %49 = tpu.matmul %48, %36, %cst_21 {dimension_numbers = #tpu.dot_dimension_numbers<[1], [0], [0], [1], [0, 0, 1, 1], [], []>, precision = #tpu.contract_precision<fp32>} : vector<4x8xf32>, vector<8x32xf32>, vector<4x32xf32> -> vector<4x32xf32>
    %50 = arith.addf %34, %49 : vector<4x32xf32>
    %51 = vector.extract_strided_slice %6 {offsets = [0, 64], sizes = [4, 32], strides = [1, 1]} : vector<4x128xf32> to vector<4x32xf32>
    %52 = vector.extract_strided_slice %16 {offsets = [0, 64], sizes = [8, 32], strides = [1, 1]} : vector<16x256xf32> to vector<8x32xf32>
    %53 = vector.extract_strided_slice %16 {offsets = [0, 192], sizes = [8, 32], strides = [1, 1]} : vector<16x256xf32> to vector<8x32xf32>
    %54 = vector.extract_strided_slice %8 {offsets = [0, 64], sizes = [4, 32], strides = [1, 1]} : vector<4x128xf32> to vector<4x32xf32>
    "tpu.trace_start"() <{level = 10 : i32, message = "md,nd->mn"}> : () -> ()
    %cst_22 = arith.constant dense<0.000000e+00> : vector<4x8xf32>
    %55 = tpu.matmul %54, %52, %cst_22 {dimension_numbers = #tpu.dot_dimension_numbers<[1], [1], [0], [0], [0, 0, 1, 0], [], []>, precision = #tpu.contract_precision<fp32>} : vector<4x32xf32>, vector<8x32xf32>, vector<4x8xf32> -> vector<4x8xf32>
    "tpu.trace_stop"() : () -> ()
    %cst_23 = arith.constant dense<0xFF800000> : vector<4xf32>
    %56 = vector.multi_reduction <maximumf>, %55, %cst_23 [1] : vector<4x8xf32> to vector<4xf32>
    %57 = vector.shape_cast %56 : vector<4xf32> to vector<4x1xf32>
    %58 = vector.broadcast %57 : vector<4x1xf32> to vector<4x8xf32>
    %59 = arith.subf %55, %58 : vector<4x8xf32>
    %60 = math.exp %59 : vector<4x8xf32>
    %cst_24 = arith.constant dense<0.000000e+00> : vector<4xf32>
    %61 = vector.multi_reduction <add>, %60, %cst_24 [1] : vector<4x8xf32> to vector<4xf32>
    %62 = vector.shape_cast %61 : vector<4xf32> to vector<4x1xf32>
    %63 = tpu.reciprocal %62 {approx = true} : vector<4x1xf32> -> vector<4x1xf32>
    %64 = vector.broadcast %63 : vector<4x1xf32> to vector<4x8xf32>
    %65 = arith.mulf %60, %64 : vector<4x8xf32>
    %cst_25 = arith.constant dense<0.000000e+00> : vector<4x32xf32>
    %66 = tpu.matmul %65, %53, %cst_25 {dimension_numbers = #tpu.dot_dimension_numbers<[1], [0], [0], [1], [0, 0, 1, 1], [], []>, precision = #tpu.contract_precision<fp32>} : vector<4x8xf32>, vector<8x32xf32>, vector<4x32xf32> -> vector<4x32xf32>
    %67 = arith.addf %51, %66 : vector<4x32xf32>
    %68 = vector.extract_strided_slice %6 {offsets = [0, 96], sizes = [4, 32], strides = [1, 1]} : vector<4x128xf32> to vector<4x32xf32>
    %69 = vector.extract_strided_slice %16 {offsets = [0, 96], sizes = [8, 32], strides = [1, 1]} : vector<16x256xf32> to vector<8x32xf32>
    %70 = vector.extract_strided_slice %16 {offsets = [0, 224], sizes = [8, 32], strides = [1, 1]} : vector<16x256xf32> to vector<8x32xf32>
    %71 = vector.extract_strided_slice %8 {offsets = [0, 96], sizes = [4, 32], strides = [1, 1]} : vector<4x128xf32> to vector<4x32xf32>
    "tpu.trace_start"() <{level = 10 : i32, message = "md,nd->mn"}> : () -> ()
    %cst_26 = arith.constant dense<0.000000e+00> : vector<4x8xf32>
    %72 = tpu.matmul %71, %69, %cst_26 {dimension_numbers = #tpu.dot_dimension_numbers<[1], [1], [0], [0], [0, 0, 1, 0], [], []>, precision = #tpu.contract_precision<fp32>} : vector<4x32xf32>, vector<8x32xf32>, vector<4x8xf32> -> vector<4x8xf32>
    "tpu.trace_stop"() : () -> ()
    %cst_27 = arith.constant dense<0xFF800000> : vector<4xf32>
    %73 = vector.multi_reduction <maximumf>, %72, %cst_27 [1] : vector<4x8xf32> to vector<4xf32>
    %74 = vector.shape_cast %73 : vector<4xf32> to vector<4x1xf32>
    %75 = vector.broadcast %74 : vector<4x1xf32> to vector<4x8xf32>
    %76 = arith.subf %72, %75 : vector<4x8xf32>
    %77 = math.exp %76 : vector<4x8xf32>
    %cst_28 = arith.constant dense<0.000000e+00> : vector<4xf32>
    %78 = vector.multi_reduction <add>, %77, %cst_28 [1] : vector<4x8xf32> to vector<4xf32>
    %79 = vector.shape_cast %78 : vector<4xf32> to vector<4x1xf32>
    %80 = tpu.reciprocal %79 {approx = true} : vector<4x1xf32> -> vector<4x1xf32>
    %81 = vector.broadcast %80 : vector<4x1xf32> to vector<4x8xf32>
    %82 = arith.mulf %77, %81 : vector<4x8xf32>
    %cst_29 = arith.constant dense<0.000000e+00> : vector<4x32xf32>
    %83 = tpu.matmul %82, %70, %cst_29 {dimension_numbers = #tpu.dot_dimension_numbers<[1], [0], [0], [1], [0, 0, 1, 1], [], []>, precision = #tpu.contract_precision<fp32>} : vector<4x8xf32>, vector<8x32xf32>, vector<4x32xf32> -> vector<4x32xf32>
    %84 = arith.addf %68, %83 : vector<4x32xf32>
    %85 = tpu.concatenate %33, %50, %67, %84 in 1 : vector<4x32xf32>, vector<4x32xf32>, vector<4x32xf32>, vector<4x32xf32> -> vector<4x128xf32>
    %86 = vector.extract_strided_slice %6 {offsets = [0, 0], sizes = [4, 32], strides = [1, 1]} : vector<4x128xf32> to vector<4x32xf32>
    %87 = vector.extract_strided_slice %16 {offsets = [8, 0], sizes = [8, 32], strides = [1, 1]} : vector<16x256xf32> to vector<8x32xf32>
    %88 = vector.extract_strided_slice %16 {offsets = [8, 128], sizes = [8, 32], strides = [1, 1]} : vector<16x256xf32> to vector<8x32xf32>
    %89 = vector.extract_strided_slice %8 {offsets = [0, 0], sizes = [4, 32], strides = [1, 1]} : vector<4x128xf32> to vector<4x32xf32>
    "tpu.trace_start"() <{level = 10 : i32, message = "md,nd->mn"}> : () -> ()
    %cst_30 = arith.constant dense<0.000000e+00> : vector<4x8xf32>
    %90 = tpu.matmul %89, %87, %cst_30 {dimension_numbers = #tpu.dot_dimension_numbers<[1], [1], [0], [0], [0, 0, 1, 0], [], []>, precision = #tpu.contract_precision<fp32>} : vector<4x32xf32>, vector<8x32xf32>, vector<4x8xf32> -> vector<4x8xf32>
    "tpu.trace_stop"() : () -> ()
    %cst_31 = arith.constant dense<0xFF800000> : vector<4xf32>
    %91 = vector.multi_reduction <maximumf>, %90, %cst_31 [1] : vector<4x8xf32> to vector<4xf32>
    %92 = vector.shape_cast %91 : vector<4xf32> to vector<4x1xf32>
    %93 = vector.broadcast %92 : vector<4x1xf32> to vector<4x8xf32>
    %94 = arith.subf %90, %93 : vector<4x8xf32>
    %95 = math.exp %94 : vector<4x8xf32>
    %cst_32 = arith.constant dense<0.000000e+00> : vector<4xf32>
    %96 = vector.multi_reduction <add>, %95, %cst_32 [1] : vector<4x8xf32> to vector<4xf32>
    %97 = vector.shape_cast %96 : vector<4xf32> to vector<4x1xf32>
    %98 = tpu.reciprocal %97 {approx = true} : vector<4x1xf32> -> vector<4x1xf32>
    %99 = vector.broadcast %98 : vector<4x1xf32> to vector<4x8xf32>
    %100 = arith.mulf %95, %99 : vector<4x8xf32>
    %cst_33 = arith.constant dense<0.000000e+00> : vector<4x32xf32>
    %101 = tpu.matmul %100, %88, %cst_33 {dimension_numbers = #tpu.dot_dimension_numbers<[1], [0], [0], [1], [0, 0, 1, 1], [], []>, precision = #tpu.contract_precision<fp32>} : vector<4x8xf32>, vector<8x32xf32>, vector<4x32xf32> -> vector<4x32xf32>
    %102 = arith.addf %86, %101 : vector<4x32xf32>
    %103 = vector.extract_strided_slice %6 {offsets = [0, 32], sizes = [4, 32], strides = [1, 1]} : vector<4x128xf32> to vector<4x32xf32>
    %104 = vector.extract_strided_slice %16 {offsets = [8, 32], sizes = [8, 32], strides = [1, 1]} : vector<16x256xf32> to vector<8x32xf32>
    %105 = vector.extract_strided_slice %16 {offsets = [8, 160], sizes = [8, 32], strides = [1, 1]} : vector<16x256xf32> to vector<8x32xf32>
    %106 = vector.extract_strided_slice %8 {offsets = [0, 32], sizes = [4, 32], strides = [1, 1]} : vector<4x128xf32> to vector<4x32xf32>
    "tpu.trace_start"() <{level = 10 : i32, message = "md,nd->mn"}> : () -> ()
    %cst_34 = arith.constant dense<0.000000e+00> : vector<4x8xf32>
    %107 = tpu.matmul %106, %104, %cst_34 {dimension_numbers = #tpu.dot_dimension_numbers<[1], [1], [0], [0], [0, 0, 1, 0], [], []>, precision = #tpu.contract_precision<fp32>} : vector<4x32xf32>, vector<8x32xf32>, vector<4x8xf32> -> vector<4x8xf32>
    "tpu.trace_stop"() : () -> ()
    %cst_35 = arith.constant dense<0xFF800000> : vector<4xf32>
    %108 = vector.multi_reduction <maximumf>, %107, %cst_35 [1] : vector<4x8xf32> to vector<4xf32>
    %109 = vector.shape_cast %108 : vector<4xf32> to vector<4x1xf32>
    %110 = vector.broadcast %109 : vector<4x1xf32> to vector<4x8xf32>
    %111 = arith.subf %107, %110 : vector<4x8xf32>
    %112 = math.exp %111 : vector<4x8xf32>
    %cst_36 = arith.constant dense<0.000000e+00> : vector<4xf32>
    %113 = vector.multi_reduction <add>, %112, %cst_36 [1] : vector<4x8xf32> to vector<4xf32>
    %114 = vector.shape_cast %113 : vector<4xf32> to vector<4x1xf32>
    %115 = tpu.reciprocal %114 {approx = true} : vector<4x1xf32> -> vector<4x1xf32>
    %116 = vector.broadcast %115 : vector<4x1xf32> to vector<4x8xf32>
    %117 = arith.mulf %112, %116 : vector<4x8xf32>
    %cst_37 = arith.constant dense<0.000000e+00> : vector<4x32xf32>
    %118 = tpu.matmul %117, %105, %cst_37 {dimension_numbers = #tpu.dot_dimension_numbers<[1], [0], [0], [1], [0, 0, 1, 1], [], []>, precision = #tpu.contract_precision<fp32>} : vector<4x8xf32>, vector<8x32xf32>, vector<4x32xf32> -> vector<4x32xf32>
    %119 = arith.addf %103, %118 : vector<4x32xf32>
    %120 = vector.extract_strided_slice %6 {offsets = [0, 64], sizes = [4, 32], strides = [1, 1]} : vector<4x128xf32> to vector<4x32xf32>
    %121 = vector.extract_strided_slice %16 {offsets = [8, 64], sizes = [8, 32], strides = [1, 1]} : vector<16x256xf32> to vector<8x32xf32>
    %122 = vector.extract_strided_slice %16 {offsets = [8, 192], sizes = [8, 32], strides = [1, 1]} : vector<16x256xf32> to vector<8x32xf32>
    %123 = vector.extract_strided_slice %8 {offsets = [0, 64], sizes = [4, 32], strides = [1, 1]} : vector<4x128xf32> to vector<4x32xf32>
    "tpu.trace_start"() <{level = 10 : i32, message = "md,nd->mn"}> : () -> ()
    %cst_38 = arith.constant dense<0.000000e+00> : vector<4x8xf32>
    %124 = tpu.matmul %123, %121, %cst_38 {dimension_numbers = #tpu.dot_dimension_numbers<[1], [1], [0], [0], [0, 0, 1, 0], [], []>, precision = #tpu.contract_precision<fp32>} : vector<4x32xf32>, vector<8x32xf32>, vector<4x8xf32> -> vector<4x8xf32>
    "tpu.trace_stop"() : () -> ()
    %cst_39 = arith.constant dense<0xFF800000> : vector<4xf32>
    %125 = vector.multi_reduction <maximumf>, %124, %cst_39 [1] : vector<4x8xf32> to vector<4xf32>
    %126 = vector.shape_cast %125 : vector<4xf32> to vector<4x1xf32>
    %127 = vector.broadcast %126 : vector<4x1xf32> to vector<4x8xf32>
    %128 = arith.subf %124, %127 : vector<4x8xf32>
    %129 = math.exp %128 : vector<4x8xf32>
    %cst_40 = arith.constant dense<0.000000e+00> : vector<4xf32>
    %130 = vector.multi_reduction <add>, %129, %cst_40 [1] : vector<4x8xf32> to vector<4xf32>
    %131 = vector.shape_cast %130 : vector<4xf32> to vector<4x1xf32>
    %132 = tpu.reciprocal %131 {approx = true} : vector<4x1xf32> -> vector<4x1xf32>
    %133 = vector.broadcast %132 : vector<4x1xf32> to vector<4x8xf32>
    %134 = arith.mulf %129, %133 : vector<4x8xf32>
    %cst_41 = arith.constant dense<0.000000e+00> : vector<4x32xf32>
    %135 = tpu.matmul %134, %122, %cst_41 {dimension_numbers = #tpu.dot_dimension_numbers<[1], [0], [0], [1], [0, 0, 1, 1], [], []>, precision = #tpu.contract_precision<fp32>} : vector<4x8xf32>, vector<8x32xf32>, vector<4x32xf32> -> vector<4x32xf32>
    %136 = arith.addf %120, %135 : vector<4x32xf32>
    %137 = vector.extract_strided_slice %6 {offsets = [0, 96], sizes = [4, 32], strides = [1, 1]} : vector<4x128xf32> to vector<4x32xf32>
    %138 = vector.extract_strided_slice %16 {offsets = [8, 96], sizes = [8, 32], strides = [1, 1]} : vector<16x256xf32> to vector<8x32xf32>
    %139 = vector.extract_strided_slice %16 {offsets = [8, 224], sizes = [8, 32], strides = [1, 1]} : vector<16x256xf32> to vector<8x32xf32>
    %140 = vector.extract_strided_slice %8 {offsets = [0, 96], sizes = [4, 32], strides = [1, 1]} : vector<4x128xf32> to vector<4x32xf32>
    "tpu.trace_start"() <{level = 10 : i32, message = "md,nd->mn"}> : () -> ()
    %cst_42 = arith.constant dense<0.000000e+00> : vector<4x8xf32>
    %141 = tpu.matmul %140, %138, %cst_42 {dimension_numbers = #tpu.dot_dimension_numbers<[1], [1], [0], [0], [0, 0, 1, 0], [], []>, precision = #tpu.contract_precision<fp32>} : vector<4x32xf32>, vector<8x32xf32>, vector<4x8xf32> -> vector<4x8xf32>
    "tpu.trace_stop"() : () -> ()
    %cst_43 = arith.constant dense<0xFF800000> : vector<4xf32>
    %142 = vector.multi_reduction <maximumf>, %141, %cst_43 [1] : vector<4x8xf32> to vector<4xf32>
    %143 = vector.shape_cast %142 : vector<4xf32> to vector<4x1xf32>
    %144 = vector.broadcast %143 : vector<4x1xf32> to vector<4x8xf32>
    %145 = arith.subf %141, %144 : vector<4x8xf32>
    %146 = math.exp %145 : vector<4x8xf32>
    %cst_44 = arith.constant dense<0.000000e+00> : vector<4xf32>
    %147 = vector.multi_reduction <add>, %146, %cst_44 [1] : vector<4x8xf32> to vector<4xf32>
    %148 = vector.shape_cast %147 : vector<4xf32> to vector<4x1xf32>
    %149 = tpu.reciprocal %148 {approx = true} : vector<4x1xf32> -> vector<4x1xf32>
    %150 = vector.broadcast %149 : vector<4x1xf32> to vector<4x8xf32>
    %151 = arith.mulf %146, %150 : vector<4x8xf32>
    %cst_45 = arith.constant dense<0.000000e+00> : vector<4x32xf32>
    %152 = tpu.matmul %151, %139, %cst_45 {dimension_numbers = #tpu.dot_dimension_numbers<[1], [0], [0], [1], [0, 0, 1, 1], [], []>, precision = #tpu.contract_precision<fp32>} : vector<4x8xf32>, vector<8x32xf32>, vector<4x32xf32> -> vector<4x32xf32>
    %153 = arith.addf %137, %152 : vector<4x32xf32>
    %154 = tpu.concatenate %102, %119, %136, %153 in 1 : vector<4x32xf32>, vector<4x32xf32>, vector<4x32xf32>, vector<4x32xf32> -> vector<4x128xf32>
    %155 = tpu.concatenate %85, %154 in 0 : vector<4x128xf32>, vector<4x128xf32> -> vector<8x128xf32>
    %c0_46 = arith.constant 0 : index
    %c0_47 = arith.constant 0 : index
    %156 = vector.load %arg7[%c0_46, %c0_47] : memref<128x128xbf16, #tpu.memory_space<vmem>>, vector<128x128xbf16>
    %157 = arith.extf %156 : vector<128x128xbf16> to vector<128x128xf32>
    %cst_48 = arith.constant dense<0.000000e+00> : vector<8x128xf32>
    %158 = tpu.matmul %155, %157, %cst_48 {dimension_numbers = #tpu.dot_dimension_numbers<[1], [0], [0], [1], [0, 0, 1, 1], [], []>, precision = #tpu.contract_precision<fp32>} : vector<8x128xf32>, vector<128x128xf32>, vector<8x128xf32> -> vector<8x128xf32>
    %c0_49 = arith.constant 0 : index
    %c0_50 = arith.constant 0 : index
    %159 = vector.load %arg8[%c0_49, %c0_50] : memref<1x128xf32, #tpu.memory_space<vmem>>, vector<1x128xf32>
    %160 = vector.broadcast %159 : vector<1x128xf32> to vector<8x128xf32>
    %161 = arith.addf %158, %160 : vector<8x128xf32>
    %cst_51 = arith.constant 0.000000e+00 : f32
    %162 = vector.broadcast %cst_51 : f32 to vector<8x128xf32>
    %163 = arith.maximumf %161, %162 : vector<8x128xf32>
    %164 = arith.addf %155, %163 : vector<8x128xf32>
    %c0_52 = arith.constant 0 : index
    %c0_53 = arith.constant 0 : index
    %165 = vector.load %arg9[%c0_52, %c0_53] : memref<8x128xf32, #tpu.memory_space<vmem>>, vector<8x128xf32>
    tpu.vector_store %arg9[%c0_52, %c0_53], %164 {strides = array<i32>} : memref<8x128xf32, #tpu.memory_space<vmem>>, vector<8x128xf32>,
    return
  }
  func.func @transform_0(%arg0: i32) -> (i32, i32) {
    %c0_i32 = arith.constant 0 : i32
    %c0_i32_0 = arith.constant 0 : i32
    %c0_i32_1 = arith.constant 0 : i32
    return %c0_i32, %c0_i32_0 : i32, i32
  }
  func.func @transform_1(%arg0: i32) -> (i32, i32, i32) {
    %c0_i32 = arith.constant 0 : i32
    %c0_i32_0 = arith.constant 0 : i32
    %c0_i32_1 = arith.constant 0 : i32
    return %arg0, %c0_i32, %c0_i32_0 : i32, i32, i32
  }
  func.func @transform_2(%arg0: i32) -> (i32, i32) {
    %c0_i32 = arith.constant 0 : i32
    %c0_i32_0 = arith.constant 0 : i32
    %c0_i32_1 = arith.constant 0 : i32
    return %c0_i32, %c0_i32_0 : i32, i32
  }
  func.func @transform_3(%arg0: i32) -> (i32, i32) {
    %c0_i32 = arith.constant 0 : i32
    %c0_i32_0 = arith.constant 0 : i32
    %c0_i32_1 = arith.constant 0 : i32
    return %c0_i32, %c0_i32_0 : i32, i32
  }
  func.func @transform_4(%arg0: i32) -> (i32, i32) {
    %c0_i32 = arith.constant 0 : i32
    %c0_i32_0 = arith.constant 0 : i32
    %c0_i32_1 = arith.constant 0 : i32
    return %c0_i32, %c0_i32_0 : i32, i32
  }
  func.func @transform_5(%arg0: i32) -> (i32, i32) {
    %c0_i32 = arith.constant 0 : i32
    %c0_i32_0 = arith.constant 0 : i32
    %c0_i32_1 = arith.constant 0 : i32
    return %c0_i32, %c0_i32_0 : i32, i32
  }
  func.func @transform_6(%arg0: i32) -> (i32, i32) {
    %c0_i32 = arith.constant 0 : i32
    %c0_i32_0 = arith.constant 0 : i32
    %c0_i32_1 = arith.constant 0 : i32
    return %c0_i32, %c0_i32_0 : i32, i32
  }
  func.func @transform_7(%arg0: i32) -> (i32, i32) {
    %c0_i32 = arith.constant 0 : i32
    %c0_i32_0 = arith.constant 0 : i32
    %c0_i32_1 = arith.constant 0 : i32
    return %c0_i32, %c0_i32_0 : i32, i32
  }
  func.func @transform_8(%arg0: i32) -> (i32, i32) {
    %c0_i32 = arith.constant 0 : i32
    %c0_i32_0 = arith.constant 0 : i32
    return %arg0, %c0_i32 : i32, i32
  }
}

</mosaic_0001>

<llo_original>
// kernel: _lambda_.1
$region0: #{_lambda_.1}
  #allocation0 [shape = 'u32[]', space=smem, size = 0x4, offset = 0x4, fixed_abs, tag = 'smem constant byte address 0x4 - core index']
  #allocation1 [shape = 'u32[72,128]{1,0:T(1,128)}', space=vmem, size = 0x9000, scoped, tag = 'internal scratch']
  %s0 = inlined_call_operand.vmem [shape: f32[4,128], index: 0, kind: input, shape index: {}]
  %s1 = inlined_call_operand.vmem [shape: f32[4,8,128], index: 1, kind: input, shape index: {}]
  %s2 = inlined_call_operand.vmem [shape: bf16[128,128], index: 2, kind: input, shape index: {}]
  %s3 = inlined_call_operand.vmem [shape: f32[1,128], index: 3, kind: input, shape index: {}]
  %s4 = inlined_call_operand.vmem [shape: bf16[128,256], index: 4, kind: input, shape index: {}]
  %s5 = inlined_call_operand.vmem [shape: f32[1,256], index: 5, kind: input, shape index: {}]
  %s6 = inlined_call_operand.vmem [shape: bf16[128,128], index: 6, kind: input, shape index: {}]
  %s7 = inlined_call_operand.vmem [shape: f32[1,128], index: 7, kind: input, shape index: {}]
  %s8 = inlined_call_operand.hbm [shape: f32[16,128], index: 8, kind: output, shape index: {}]
  %s9 = sld [smem:[#allocation0]]
  $region65: #{_lambda_.1} parent=0
    _
  %s11 = ssub.s32 1, %s9
  %s12 = scalar_select 0, %s11, %s9
  $region1: #{_lambda_.1} parent=0
    #allocation2 [shape = 'u8[8192]{0}', space=vmem, size = 0x2000, scoped, tag = 'output window, operand 0']
    #allocation3 [shape = 's32[2]{0}', space=sflag, size = 0x8, scoped, tag = 'scoped memory for _lambda_.1']
    %13 = vsyncpa [#allocation3], 0
    %s14 = scalar_lea.sflag [#allocation3], 1
    %15 = vsyncpa %s14, 0
    loop: start=0, step=1, limit=4
    $region2: #{_lambda_.1} parent=1 // loop_pre_header
      _
    $region3: #{_lambda_.1} parent=1 // loop_header
      %s17 = sphi 0, %s21
      %p18 = scmp.ge.s32.totalorder %s17, 4
      %s25 = sphi 0, %s25
      %s27 = sphi 0, %s25
      %s28 = sphi 0, %s27
      %s42 = sphi 0, %s28
      %s48 = sphi 0, %s50
      %s51 = sphi 0, %s48
      %s52 = sphi 0, %s51
      %s68 = sphi 0, %s52
      %s72 = sphi 0, %s72
      %s74 = sphi 0, %s72
      %s75 = sphi 0, %s74
      %s89 = sphi 0, %s75
      %s93 = sphi 0, %s93
      %s95 = sphi 0, %s93
      %s96 = sphi 0, %s95
      %s110 = sphi 0, %s96
      %s114 = sphi 0, %s114
      %s116 = sphi 0, %s114
      %s117 = sphi 0, %s116
      %s131 = sphi 0, %s117
      %s135 = sphi 0, %s135
      %s137 = sphi 0, %s135
      %s138 = sphi 0, %s137
      %s152 = sphi 0, %s138
      %s156 = sphi 0, %s156
      %s158 = sphi 0, %s156
      %s159 = sphi 0, %s158
      %s173 = sphi 0, %s159
      %s177 = sphi 0, %s177
      %s179 = sphi 0, %s177
      %s180 = sphi 0, %s179
      %s194 = sphi 0, %s180
      %s200 = sphi 0, %s202
      %s203 = sphi 0, %s200
      %s204 = sphi 0, %s203
      %s220 = sphi 0, %s204
    $region4: #{_lambda_.1} parent=1 // loop_header_branch
      %20 = sbr.rel (%p18) target = $region8
    $region5: #{_lambda_.1} parent=1 // loop_body
      %s22 = ssub.s32 %s17, 1
      %s23 = ssub.s32 %s17, 2
      %s24 = sadd.s32 %s17, 1
      %s26 = sadd.s32 %s25, 1
      %p29 = scmp.eq.s32.totalorder %s17, 1
      %p30 = scmp.ne.s32.totalorder %s25, %s27
      %p31 = scmp.eq.s32.totalorder %s17, 0
      %p32 = por %p30, %p31
      %p33 = scmp.ne.s32.totalorder %s25, %s27
      %p34 = scmp.eq.s32.totalorder %s22, 1
      %p35 = por %p33, %p34
      %p36 = scmp.ne.s32.totalorder %s27, %s28
      %p37 = scmp.eq.s32.totalorder %s22, 0
      %p38 = por %p36, %p37
      %p39 = scmp.ne.s32.totalorder %s27, %s28
      %p40 = scmp.eq.s32.totalorder %s23, 1
      %p41 = por %p39, %p40
      %p43 = scmp.ne.s32.totalorder %s28, %s42
      %p44 = scmp.eq.s32.totalorder %s23, 0
      %p45 = por %p43, %p44
      %s46 = ssub.s32 %s17, %s24
      %p47 = scmp.eq.s32.totalorder %s46, 0
      %s49 = sadd.s32 %s48, 1
      %s50 = scalar_select %p47, %s48, %s49
      %p53 = pneg %p47
      %p54 = scmp.eq.s32.totalorder %s17, 1
      %p55 = por %p53, %p54
      %p56 = scmp.ne.s32.totalorder %s48, %s51
      %p57 = scmp.eq.s32.totalorder %s17, 0
      %p58 = por %p56, %p57
      %p59 = scmp.ne.s32.totalorder %s48, %s51
      %p60 = scmp.eq.s32.totalorder %s22, 1
      %p61 = por %p59, %p60
      %p62 = scmp.ne.s32.totalorder %s51, %s52
      %p63 = scmp.eq.s32.totalorder %s22, 0
      %p64 = por %p62, %p63
      %p65 = scmp.ne.s32.totalorder %s51, %s52
      %p66 = scmp.eq.s32.totalorder %s23, 1
      %p67 = por %p65, %p66
      %p69 = scmp.ne.s32.totalorder %s52, %s68
      %p70 = scmp.eq.s32.totalorder %s23, 0
      %p71 = por %p69, %p70
      %s73 = sadd.s32 %s72, 1
      %p76 = scmp.eq.s32.totalorder %s17, 1
      %p77 = scmp.ne.s32.totalorder %s72, %s74
      %p78 = scmp.eq.s32.totalorder %s17, 0
      %p79 = por %p77, %p78
      %p80 = scmp.ne.s32.totalorder %s72, %s74
      %p81 = scmp.eq.s32.totalorder %s22, 1
      %p82 = por %p80, %p81
      %p83 = scmp.ne.s32.totalorder %s74, %s75
      %p84 = scmp.eq.s32.totalorder %s22, 0
      %p85 = por %p83, %p84
      %p86 = scmp.ne.s32.totalorder %s74, %s75
      %p87 = scmp.eq.s32.totalorder %s23, 1
      %p88 = por %p86, %p87
      %p90 = scmp.ne.s32.totalorder %s75, %s89
      %p91 = scmp.eq.s32.totalorder %s23, 0
      %p92 = por %p90, %p91
      %s94 = sadd.s32 %s93, 1
      %p97 = scmp.eq.s32.totalorder %s17, 1
      %p98 = scmp.ne.s32.totalorder %s93, %s95
      %p99 = scmp.eq.s32.totalorder %s17, 0
      %p100 = por %p98, %p99
      %p101 = scmp.ne.s32.totalorder %s93, %s95
      %p102 = scmp.eq.s32.totalorder %s22, 1
      %p103 = por %p101, %p102
      %p104 = scmp.ne.s32.totalorder %s95, %s96
      %p105 = scmp.eq.s32.totalorder %s22, 0
      %p106 = por %p104, %p105
      %p107 = scmp.ne.s32.totalorder %s95, %s96
      %p108 = scmp.eq.s32.totalorder %s23, 1
      %p109 = por %p107, %p108
      %p111 = scmp.ne.s32.totalorder %s96, %s110
      %p112 = scmp.eq.s32.totalorder %s23, 0
      %p113 = por %p111, %p112
      %s115 = sadd.s32 %s114, 1
      %p118 = scmp.eq.s32.totalorder %s17, 1
      %p119 = scmp.ne.s32.totalorder %s114, %s116
      %p120 = scmp.eq.s32.totalorder %s17, 0
      %p121 = por %p119, %p120
      %p122 = scmp.ne.s32.totalorder %s114, %s116
      %p123 = scmp.eq.s32.totalorder %s22, 1
      %p124 = por %p122, %p123
      %p125 = scmp.ne.s32.totalorder %s116, %s117
      %p126 = scmp.eq.s32.totalorder %s22, 0
      %p127 = por %p125, %p126
      %p128 = scmp.ne.s32.totalorder %s116, %s117
      %p129 = scmp.eq.s32.totalorder %s23, 1
      %p130 = por %p128, %p129
      %p132 = scmp.ne.s32.totalorder %s117, %s131
      %p133 = scmp.eq.s32.totalorder %s23, 0
      %p134 = por %p132, %p133
      %s136 = sadd.s32 %s135, 1
      %p139 = scmp.eq.s32.totalorder %s17, 1
      %p140 = scmp.ne.s32.totalorder %s135, %s137
      %p141 = scmp.eq.s32.totalorder %s17, 0
      %p142 = por %p140, %p141
      %p143 = scmp.ne.s32.totalorder %s135, %s137
      %p144 = scmp.eq.s32.totalorder %s22, 1
      %p145 = por %p143, %p144
      %p146 = scmp.ne.s32.totalorder %s137, %s138
      %p147 = scmp.eq.s32.totalorder %s22, 0
      %p148 = por %p146, %p147
      %p149 = scmp.ne.s32.totalorder %s137, %s138
      %p150 = scmp.eq.s32.totalorder %s23, 1
      %p151 = por %p149, %p150
      %p153 = scmp.ne.s32.totalorder %s138, %s152
      %p154 = scmp.eq.s32.totalorder %s23, 0
      %p155 = por %p153, %p154
      %s157 = sadd.s32 %s156, 1
      %p160 = scmp.eq.s32.totalorder %s17, 1
      %p161 = scmp.ne.s32.totalorder %s156, %s158
      %p162 = scmp.eq.s32.totalorder %s17, 0
      %p163 = por %p161, %p162
      %p164 = scmp.ne.s32.totalorder %s156, %s158
      %p165 = scmp.eq.s32.totalorder %s22, 1
      %p166 = por %p164, %p165
      %p167 = scmp.ne.s32.totalorder %s158, %s159
      %p168 = scmp.eq.s32.totalorder %s22, 0
      %p169 = por %p167, %p168
      %p170 = scmp.ne.s32.totalorder %s158, %s159
      %p171 = scmp.eq.s32.totalorder %s23, 1
      %p172 = por %p170, %p171
      %p174 = scmp.ne.s32.totalorder %s159, %s173
      %p175 = scmp.eq.s32.totalorder %s23, 0
      %p176 = por %p174, %p175
      %s178 = sadd.s32 %s177, 1
      %p181 = scmp.eq.s32.totalorder %s17, 1
      %p182 = scmp.ne.s32.totalorder %s177, %s179
      %p183 = scmp.eq.s32.totalorder %s17, 0
      %p184 = por %p182, %p183
      %p185 = scmp.ne.s32.totalorder %s177, %s179
      %p186 = scmp.eq.s32.totalorder %s22, 1
      %p187 = por %p185, %p186
      %p188 = scmp.ne.s32.totalorder %s179, %s180
      %p189 = scmp.eq.s32.totalorder %s22, 0
      %p190 = por %p188, %p189
      %p191 = scmp.ne.s32.totalorder %s179, %s180
      %p192 = scmp.eq.s32.totalorder %s23, 1
      %p193 = por %p191, %p192
      %p195 = scmp.ne.s32.totalorder %s180, %s194
      %p196 = scmp.eq.s32.totalorder %s23, 0
      %p197 = por %p195, %p196
      %s198 = ssub.s32 %s17, %s24
      %p199 = scmp.eq.s32.totalorder %s198, 0
      %s201 = sadd.s32 %s200, 1
      %s202 = scalar_select %p199, %s200, %s201
      %p205 = pneg %p199
      %p206 = scmp.eq.s32.totalorder %s17, 1
      %p207 = por %p205, %p206
      %p208 = scmp.ne.s32.totalorder %s200, %s203
      %p209 = scmp.eq.s32.totalorder %s17, 0
      %p210 = por %p208, %p209
      %p211 = scmp.ne.s32.totalorder %s200, %s203
      %p212 = scmp.eq.s32.totalorder %s22, 1
      %p213 = por %p211, %p212
      %p214 = scmp.ne.s32.totalorder %s203, %s204
      %p215 = scmp.eq.s32.totalorder %s22, 0
      %p216 = por %p214, %p215
      %p217 = scmp.ne.s32.totalorder %s203, %s204
      %p218 = scmp.eq.s32.totalorder %s23, 1
      %p219 = por %p217, %p218
      %p221 = scmp.ne.s32.totalorder %s204, %s220
      %p222 = scmp.eq.s32.totalorder %s23, 0
      %p223 = por %p221, %p222
      %p224 = scmp.le.s32.totalorder 1, %s17
      %p225 = scmp.lt.s32.totalorder %s17, 3
      %p226 = pnand %p224, %p225
      %p227 = pneg %p226
      // Predicated region
      $region9: #{_lambda_.1} parent=5 // pred_check
        _
      $region10: #{_lambda_.1} parent=5 // pred_check_branch
        %229 = sbr.rel (%p226) target = $region12
      $region11: #{_lambda_.1} parent=5 // pred_region
        %s230 = ssub.s32 %s17, 1
        // Predicated region
        $region13: #{_lambda_.1} parent=11 // pred_check
          %p231 = pneg %p38
        $region14: #{_lambda_.1} parent=11 // pred_check_branch
          %233 = sbr.rel (%p231) target = $region16
        $region15: #{_lambda_.1} parent=11 // pred_region
          _
        $region16: #{_lambda_.1} parent=11 // pred_fallthru
          _
        // Predicated region
        $region17: #{_lambda_.1} parent=11 // pred_check
          %p234 = pneg %p85
        $region18: #{_lambda_.1} parent=11 // pred_check_branch
          %236 = sbr.rel (%p234) target = $region20
        $region19: #{_lambda_.1} parent=11 // pred_region
          _
        $region20: #{_lambda_.1} parent=11 // pred_fallthru
          _
        // Predicated region
        $region21: #{_lambda_.1} parent=11 // pred_check
          %p237 = pneg %p106
        $region22: #{_lambda_.1} parent=11 // pred_check_branch
          %239 = sbr.rel (%p237) target = $region24
        $region23: #{_lambda_.1} parent=11 // pred_region
          _
        $region24: #{_lambda_.1} parent=11 // pred_fallthru
          _
        // Predicated region
        $region25: #{_lambda_.1} parent=11 // pred_check
          %p240 = pneg %p127
        $region26: #{_lambda_.1} parent=11 // pred_check_branch
          %242 = sbr.rel (%p240) target = $region28
        $region27: #{_lambda_.1} parent=11 // pred_region
          _
        $region28: #{_lambda_.1} parent=11 // pred_fallthru
          _
        // Predicated region
        $region29: #{_lambda_.1} parent=11 // pred_check
          %p243 = pneg %p148
        $region30: #{_lambda_.1} parent=11 // pred_check_branch
          %245 = sbr.rel (%p243) target = $region32
        $region31: #{_lambda_.1} parent=11 // pred_region
          _
        $region32: #{_lambda_.1} parent=11 // pred_fallthru
          _
        // Predicated region
        $region33: #{_lambda_.1} parent=11 // pred_check
          %p246 = pneg %p169
        $region34: #{_lambda_.1} parent=11 // pred_check_branch
          %248 = sbr.rel (%p246) target = $region36
        $region35: #{_lambda_.1} parent=11 // pred_region
          _
        $region36: #{_lambda_.1} parent=11 // pred_fallthru
          _
        // Predicated region
        $region37: #{_lambda_.1} parent=11 // pred_check
          %p249 = pneg %p190
        $region38: #{_lambda_.1} parent=11 // pred_check_branch
          %251 = sbr.rel (%p249) target = $region40
        $region39: #{_lambda_.1} parent=11 // pred_region
          _
        $region40: #{_lambda_.1} parent=11 // pred_fallthru
          _
      $region12: #{_lambda_.1} parent=5 // pred_fallthru
        _
      %p252 = scmp.lt.s32.totalorder %s17, 2
      // Predicated region
      $region41: #{_lambda_.1} parent=5 // pred_check
        %p253 = pneg %p252
      $region42: #{_lambda_.1} parent=5 // pred_check_branch
        %255 = sbr.rel (%p253) target = $region44
      $region43: #{_lambda_.1} parent=5 // pred_region
        // Predicated region
        $region45: #{_lambda_.1} parent=43 // pred_check
          %p256 = pneg %p58
        $region46: #{_lambda_.1} parent=43 // pred_check_branch
          %258 = sbr.rel (%p256) target = $region48
        $region47: #{_lambda_.1} parent=43 // pred_region
          %s259 = smul.u32 2, %s17
          %p260 = scmp.lt.s32.totalorder %s259, 3
          %s261 = scalar_select %p260, %s259, 3
          %s262 = smul.addr %s261, 8
          %s263 = scalar_lea.vmem %s1, %s262
          %s264 = smul.u32 2, %s17
        $region48: #{_lambda_.1} parent=43 // pred_fallthru
          _
      $region44: #{_lambda_.1} parent=5 // pred_fallthru
        _
      %p265 = scmp.le.s32.totalorder 1, %s17
      %p266 = scmp.lt.s32.totalorder %s17, 3
      %p267 = pnand %p265, %p266
      %p268 = pneg %p267
      // Predicated region
      $region49: #{_lambda_.1} parent=5 // pred_check
        _
      $region50: #{_lambda_.1} parent=5 // pred_check_branch
        %270 = sbr.rel (%p267) target = $region52
      $region51: #{_lambda_.1} parent=5 // pred_region
        %s271 = ssub.s32 %s17, 1
        %p272 = pneg %p38
        %p273 = pneg %p35
        %s274 = smul.u32 2, %s22
        %p275 = scmp.lt.s32.totalorder %s274, 3
        %s276 = scalar_select %p275, %s274, 3
        %s277 = smul.addr %s276, 8
        %s278 = scalar_lea.vmem %s1, %s277
        %p279 = pneg %p64
        %p280 = pneg %p61
        %p281 = pneg %p85
        %p282 = pneg %p82
        %p283 = pneg %p106
        %p284 = pneg %p103
        %p285 = pneg %p127
        %p286 = pneg %p124
        %p287 = pneg %p148
        %p288 = pneg %p145
        %p289 = pneg %p169
        %p290 = pneg %p166
        %p291 = pneg %p190
        %p292 = pneg %p187
        %p293 = pneg %p216
        %p294 = pneg %p213
        %s295 = sand.u32 %s203, 1
        %s296 = scalar_lea.sflag [#allocation3], %s295
        %s297 = sand.u32 %s203, 1
        %s298 = smul.addr %s297, 8
        %s299 = scalar_lea.vmem [#allocation2], %s298
        %s300 = smul.u32 2, %s22
        %p301 = scmp.lt.s32.totalorder %s300, 3
        %s302 = scalar_select %p301, %s300, 3
        %s303 = smul.addr %s302, 8
        %s304 = scalar_lea.vmem %s1, %s303
        %s305 = smul.u32 2, %s22
        %v306 = vld [vmem:[%s0] sm:$0xf]
        %v307 = vld [vmem:[%s2] sm:$0xf]
        %v308 = vld [vmem:[%s2 + $0x4] sm:$0xf]
        %v309 = vld [vmem:[%s2 + $0x8] sm:$0xf]
        %v310 = vld [vmem:[%s2 + $0xc] sm:$0xf]
        %v311 = vld [vmem:[%s2 + $0x10] sm:$0xf]
        %v312 = vld [vmem:[%s2 + $0x14] sm:$0xf]
        %v313 = vld [vmem:[%s2 + $0x18] sm:$0xf]
        %v314 = vld [vmem:[%s2 + $0x1c] sm:$0xf]
        %v315 = vld [vmem:[%s2 + $0x20] sm:$0xf]
        %v316 = vld [vmem:[%s2 + $0x24] sm:$0xf]
        %v317 = vld [vmem:[%s2 + $0x28] sm:$0xf]
        %v318 = vld [vmem:[%s2 + $0x2c] sm:$0xf]
        %v319 = vld [vmem:[%s2 + $0x30] sm:$0xf]
        %v320 = vld [vmem:[%s2 + $0x34] sm:$0xf]
        %v321 = vld [vmem:[%s2 + $0x38] sm:$0xf]
        %v322 = vld [vmem:[%s2 + $0x3c] sm:$0xf]
        %v323 = vunpack.c.l.bf16 %v307
        %v324 = vunpack.c.l.bf16 %v308
        %v325 = vunpack.c.l.bf16 %v309
        %v326 = vunpack.c.l.bf16 %v310
        %v327 = vunpack.c.l.bf16 %v311
        %v328 = vunpack.c.l.bf16 %v312
        %v329 = vunpack.c.l.bf16 %v313
        %v330 = vunpack.c.l.bf16 %v314
        %v331 = vunpack.c.l.bf16 %v315
        %v332 = vunpack.c.l.bf16 %v316
        %v333 = vunpack.c.l.bf16 %v317
        %v334 = vunpack.c.l.bf16 %v318
        %v335 = vunpack.c.l.bf16 %v319
        %v336 = vunpack.c.l.bf16 %v320
        %v337 = vunpack.c.l.bf16 %v321
        %v338 = vunpack.c.l.bf16 %v322
        %v339 = vld [vmem:[%s3] sm:$0x1]
        %v341 = vperm.slane %v339, 0
        %343 = vmatpush.msra.mxu0 %v338
        %344 = vmatpush.msra.mxu0 %v337
        %345 = vmatpush.msra.mxu0 %v336
        %346 = vmatpush.msra.mxu0 %v335
        %347 = vmatpush.msra.mxu0 %v334
        %348 = vmatpush.msra.mxu0 %v333
        %349 = vmatpush.msra.mxu0 %v332
        %350 = vmatpush.msra.mxu0 %v331
        %351 = vmatpush.msra.mxu0 %v330
        %352 = vmatpush.msra.mxu0 %v329
        %353 = vmatpush.msra.mxu0 %v328
        %354 = vmatpush.msra.mxu0 %v327
        %355 = vmatpush.msra.mxu0 %v326
        %356 = vmatpush.msra.mxu0 %v325
        %357 = vmatpush.msra.mxu0 %v324
        %358 = vmatpush.msra.mxu0 %v323
        %v359 = vand.u32 %v306, 4294901760
        %v360 = vsub.f32 %v306, %v359
        %v361 = vand.u32 %v360, 4294901760
        %v362 = vsub.f32 %v360, %v361
        %v363 = vand.u32 %v362, 4294901760
        %364 = vmatmul.f32.gmra.mxu0 %v363
        %v365 = vpop.f32.mrf.mxu0
        %v366 = vadd.f32 %v341, %v365
        %367 = vdwg.mxu0
        %v368 = vsub.f32 %v338, %v338
        %v369 = vand.u32 %v368, 4294901760
        %v370 = vsub.f32 %v368, %v369
        %v371 = vand.u32 %v370, 4294901760
        %372 = vmatpush.msra.mxu0 %v371
        %v373 = vsub.f32 %v337, %v337
        %v374 = vand.u32 %v373, 4294901760
        %v375 = vsub.f32 %v373, %v374
        %v376 = vand.u32 %v375, 4294901760
        %377 = vmatpush.msra.mxu0 %v376
        %v378 = vsub.f32 %v336, %v336
        %v379 = vand.u32 %v378, 4294901760
        %v380 = vsub.f32 %v378, %v379
        %v381 = vand.u32 %v380, 4294901760
        %382 = vmatpush.msra.mxu0 %v381
        %v383 = vsub.f32 %v335, %v335
        %v384 = vand.u32 %v383, 4294901760
        %v385 = vsub.f32 %v383, %v384
        %v386 = vand.u32 %v385, 4294901760
        %387 = vmatpush.msra.mxu0 %v386
        %v388 = vsub.f32 %v334, %v334
        %v389 = vand.u32 %v388, 4294901760
        %v390 = vsub.f32 %v388, %v389
        %v391 = vand.u32 %v390, 4294901760
        %392 = vmatpush.msra.mxu0 %v391
        %v393 = vsub.f32 %v333, %v333
        %v394 = vand.u32 %v393, 4294901760
        %v395 = vsub.f32 %v393, %v394
        %v396 = vand.u32 %v395, 4294901760
        %397 = vmatpush.msra.mxu0 %v396
        %v398 = vsub.f32 %v332, %v332
        %v399 = vand.u32 %v398, 4294901760
        %v400 = vsub.f32 %v398, %v399
        %v401 = vand.u32 %v400, 4294901760
        %402 = vmatpush.msra.mxu0 %v401
        %v403 = vsub.f32 %v331, %v331
        %v404 = vand.u32 %v403, 4294901760
        %v405 = vsub.f32 %v403, %v404
        %v406 = vand.u32 %v405, 4294901760
        %407 = vmatpush.msra.mxu0 %v406
        %v408 = vsub.f32 %v330, %v330
        %v409 = vand.u32 %v408, 4294901760
        %v410 = vsub.f32 %v408, %v409
        %v411 = vand.u32 %v410, 4294901760
        %412 = vmatpush.msra.mxu0 %v411
        %v413 = vsub.f32 %v329, %v329
        %v414 = vand.u32 %v413, 4294901760
        %v415 = vsub.f32 %v413, %v414
        %v416 = vand.u32 %v415, 4294901760
        %417 = vmatpush.msra.mxu0 %v416
        %v418 = vsub.f32 %v328, %v328
        %v419 = vand.u32 %v418, 4294901760
        %v420 = vsub.f32 %v418, %v419
        %v421 = vand.u32 %v420, 4294901760
        %422 = vmatpush.msra.mxu0 %v421
        %v423 = vsub.f32 %v327, %v327
        %v424 = vand.u32 %v423, 4294901760
        %v425 = vsub.f32 %v423, %v424
        %v426 = vand.u32 %v425, 4294901760
        %427 = vmatpush.msra.mxu0 %v426
        %v428 = vsub.f32 %v326, %v326
        %v429 = vand.u32 %v428, 4294901760
        %v430 = vsub.f32 %v428, %v429
        %v431 = vand.u32 %v430, 4294901760
        %432 = vmatpush.msra.mxu0 %v431
        %v433 = vsub.f32 %v325, %v325
        %v434 = vand.u32 %v433, 4294901760
        %v435 = vsub.f32 %v433, %v434
        %v436 = vand.u32 %v435, 4294901760
        %437 = vmatpush.msra.mxu0 %v436
        %v438 = vsub.f32 %v324, %v324
        %v439 = vand.u32 %v438, 4294901760
        %v440 = vsub.f32 %v438, %v439
        %v441 = vand.u32 %v440, 4294901760
        %442 = vmatpush.msra.mxu0 %v441
        %v443 = vsub.f32 %v323, %v323
        %v444 = vand.u32 %v443, 4294901760
        %v445 = vsub.f32 %v443, %v444
        %v446 = vand.u32 %v445, 4294901760
        %447 = vmatpush.msra.mxu0 %v446
        %v448 = vand.u32 %v306, 4294901760
        %449 = vmatmul.f32.gmra.mxu0 %v448
        %v450 = vpop.f32.mrf.mxu0
        %v451 = vadd.f32 %v366, %v450
        %452 = vdwg.mxu0
        %v453 = vsub.f32 %v338, %v338
        %454 = vmatpush.msra.mxu0 %v453
        %v455 = vsub.f32 %v337, %v337
        %456 = vmatpush.msra.mxu0 %v455
        %v457 = vsub.f32 %v336, %v336
        %458 = vmatpush.msra.mxu0 %v457
        %v459 = vsub.f32 %v335, %v335
        %460 = vmatpush.msra.mxu0 %v459
        %v461 = vsub.f32 %v334, %v334
        %462 = vmatpush.msra.mxu0 %v461
        %v463 = vsub.f32 %v333, %v333
        %464 = vmatpush.msra.mxu0 %v463
        %v465 = vsub.f32 %v332, %v332
        %466 = vmatpush.msra.mxu0 %v465
        %v467 = vsub.f32 %v331, %v331
        %468 = vmatpush.msra.mxu0 %v467
        %v469 = vsub.f32 %v330, %v330
        %470 = vmatpush.msra.mxu0 %v469
        %v471 = vsub.f32 %v329, %v329
        %472 = vmatpush.msra.mxu0 %v471
        %v473 = vsub.f32 %v328, %v328
        %474 = vmatpush.msra.mxu0 %v473
        %v475 = vsub.f32 %v327, %v327
        %476 = vmatpush.msra.mxu0 %v475
        %v477 = vsub.f32 %v326, %v326
        %478 = vmatpush.msra.mxu0 %v477
        %v479 = vsub.f32 %v325, %v325
        %480 = vmatpush.msra.mxu0 %v479
        %v481 = vsub.f32 %v324, %v324
        %482 = vmatpush.msra.mxu0 %v481
        %v483 = vsub.f32 %v323, %v323
        %484 = vmatpush.msra.mxu0 %v483
        %v485 = vand.u32 %v306, 4294901760
        %v486 = vsub.f32 %v306, %v485
        %487 = vmatmul.f32.gmra.mxu0 %v486
        %v488 = vpop.f32.mrf.mxu0
        %v489 = vadd.f32 %v451, %v488
        %490 = vdwg.mxu0
        %491 = vmatpush.msra.mxu0 %v338
        %492 = vmatpush.msra.mxu0 %v337
        %493 = vmatpush.msra.mxu0 %v336
        %494 = vmatpush.msra.mxu0 %v335
        %495 = vmatpush.msra.mxu0 %v334
        %496 = vmatpush.msra.mxu0 %v333
        %497 = vmatpush.msra.mxu0 %v332
        %498 = vmatpush.msra.mxu0 %v331
        %499 = vmatpush.msra.mxu0 %v330
        %500 = vmatpush.msra.mxu0 %v329
        %501 = vmatpush.msra.mxu0 %v328
        %502 = vmatpush.msra.mxu0 %v327
        %503 = vmatpush.msra.mxu0 %v326
        %504 = vmatpush.msra.mxu0 %v325
        %505 = vmatpush.msra.mxu0 %v324
        %506 = vmatpush.msra.mxu0 %v323
        %v507 = vand.u32 %v306, 4294901760
        %v508 = vsub.f32 %v306, %v507
        %v509 = vand.u32 %v508, 4294901760
        %510 = vmatmul.f32.gmra.mxu0 %v509
        %v511 = vpop.f32.mrf.mxu0
        %v512 = vadd.f32 %v489, %v511
        %513 = vdwg.mxu0
        %v514 = vsub.f32 %v338, %v338
        %v515 = vand.u32 %v514, 4294901760
        %516 = vmatpush.msra.mxu0 %v515
        %v517 = vsub.f32 %v337, %v337
        %v518 = vand.u32 %v517, 4294901760
        %519 = vmatpush.msra.mxu0 %v518
        %v520 = vsub.f32 %v336, %v336
        %v521 = vand.u32 %v520, 4294901760
        %522 = vmatpush.msra.mxu0 %v521
        %v523 = vsub.f32 %v335, %v335
        %v524 = vand.u32 %v523, 4294901760
        %525 = vmatpush.msra.mxu0 %v524
        %v526 = vsub.f32 %v334, %v334
        %v527 = vand.u32 %v526, 4294901760
        %528 = vmatpush.msra.mxu0 %v527
        %v529 = vsub.f32 %v333, %v333
        %v530 = vand.u32 %v529, 4294901760
        %531 = vmatpush.msra.mxu0 %v530
        %v532 = vsub.f32 %v332, %v332
        %v533 = vand.u32 %v532, 4294901760
        %534 = vmatpush.msra.mxu0 %v533
        %v535 = vsub.f32 %v331, %v331
        %v536 = vand.u32 %v535, 4294901760
        %537 = vmatpush.msra.mxu0 %v536
        %v538 = vsub.f32 %v330, %v330
        %v539 = vand.u32 %v538, 4294901760
        %540 = vmatpush.msra.mxu0 %v539
        %v541 = vsub.f32 %v329, %v329
        %v542 = vand.u32 %v541, 4294901760
        %543 = vmatpush.msra.mxu0 %v542
        %v544 = vsub.f32 %v328, %v328
        %v545 = vand.u32 %v544, 4294901760
        %546 = vmatpush.msra.mxu0 %v545
        %v547 = vsub.f32 %v327, %v327
        %v548 = vand.u32 %v547, 4294901760
        %549 = vmatpush.msra.mxu0 %v548
        %v550 = vsub.f32 %v326, %v326
        %v551 = vand.u32 %v550, 4294901760
        %552 = vmatpush.msra.mxu0 %v551
        %v553 = vsub.f32 %v325, %v325
        %v554 = vand.u32 %v553, 4294901760
        %555 = vmatpush.msra.mxu0 %v554
        %v556 = vsub.f32 %v324, %v324
        %v557 = vand.u32 %v556, 4294901760
        %558 = vmatpush.msra.mxu0 %v557
        %v559 = vsub.f32 %v323, %v323
        %v560 = vand.u32 %v559, 4294901760
        %561 = vmatpush.msra.mxu0 %v560
        %v562 = vand.u32 %v306, 4294901760
        %563 = vmatmul.f32.gmra.mxu0 %v562
        %v564 = vpop.f32.mrf.mxu0
        %v565 = vadd.f32 %v512, %v564
        %566 = vdwg.mxu0
        %567 = vmatpush.msra.mxu0 %v338
        %568 = vmatpush.msra.mxu0 %v337
        %569 = vmatpush.msra.mxu0 %v336
        %570 = vmatpush.msra.mxu0 %v335
        %571 = vmatpush.msra.mxu0 %v334
        %572 = vmatpush.msra.mxu0 %v333
        %573 = vmatpush.msra.mxu0 %v332
        %574 = vmatpush.msra.mxu0 %v331
        %575 = vmatpush.msra.mxu0 %v330
        %576 = vmatpush.msra.mxu0 %v329
        %577 = vmatpush.msra.mxu0 %v328
        %578 = vmatpush.msra.mxu0 %v327
        %579 = vmatpush.msra.mxu0 %v326
        %580 = vmatpush.msra.mxu0 %v325
        %581 = vmatpush.msra.mxu0 %v324
        %582 = vmatpush.msra.mxu0 %v323
        %v583 = vand.u32 %v306, 4294901760
        %584 = vmatmul.f32.gmra.mxu0 %v583
        %v585 = vpop.f32.mrf.mxu0
        %v586 = vadd.f32 %v565, %v585
        %587 = vdwg.mxu0
        %v588 = vmul.f32 %v586, 0.088388346
        %v589 = vld [vmem:[%s304] sm:$0xff]
        %v590 = vld [vmem:[%s304 + $0x8] sm:$0xff]
        %v591 = vld [vmem:[%s4] sm:$0xff]
        %v592 = vld [vmem:[%s4 + $0x8] sm:$0xff]
        %v593 = vld [vmem:[%s4 + $0x10] sm:$0xff]
        %v594 = vld [vmem:[%s4 + $0x18] sm:$0xff]
        %v595 = vld [vmem:[%s4 + $0x20] sm:$0xff]
        %v596 = vld [vmem:[%s4 + $0x28] sm:$0xff]
        %v597 = vld [vmem:[%s4 + $0x30] sm:$0xff]
        %v598 = vld [vmem:[%s4 + $0x38] sm:$0xff]
        %v599 = vld [vmem:[%s4 + $0x40] sm:$0xff]
        %v600 = vld [vmem:[%s4 + $0x48] sm:$0xff]
        %v601 = vld [vmem:[%s4 + $0x50] sm:$0xff]
        %v602 = vld [vmem:[%s4 + $0x58] sm:$0xff]
        %v603 = vld [vmem:[%s4 + $0x60] sm:$0xff]
        %v604 = vld [vmem:[%s4 + $0x68] sm:$0xff]
        %v605 = vld [vmem:[%s4 + $0x70] sm:$0xff]
        %v606 = vld [vmem:[%s4 + $0x78] sm:$0xff]
        %v607 = vunpack.c.l.bf16 %v591
        %v608 = vunpack.c.h.bf16 %v591
        %v609 = vunpack.c.l.bf16 %v592
        %v610 = vunpack.c.h.bf16 %v592
        %v611 = vunpack.c.l.bf16 %v593
        %v612 = vunpack.c.h.bf16 %v593
        %v613 = vunpack.c.l.bf16 %v594
        %v614 = vunpack.c.h.bf16 %v594
        %v615 = vunpack.c.l.bf16 %v595
        %v616 = vunpack.c.h.bf16 %v595
        %v617 = vunpack.c.l.bf16 %v596
        %v618 = vunpack.c.h.bf16 %v596
        %v619 = vunpack.c.l.bf16 %v597
        %v620 = vunpack.c.h.bf16 %v597
        %v621 = vunpack.c.l.bf16 %v598
        %v622 = vunpack.c.h.bf16 %v598
        %v623 = vunpack.c.l.bf16 %v599
        %v624 = vunpack.c.h.bf16 %v599
        %v625 = vunpack.c.l.bf16 %v600
        %v626 = vunpack.c.h.bf16 %v600
        %v627 = vunpack.c.l.bf16 %v601
        %v628 = vunpack.c.h.bf16 %v601
        %v629 = vunpack.c.l.bf16 %v602
        %v630 = vunpack.c.h.bf16 %v602
        %v631 = vunpack.c.l.bf16 %v603
        %v632 = vunpack.c.h.bf16 %v603
        %v633 = vunpack.c.l.bf16 %v604
        %v634 = vunpack.c.h.bf16 %v604
        %v635 = vunpack.c.l.bf16 %v605
        %v636 = vunpack.c.h.bf16 %v605
        %v637 = vunpack.c.l.bf16 %v606
        %v638 = vunpack.c.h.bf16 %v606
        %v639 = vld [vmem:[%s5] sm:$0x3]
        %v641 = vperm.slane %v639, 0
        %v642 = vperm.slane %v639, 1
        %645 = vmatpush.msra.mxu0 %v637
        %646 = vmatpush.msra.mxu0 %v635
        %647 = vmatpush.msra.mxu0 %v633
        %648 = vmatpush.msra.mxu0 %v631
        %649 = vmatpush.msra.mxu0 %v629
        %650 = vmatpush.msra.mxu0 %v627
        %651 = vmatpush.msra.mxu0 %v625
        %652 = vmatpush.msra.mxu0 %v623
        %653 = vmatpush.msra.mxu0 %v621
        %654 = vmatpush.msra.mxu0 %v619
        %655 = vmatpush.msra.mxu0 %v617
        %656 = vmatpush.msra.mxu0 %v615
        %657 = vmatpush.msra.mxu0 %v613
        %658 = vmatpush.msra.mxu0 %v611
        %659 = vmatpush.msra.mxu0 %v609
        %660 = vmatpush.msra.mxu0 %v607
        %v661 = vand.u32 %v589, 4294901760
        %v662 = vsub.f32 %v589, %v661
        %v663 = vand.u32 %v662, 4294901760
        %v664 = vsub.f32 %v662, %v663
        %v665 = vand.u32 %v664, 4294901760
        %666 = vmatmul.f32.gmra.mxu0 %v665
        %v667 = vpop.f32.mrf.mxu0
        %v668 = vadd.f32 %v641, %v667
        %v669 = vand.u32 %v590, 4294901760
        %v670 = vsub.f32 %v590, %v669
        %v671 = vand.u32 %v670, 4294901760
        %v672 = vsub.f32 %v670, %v671
        %v673 = vand.u32 %v672, 4294901760
        %674 = vmatmul.f32.gmra.mxu0 %v673
        %v675 = vpop.f32.mrf.mxu0
        %v676 = vadd.f32 %v641, %v675
        %677 = vdwg.mxu0
        %v678 = vsub.f32 %v637, %v637
        %v679 = vand.u32 %v678, 4294901760
        %v680 = vsub.f32 %v678, %v679
        %v681 = vand.u32 %v680, 4294901760
        %682 = vmatpush.msra.mxu0 %v681
        %v683 = vsub.f32 %v635, %v635
        %v684 = vand.u32 %v683, 4294901760
        %v685 = vsub.f32 %v683, %v684
        %v686 = vand.u32 %v685, 4294901760
        %687 = vmatpush.msra.mxu0 %v686
        %v688 = vsub.f32 %v633, %v633
        %v689 = vand.u32 %v688, 4294901760
        %v690 = vsub.f32 %v688, %v689
        %v691 = vand.u32 %v690, 4294901760
        %692 = vmatpush.msra.mxu0 %v691
        %v693 = vsub.f32 %v631, %v631
        %v694 = vand.u32 %v693, 4294901760
        %v695 = vsub.f32 %v693, %v694
        %v696 = vand.u32 %v695, 4294901760
        %697 = vmatpush.msra.mxu0 %v696
        %v698 = vsub.f32 %v629, %v629
        %v699 = vand.u32 %v698, 4294901760
        %v700 = vsub.f32 %v698, %v699
        %v701 = vand.u32 %v700, 4294901760
        %702 = vmatpush.msra.mxu0 %v701
        %v703 = vsub.f32 %v627, %v627
        %v704 = vand.u32 %v703, 4294901760
        %v705 = vsub.f32 %v703, %v704
        %v706 = vand.u32 %v705, 4294901760
        %707 = vmatpush.msra.mxu0 %v706
        %v708 = vsub.f32 %v625, %v625
        %v709 = vand.u32 %v708, 4294901760
        %v710 = vsub.f32 %v708, %v709
        %v711 = vand.u32 %v710, 4294901760
        %712 = vmatpush.msra.mxu0 %v711
        %v713 = vsub.f32 %v623, %v623
        %v714 = vand.u32 %v713, 4294901760
        %v715 = vsub.f32 %v713, %v714
        %v716 = vand.u32 %v715, 4294901760
        %717 = vmatpush.msra.mxu0 %v716
        %v718 = vsub.f32 %v621, %v621
        %v719 = vand.u32 %v718, 4294901760
        %v720 = vsub.f32 %v718, %v719
        %v721 = vand.u32 %v720, 4294901760
        %722 = vmatpush.msra.mxu0 %v721
        %v723 = vsub.f32 %v619, %v619
        %v724 = vand.u32 %v723, 4294901760
        %v725 = vsub.f32 %v723, %v724
        %v726 = vand.u32 %v725, 4294901760
        %727 = vmatpush.msra.mxu0 %v726
        %v728 = vsub.f32 %v617, %v617
        %v729 = vand.u32 %v728, 4294901760
        %v730 = vsub.f32 %v728, %v729
        %v731 = vand.u32 %v730, 4294901760
        %732 = vmatpush.msra.mxu0 %v731
        %v733 = vsub.f32 %v615, %v615
        %v734 = vand.u32 %v733, 4294901760
        %v735 = vsub.f32 %v733, %v734
        %v736 = vand.u32 %v735, 4294901760
        %737 = vmatpush.msra.mxu0 %v736
        %v738 = vsub.f32 %v613, %v613
        %v739 = vand.u32 %v738, 4294901760
        %v740 = vsub.f32 %v738, %v739
        %v741 = vand.u32 %v740, 4294901760
        %742 = vmatpush.msra.mxu0 %v741
        %v743 = vsub.f32 %v611, %v611
        %v744 = vand.u32 %v743, 4294901760
        %v745 = vsub.f32 %v743, %v744
        %v746 = vand.u32 %v745, 4294901760
        %747 = vmatpush.msra.mxu0 %v746
        %v748 = vsub.f32 %v609, %v609
        %v749 = vand.u32 %v748, 4294901760
        %v750 = vsub.f32 %v748, %v749
        %v751 = vand.u32 %v750, 4294901760
        %752 = vmatpush.msra.mxu0 %v751
        %v753 = vsub.f32 %v607, %v607
        %v754 = vand.u32 %v753, 4294901760
        %v755 = vsub.f32 %v753, %v754
        %v756 = vand.u32 %v755, 4294901760
        %757 = vmatpush.msra.mxu0 %v756
        %v758 = vand.u32 %v589, 4294901760
        %759 = vmatmul.f32.gmra.mxu0 %v758
        %v760 = vpop.f32.mrf.mxu0
        %v761 = vadd.f32 %v668, %v760
        %v762 = vand.u32 %v590, 4294901760
        %763 = vmatmul.f32.gmra.mxu0 %v762
        %v764 = vpop.f32.mrf.mxu0
        %v765 = vadd.f32 %v676, %v764
        %766 = vdwg.mxu0
        %v767 = vsub.f32 %v637, %v637
        %768 = vmatpush.msra.mxu0 %v767
        %v769 = vsub.f32 %v635, %v635
        %770 = vmatpush.msra.mxu0 %v769
        %v771 = vsub.f32 %v633, %v633
        %772 = vmatpush.msra.mxu0 %v771
        %v773 = vsub.f32 %v631, %v631
        %774 = vmatpush.msra.mxu0 %v773
        %v775 = vsub.f32 %v629, %v629
        %776 = vmatpush.msra.mxu0 %v775
        %v777 = vsub.f32 %v627, %v627
        %778 = vmatpush.msra.mxu0 %v777
        %v779 = vsub.f32 %v625, %v625
        %780 = vmatpush.msra.mxu0 %v779
        %v781 = vsub.f32 %v623, %v623
        %782 = vmatpush.msra.mxu0 %v781
        %v783 = vsub.f32 %v621, %v621
        %784 = vmatpush.msra.mxu0 %v783
        %v785 = vsub.f32 %v619, %v619
        %786 = vmatpush.msra.mxu0 %v785
        %v787 = vsub.f32 %v617, %v617
        %788 = vmatpush.msra.mxu0 %v787
        %v789 = vsub.f32 %v615, %v615
        %790 = vmatpush.msra.mxu0 %v789
        %v791 = vsub.f32 %v613, %v613
        %792 = vmatpush.msra.mxu0 %v791
        %v793 = vsub.f32 %v611, %v611
        %794 = vmatpush.msra.mxu0 %v793
        %v795 = vsub.f32 %v609, %v609
        %796 = vmatpush.msra.mxu0 %v795
        %v797 = vsub.f32 %v607, %v607
        %798 = vmatpush.msra.mxu0 %v797
        %v799 = vand.u32 %v589, 4294901760
        %v800 = vsub.f32 %v589, %v799
        %801 = vmatmul.f32.gmra.mxu0 %v800
        %v802 = vpop.f32.mrf.mxu0
        %v803 = vadd.f32 %v761, %v802
        %v804 = vand.u32 %v590, 4294901760
        %v805 = vsub.f32 %v590, %v804
        %806 = vmatmul.f32.gmra.mxu0 %v805
        %v807 = vpop.f32.mrf.mxu0
        %v808 = vadd.f32 %v765, %v807
        %809 = vdwg.mxu0
        %810 = vmatpush.msra.mxu0 %v637
        %811 = vmatpush.msra.mxu0 %v635
        %812 = vmatpush.msra.mxu0 %v633
        %813 = vmatpush.msra.mxu0 %v631
        %814 = vmatpush.msra.mxu0 %v629
        %815 = vmatpush.msra.mxu0 %v627
        %816 = vmatpush.msra.mxu0 %v625
        %817 = vmatpush.msra.mxu0 %v623
        %818 = vmatpush.msra.mxu0 %v621
        %819 = vmatpush.msra.mxu0 %v619
        %820 = vmatpush.msra.mxu0 %v617
        %821 = vmatpush.msra.mxu0 %v615
        %822 = vmatpush.msra.mxu0 %v613
        %823 = vmatpush.msra.mxu0 %v611
        %824 = vmatpush.msra.mxu0 %v609
        %825 = vmatpush.msra.mxu0 %v607
        %v826 = vand.u32 %v589, 4294901760
        %v827 = vsub.f32 %v589, %v826
        %v828 = vand.u32 %v827, 4294901760
        %829 = vmatmul.f32.gmra.mxu0 %v828
        %v830 = vpop.f32.mrf.mxu0
        %v831 = vadd.f32 %v803, %v830
        %v832 = vand.u32 %v590, 4294901760
        %v833 = vsub.f32 %v590, %v832
        %v834 = vand.u32 %v833, 4294901760
        %835 = vmatmul.f32.gmra.mxu0 %v834
        %v836 = vpop.f32.mrf.mxu0
        %v837 = vadd.f32 %v808, %v836
        %838 = vdwg.mxu0
        %v839 = vsub.f32 %v637, %v637
        %v840 = vand.u32 %v839, 4294901760
        %841 = vmatpush.msra.mxu0 %v840
        %v842 = vsub.f32 %v635, %v635
        %v843 = vand.u32 %v842, 4294901760
        %844 = vmatpush.msra.mxu0 %v843
        %v845 = vsub.f32 %v633, %v633
        %v846 = vand.u32 %v845, 4294901760
        %847 = vmatpush.msra.mxu0 %v846
        %v848 = vsub.f32 %v631, %v631
        %v849 = vand.u32 %v848, 4294901760
        %850 = vmatpush.msra.mxu0 %v849
        %v851 = vsub.f32 %v629, %v629
        %v852 = vand.u32 %v851, 4294901760
        %853 = vmatpush.msra.mxu0 %v852
        %v854 = vsub.f32 %v627, %v627
        %v855 = vand.u32 %v854, 4294901760
        %856 = vmatpush.msra.mxu0 %v855
        %v857 = vsub.f32 %v625, %v625
        %v858 = vand.u32 %v857, 4294901760
        %859 = vmatpush.msra.mxu0 %v858
        %v860 = vsub.f32 %v623, %v623
        %v861 = vand.u32 %v860, 4294901760
        %862 = vmatpush.msra.mxu0 %v861
        %v863 = vsub.f32 %v621, %v621
        %v864 = vand.u32 %v863, 4294901760
        %865 = vmatpush.msra.mxu0 %v864
        %v866 = vsub.f32 %v619, %v619
        %v867 = vand.u32 %v866, 4294901760
        %868 = vmatpush.msra.mxu0 %v867
        %v869 = vsub.f32 %v617, %v617
        %v870 = vand.u32 %v869, 4294901760
        %871 = vmatpush.msra.mxu0 %v870
        %v872 = vsub.f32 %v615, %v615
        %v873 = vand.u32 %v872, 4294901760
        %874 = vmatpush.msra.mxu0 %v873
        %v875 = vsub.f32 %v613, %v613
        %v876 = vand.u32 %v875, 4294901760
        %877 = vmatpush.msra.mxu0 %v876
        %v878 = vsub.f32 %v611, %v611
        %v879 = vand.u32 %v878, 4294901760
        %880 = vmatpush.msra.mxu0 %v879
        %v881 = vsub.f32 %v609, %v609
        %v882 = vand.u32 %v881, 4294901760
        %883 = vmatpush.msra.mxu0 %v882
        %v884 = vsub.f32 %v607, %v607
        %v885 = vand.u32 %v884, 4294901760
        %886 = vmatpush.msra.mxu0 %v885
        %v887 = vand.u32 %v589, 4294901760
        %888 = vmatmul.f32.gmra.mxu0 %v887
        %v889 = vpop.f32.mrf.mxu0
        %v890 = vadd.f32 %v831, %v889
        %v891 = vand.u32 %v590, 4294901760
        %892 = vmatmul.f32.gmra.mxu0 %v891
        %v893 = vpop.f32.mrf.mxu0
        %v894 = vadd.f32 %v837, %v893
        %895 = vdwg.mxu0
        %896 = vmatpush.msra.mxu0 %v637
        %897 = vmatpush.msra.mxu0 %v635
        %898 = vmatpush.msra.mxu0 %v633
        %899 = vmatpush.msra.mxu0 %v631
        %900 = vmatpush.msra.mxu0 %v629
        %901 = vmatpush.msra.mxu0 %v627
        %902 = vmatpush.msra.mxu0 %v625
        %903 = vmatpush.msra.mxu0 %v623
        %904 = vmatpush.msra.mxu0 %v621
        %905 = vmatpush.msra.mxu0 %v619
        %906 = vmatpush.msra.mxu0 %v617
        %907 = vmatpush.msra.mxu0 %v615
        %908 = vmatpush.msra.mxu0 %v613
        %909 = vmatpush.msra.mxu0 %v611
        %910 = vmatpush.msra.mxu0 %v609
        %911 = vmatpush.msra.mxu0 %v607
        %v912 = vand.u32 %v589, 4294901760
        %913 = vmatmul.f32.gmra.mxu0 %v912
        %v914 = vpop.f32.mrf.mxu0
        %v915 = vadd.f32 %v890, %v914
        %v916 = vand.u32 %v590, 4294901760
        %917 = vmatmul.f32.gmra.mxu0 %v916
        %v918 = vpop.f32.mrf.mxu0
        %v919 = vadd.f32 %v894, %v918
        %920 = vdwg.mxu0
        %921 = vmatpush.msra.mxu0 %v638
        %922 = vmatpush.msra.mxu0 %v636
        %923 = vmatpush.msra.mxu0 %v634
        %924 = vmatpush.msra.mxu0 %v632
        %925 = vmatpush.msra.mxu0 %v630
        %926 = vmatpush.msra.mxu0 %v628
        %927 = vmatpush.msra.mxu0 %v626
        %928 = vmatpush.msra.mxu0 %v624
        %929 = vmatpush.msra.mxu0 %v622
        %930 = vmatpush.msra.mxu0 %v620
        %931 = vmatpush.msra.mxu0 %v618
        %932 = vmatpush.msra.mxu0 %v616
        %933 = vmatpush.msra.mxu0 %v614
        %934 = vmatpush.msra.mxu0 %v612
        %935 = vmatpush.msra.mxu0 %v610
        %936 = vmatpush.msra.mxu0 %v608
        %v937 = vand.u32 %v589, 4294901760
        %v938 = vsub.f32 %v589, %v937
        %v939 = vand.u32 %v938, 4294901760
        %v940 = vsub.f32 %v938, %v939
        %v941 = vand.u32 %v940, 4294901760
        %942 = vmatmul.f32.gmra.mxu0 %v941
        %v943 = vpop.f32.mrf.mxu0
        %v944 = vadd.f32 %v642, %v943
        %v945 = vand.u32 %v590, 4294901760
        %v946 = vsub.f32 %v590, %v945
        %v947 = vand.u32 %v946, 4294901760
        %v948 = vsub.f32 %v946, %v947
        %v949 = vand.u32 %v948, 4294901760
        %950 = vmatmul.f32.gmra.mxu0 %v949
        %v951 = vpop.f32.mrf.mxu0
        %v952 = vadd.f32 %v642, %v951
        %953 = vdwg.mxu0
        %v954 = vsub.f32 %v638, %v638
        %v955 = vand.u32 %v954, 4294901760
        %v956 = vsub.f32 %v954, %v955
        %v957 = vand.u32 %v956, 4294901760
        %958 = vmatpush.msra.mxu0 %v957
        %v959 = vsub.f32 %v636, %v636
        %v960 = vand.u32 %v959, 4294901760
        %v961 = vsub.f32 %v959, %v960
        %v962 = vand.u32 %v961, 4294901760
        %963 = vmatpush.msra.mxu0 %v962
        %v964 = vsub.f32 %v634, %v634
        %v965 = vand.u32 %v964, 4294901760
        %v966 = vsub.f32 %v964, %v965
        %v967 = vand.u32 %v966, 4294901760
        %968 = vmatpush.msra.mxu0 %v967
        %v969 = vsub.f32 %v632, %v632
        %v970 = vand.u32 %v969, 4294901760
        %v971 = vsub.f32 %v969, %v970
        %v972 = vand.u32 %v971, 4294901760
        %973 = vmatpush.msra.mxu0 %v972
        %v974 = vsub.f32 %v630, %v630
        %v975 = vand.u32 %v974, 4294901760
        %v976 = vsub.f32 %v974, %v975
        %v977 = vand.u32 %v976, 4294901760
        %978 = vmatpush.msra.mxu0 %v977
        %v979 = vsub.f32 %v628, %v628
        %v980 = vand.u32 %v979, 4294901760
        %v981 = vsub.f32 %v979, %v980
        %v982 = vand.u32 %v981, 4294901760
        %983 = vmatpush.msra.mxu0 %v982
        %v984 = vsub.f32 %v626, %v626
        %v985 = vand.u32 %v984, 4294901760
        %v986 = vsub.f32 %v984, %v985
        %v987 = vand.u32 %v986, 4294901760
        %988 = vmatpush.msra.mxu0 %v987
        %v989 = vsub.f32 %v624, %v624
        %v990 = vand.u32 %v989, 4294901760
        %v991 = vsub.f32 %v989, %v990
        %v992 = vand.u32 %v991, 4294901760
        %993 = vmatpush.msra.mxu0 %v992
        %v994 = vsub.f32 %v622, %v622
        %v995 = vand.u32 %v994, 4294901760
        %v996 = vsub.f32 %v994, %v995
        %v997 = vand.u32 %v996, 4294901760
        %998 = vmatpush.msra.mxu0 %v997
        %v999 = vsub.f32 %v620, %v620
        %v1000 = vand.u32 %v999, 4294901760
        %v1001 = vsub.f32 %v999, %v1000
        %v1002 = vand.u32 %v1001, 4294901760
        %1003 = vmatpush.msra.mxu0 %v1002
        %v1004 = vsub.f32 %v618, %v618
        %v1005 = vand.u32 %v1004, 4294901760
        %v1006 = vsub.f32 %v1004, %v1005
        %v1007 = vand.u32 %v1006, 4294901760
        %1008 = vmatpush.msra.mxu0 %v1007
        %v1009 = vsub.f32 %v616, %v616
        %v1010 = vand.u32 %v1009, 4294901760
        %v1011 = vsub.f32 %v1009, %v1010
        %v1012 = vand.u32 %v1011, 4294901760
        %1013 = vmatpush.msra.mxu0 %v1012
        %v1014 = vsub.f32 %v614, %v614
        %v1015 = vand.u32 %v1014, 4294901760
        %v1016 = vsub.f32 %v1014, %v1015
        %v1017 = vand.u32 %v1016, 4294901760
        %1018 = vmatpush.msra.mxu0 %v1017
        %v1019 = vsub.f32 %v612, %v612
        %v1020 = vand.u32 %v1019, 4294901760
        %v1021 = vsub.f32 %v1019, %v1020
        %v1022 = vand.u32 %v1021, 4294901760
        %1023 = vmatpush.msra.mxu0 %v1022
        %v1024 = vsub.f32 %v610, %v610
        %v1025 = vand.u32 %v1024, 4294901760
        %v1026 = vsub.f32 %v1024, %v1025
        %v1027 = vand.u32 %v1026, 4294901760
        %1028 = vmatpush.msra.mxu0 %v1027
        %v1029 = vsub.f32 %v608, %v608
        %v1030 = vand.u32 %v1029, 4294901760
        %v1031 = vsub.f32 %v1029, %v1030
        %v1032 = vand.u32 %v1031, 4294901760
        %1033 = vmatpush.msra.mxu0 %v1032
        %v1034 = vand.u32 %v589, 4294901760
        %1035 = vmatmul.f32.gmra.mxu0 %v1034
        %v1036 = vpop.f32.mrf.mxu0
        %v1037 = vadd.f32 %v944, %v1036
        %v1038 = vand.u32 %v590, 4294901760
        %1039 = vmatmul.f32.gmra.mxu0 %v1038
        %v1040 = vpop.f32.mrf.mxu0
        %v1041 = vadd.f32 %v952, %v1040
        %1042 = vdwg.mxu0
        %v1043 = vsub.f32 %v638, %v638
        %1044 = vmatpush.msra.mxu0 %v1043
        %v1045 = vsub.f32 %v636, %v636
        %1046 = vmatpush.msra.mxu0 %v1045
        %v1047 = vsub.f32 %v634, %v634
        %1048 = vmatpush.msra.mxu0 %v1047
        %v1049 = vsub.f32 %v632, %v632
        %1050 = vmatpush.msra.mxu0 %v1049
        %v1051 = vsub.f32 %v630, %v630
        %1052 = vmatpush.msra.mxu0 %v1051
        %v1053 = vsub.f32 %v628, %v628
        %1054 = vmatpush.msra.mxu0 %v1053
        %v1055 = vsub.f32 %v626, %v626
        %1056 = vmatpush.msra.mxu0 %v1055
        %v1057 = vsub.f32 %v624, %v624
        %1058 = vmatpush.msra.mxu0 %v1057
        %v1059 = vsub.f32 %v622, %v622
        %1060 = vmatpush.msra.mxu0 %v1059
        %v1061 = vsub.f32 %v620, %v620
        %1062 = vmatpush.msra.mxu0 %v1061
        %v1063 = vsub.f32 %v618, %v618
        %1064 = vmatpush.msra.mxu0 %v1063
        %v1065 = vsub.f32 %v616, %v616
        %1066 = vmatpush.msra.mxu0 %v1065
        %v1067 = vsub.f32 %v614, %v614
        %1068 = vmatpush.msra.mxu0 %v1067
        %v1069 = vsub.f32 %v612, %v612
        %1070 = vmatpush.msra.mxu0 %v1069
        %v1071 = vsub.f32 %v610, %v610
        %1072 = vmatpush.msra.mxu0 %v1071
        %v1073 = vsub.f32 %v608, %v608
        %1074 = vmatpush.msra.mxu0 %v1073
        %v1075 = vand.u32 %v589, 4294901760
        %v1076 = vsub.f32 %v589, %v1075
        %1077 = vmatmul.f32.gmra.mxu0 %v1076
        %v1078 = vpop.f32.mrf.mxu0
        %v1079 = vadd.f32 %v1037, %v1078
        %v1080 = vand.u32 %v590, 4294901760
        %v1081 = vsub.f32 %v590, %v1080
        %1082 = vmatmul.f32.gmra.mxu0 %v1081
        %v1083 = vpop.f32.mrf.mxu0
        %v1084 = vadd.f32 %v1041, %v1083
        %1085 = vdwg.mxu0
        %1086 = vmatpush.msra.mxu0 %v638
        %1087 = vmatpush.msra.mxu0 %v636
        %1088 = vmatpush.msra.mxu0 %v634
        %1089 = vmatpush.msra.mxu0 %v632
        %1090 = vmatpush.msra.mxu0 %v630
        %1091 = vmatpush.msra.mxu0 %v628
        %1092 = vmatpush.msra.mxu0 %v626
        %1093 = vmatpush.msra.mxu0 %v624
        %1094 = vmatpush.msra.mxu0 %v622
        %1095 = vmatpush.msra.mxu0 %v620
        %1096 = vmatpush.msra.mxu0 %v618
        %1097 = vmatpush.msra.mxu0 %v616
        %1098 = vmatpush.msra.mxu0 %v614
        %1099 = vmatpush.msra.mxu0 %v612
        %1100 = vmatpush.msra.mxu0 %v610
        %1101 = vmatpush.msra.mxu0 %v608
        %v1102 = vand.u32 %v589, 4294901760
        %v1103 = vsub.f32 %v589, %v1102
        %v1104 = vand.u32 %v1103, 4294901760
        %1105 = vmatmul.f32.gmra.mxu0 %v1104
        %v1106 = vpop.f32.mrf.mxu0
        %v1107 = vadd.f32 %v1079, %v1106
        %v1108 = vand.u32 %v590, 4294901760
        %v1109 = vsub.f32 %v590, %v1108
        %v1110 = vand.u32 %v1109, 4294901760
        %1111 = vmatmul.f32.gmra.mxu0 %v1110
        %v1112 = vpop.f32.mrf.mxu0
        %v1113 = vadd.f32 %v1084, %v1112
        %1114 = vdwg.mxu0
        %v1115 = vsub.f32 %v638, %v638
        %v1116 = vand.u32 %v1115, 4294901760
        %1117 = vmatpush.msra.mxu0 %v1116
        %v1118 = vsub.f32 %v636, %v636
        %v1119 = vand.u32 %v1118, 4294901760
        %1120 = vmatpush.msra.mxu0 %v1119
        %v1121 = vsub.f32 %v634, %v634
        %v1122 = vand.u32 %v1121, 4294901760
        %1123 = vmatpush.msra.mxu0 %v1122
        %v1124 = vsub.f32 %v632, %v632
        %v1125 = vand.u32 %v1124, 4294901760
        %1126 = vmatpush.msra.mxu0 %v1125
        %v1127 = vsub.f32 %v630, %v630
        %v1128 = vand.u32 %v1127, 4294901760
        %1129 = vmatpush.msra.mxu0 %v1128
        %v1130 = vsub.f32 %v628, %v628
        %v1131 = vand.u32 %v1130, 4294901760
        %1132 = vmatpush.msra.mxu0 %v1131
        %v1133 = vsub.f32 %v626, %v626
        %v1134 = vand.u32 %v1133, 4294901760
        %1135 = vmatpush.msra.mxu0 %v1134
        %v1136 = vsub.f32 %v624, %v624
        %v1137 = vand.u32 %v1136, 4294901760
        %1138 = vmatpush.msra.mxu0 %v1137
        %v1139 = vsub.f32 %v622, %v622
        %v1140 = vand.u32 %v1139, 4294901760
        %1141 = vmatpush.msra.mxu0 %v1140
        %v1142 = vsub.f32 %v620, %v620
        %v1143 = vand.u32 %v1142, 4294901760
        %1144 = vmatpush.msra.mxu0 %v1143
        %v1145 = vsub.f32 %v618, %v618
        %v1146 = vand.u32 %v1145, 4294901760
        %1147 = vmatpush.msra.mxu0 %v1146
        %v1148 = vsub.f32 %v616, %v616
        %v1149 = vand.u32 %v1148, 4294901760
        %1150 = vmatpush.msra.mxu0 %v1149
        %v1151 = vsub.f32 %v614, %v614
        %v1152 = vand.u32 %v1151, 4294901760
        %1153 = vmatpush.msra.mxu0 %v1152
        %v1154 = vsub.f32 %v612, %v612
        %v1155 = vand.u32 %v1154, 4294901760
        %1156 = vmatpush.msra.mxu0 %v1155
        %v1157 = vsub.f32 %v610, %v610
        %v1158 = vand.u32 %v1157, 4294901760
        %1159 = vmatpush.msra.mxu0 %v1158
        %v1160 = vsub.f32 %v608, %v608
        %v1161 = vand.u32 %v1160, 4294901760
        %1162 = vmatpush.msra.mxu0 %v1161
        %v1163 = vand.u32 %v589, 4294901760
        %1164 = vmatmul.f32.gmra.mxu0 %v1163
        %v1165 = vpop.f32.mrf.mxu0
        %v1166 = vadd.f32 %v1107, %v1165
        %v1167 = vand.u32 %v590, 4294901760
        %1168 = vmatmul.f32.gmra.mxu0 %v1167
        %v1169 = vpop.f32.mrf.mxu0
        %v1170 = vadd.f32 %v1113, %v1169
        %1171 = vdwg.mxu0
        %1172 = vmatpush.msra.mxu0 %v638
        %1173 = vmatpush.msra.mxu0 %v636
        %1174 = vmatpush.msra.mxu0 %v634
        %1175 = vmatpush.msra.mxu0 %v632
        %1176 = vmatpush.msra.mxu0 %v630
        %1177 = vmatpush.msra.mxu0 %v628
        %1178 = vmatpush.msra.mxu0 %v626
        %1179 = vmatpush.msra.mxu0 %v624
        %1180 = vmatpush.msra.mxu0 %v622
        %1181 = vmatpush.msra.mxu0 %v620
        %1182 = vmatpush.msra.mxu0 %v618
        %1183 = vmatpush.msra.mxu0 %v616
        %1184 = vmatpush.msra.mxu0 %v614
        %1185 = vmatpush.msra.mxu0 %v612
        %1186 = vmatpush.msra.mxu0 %v610
        %1187 = vmatpush.msra.mxu0 %v608
        %v1188 = vand.u32 %v589, 4294901760
        %1189 = vmatmul.f32.gmra.mxu0 %v1188
        %v1190 = vpop.f32.mrf.mxu0
        %v1191 = vadd.f32 %v1166, %v1190
        %v1192 = vand.u32 %v590, 4294901760
        %1193 = vmatmul.f32.gmra.mxu0 %v1192
        %v1194 = vpop.f32.mrf.mxu0
        %v1195 = vadd.f32 %v1170, %v1194
        %1196 = vdwg.mxu0
        %vm1197 = vcmask 261120
        %v1199 = vsel %vm1197, %v588, 0
        %v1202 = vsel %vm1197, %v915, 0
        %1204 = vmatpush.xpose.msra.mxu0 0.0
        %1205 = vmatpush.xpose.msra.mxu0 0.0
        %1206 = vmatpush.xpose.msra.mxu0 0.0
        %1207 = vmatpush.xpose.msra.mxu0 0.0
        %1208 = vmatpush.xpose.msra.mxu0 0.0
        %1209 = vmatpush.xpose.msra.mxu0 0.0
        %1210 = vmatpush.xpose.msra.mxu0 0.0
        %1211 = vmatpush.xpose.msra.mxu0 0.0
        %1212 = vmatpush.xpose.msra.mxu0 0.0
        %1213 = vmatpush.xpose.msra.mxu0 0.0
        %1214 = vmatpush.xpose.msra.mxu0 0.0
        %1215 = vmatpush.xpose.msra.mxu0 0.0
        %1216 = vmatpush.xpose.msra.mxu0 0.0
        %1217 = vmatpush.xpose.msra.mxu0 0.0
        %1218 = vmatpush.xpose.msra.mxu0 0.0
        %v1219 = vand.u32 %v1202, 4294901760
        %1220 = vmatpush.xpose.msra.mxu0 %v1219
        %v1221 = vand.u32 %v1199, 4294901760
        %v1222 = vsub.f32 %v1199, %v1221
        %v1223 = vand.u32 %v1222, 4294901760
        %v1224 = vsub.f32 %v1222, %v1223
        %v1225 = vand.u32 %v1224, 4294901760
        %1226 = vmatmul.f32.gmra.mxu0 %v1225
        %v1227 = vpop.f32.mrf.mxu0
        %v1228 = vadd.f32 0.0, %v1227
        %1229 = vdwg.mxu0
        %1230 = vmatpush.xpose.msra.mxu0 0.0
        %1231 = vmatpush.xpose.msra.mxu0 0.0
        %1232 = vmatpush.xpose.msra.mxu0 0.0
        %1233 = vmatpush.xpose.msra.mxu0 0.0
        %1234 = vmatpush.xpose.msra.mxu0 0.0
        %1235 = vmatpush.xpose.msra.mxu0 0.0
        %1236 = vmatpush.xpose.msra.mxu0 0.0
        %1237 = vmatpush.xpose.msra.mxu0 0.0
        %1238 = vmatpush.xpose.msra.mxu0 0.0
        %1239 = vmatpush.xpose.msra.mxu0 0.0
        %1240 = vmatpush.xpose.msra.mxu0 0.0
        %1241 = vmatpush.xpose.msra.mxu0 0.0
        %1242 = vmatpush.xpose.msra.mxu0 0.0
        %1243 = vmatpush.xpose.msra.mxu0 0.0
        %1244 = vmatpush.xpose.msra.mxu0 0.0
        %v1245 = vand.u32 %v1202, 4294901760
        %v1246 = vsub.f32 %v1202, %v1245
        %v1247 = vand.u32 %v1246, 4294901760
        %v1248 = vsub.f32 %v1246, %v1247
        %v1249 = vand.u32 %v1248, 4294901760
        %1250 = vmatpush.xpose.msra.mxu0 %v1249
        %v1251 = vand.u32 %v1199, 4294901760
        %1252 = vmatmul.f32.gmra.mxu0 %v1251
        %v1253 = vpop.f32.mrf.mxu0
        %v1254 = vadd.f32 %v1228, %v1253
        %1255 = vdwg.mxu0
        %1256 = vmatpush.xpose.msra.mxu0 0.0
        %1257 = vmatpush.xpose.msra.mxu0 0.0
        %1258 = vmatpush.xpose.msra.mxu0 0.0
        %1259 = vmatpush.xpose.msra.mxu0 0.0
        %1260 = vmatpush.xpose.msra.mxu0 0.0
        %1261 = vmatpush.xpose.msra.mxu0 0.0
        %1262 = vmatpush.xpose.msra.mxu0 0.0
        %1263 = vmatpush.xpose.msra.mxu0 0.0
        %1264 = vmatpush.xpose.msra.mxu0 0.0
        %1265 = vmatpush.xpose.msra.mxu0 0.0
        %1266 = vmatpush.xpose.msra.mxu0 0.0
        %1267 = vmatpush.xpose.msra.mxu0 0.0
        %1268 = vmatpush.xpose.msra.mxu0 0.0
        %1269 = vmatpush.xpose.msra.mxu0 0.0
        %1270 = vmatpush.xpose.msra.mxu0 0.0
        %v1271 = vand.u32 %v1202, 4294901760
        %v1272 = vsub.f32 %v1202, %v1271
        %1273 = vmatpush.xpose.msra.mxu0 %v1272
        %v1274 = vand.u32 %v1199, 4294901760
        %v1275 = vsub.f32 %v1199, %v1274
        %1276 = vmatmul.f32.gmra.mxu0 %v1275
        %v1277 = vpop.f32.mrf.mxu0
        %v1278 = vadd.f32 %v1254, %v1277
        %1279 = vdwg.mxu0
        %1280 = vmatpush.xpose.msra.mxu0 0.0
        %1281 = vmatpush.xpose.msra.mxu0 0.0
        %1282 = vmatpush.xpose.msra.mxu0 0.0
        %1283 = vmatpush.xpose.msra.mxu0 0.0
        %1284 = vmatpush.xpose.msra.mxu0 0.0
        %1285 = vmatpush.xpose.msra.mxu0 0.0
        %1286 = vmatpush.xpose.msra.mxu0 0.0
        %1287 = vmatpush.xpose.msra.mxu0 0.0
        %1288 = vmatpush.xpose.msra.mxu0 0.0
        %1289 = vmatpush.xpose.msra.mxu0 0.0
        %1290 = vmatpush.xpose.msra.mxu0 0.0
        %1291 = vmatpush.xpose.msra.mxu0 0.0
        %1292 = vmatpush.xpose.msra.mxu0 0.0
        %1293 = vmatpush.xpose.msra.mxu0 0.0
        %1294 = vmatpush.xpose.msra.mxu0 0.0
        %v1295 = vand.u32 %v1202, 4294901760
        %1296 = vmatpush.xpose.msra.mxu0 %v1295
        %v1297 = vand.u32 %v1199, 4294901760
        %v1298 = vsub.f32 %v1199, %v1297
        %v1299 = vand.u32 %v1298, 4294901760
        %1300 = vmatmul.f32.gmra.mxu0 %v1299
        %v1301 = vpop.f32.mrf.mxu0
        %v1302 = vadd.f32 %v1278, %v1301
        %1303 = vdwg.mxu0
        %1304 = vmatpush.xpose.msra.mxu0 0.0
        %1305 = vmatpush.xpose.msra.mxu0 0.0
        %1306 = vmatpush.xpose.msra.mxu0 0.0
        %1307 = vmatpush.xpose.msra.mxu0 0.0
        %1308 = vmatpush.xpose.msra.mxu0 0.0
        %1309 = vmatpush.xpose.msra.mxu0 0.0
        %1310 = vmatpush.xpose.msra.mxu0 0.0
        %1311 = vmatpush.xpose.msra.mxu0 0.0
        %1312 = vmatpush.xpose.msra.mxu0 0.0
        %1313 = vmatpush.xpose.msra.mxu0 0.0
        %1314 = vmatpush.xpose.msra.mxu0 0.0
        %1315 = vmatpush.xpose.msra.mxu0 0.0
        %1316 = vmatpush.xpose.msra.mxu0 0.0
        %1317 = vmatpush.xpose.msra.mxu0 0.0
        %1318 = vmatpush.xpose.msra.mxu0 0.0
        %v1319 = vand.u32 %v1202, 4294901760
        %v1320 = vsub.f32 %v1202, %v1319
        %v1321 = vand.u32 %v1320, 4294901760
        %1322 = vmatpush.xpose.msra.mxu0 %v1321
        %v1323 = vand.u32 %v1199, 4294901760
        %1324 = vmatmul.f32.gmra.mxu0 %v1323
        %v1325 = vpop.f32.mrf.mxu0
        %v1326 = vadd.f32 %v1302, %v1325
        %1327 = vdwg.mxu0
        %1328 = vmatpush.xpose.msra.mxu0 0.0
        %1329 = vmatpush.xpose.msra.mxu0 0.0
        %1330 = vmatpush.xpose.msra.mxu0 0.0
        %1331 = vmatpush.xpose.msra.mxu0 0.0
        %1332 = vmatpush.xpose.msra.mxu0 0.0
        %1333 = vmatpush.xpose.msra.mxu0 0.0
        %1334 = vmatpush.xpose.msra.mxu0 0.0
        %1335 = vmatpush.xpose.msra.mxu0 0.0
        %1336 = vmatpush.xpose.msra.mxu0 0.0
        %1337 = vmatpush.xpose.msra.mxu0 0.0
        %1338 = vmatpush.xpose.msra.mxu0 0.0
        %1339 = vmatpush.xpose.msra.mxu0 0.0
        %1340 = vmatpush.xpose.msra.mxu0 0.0
        %1341 = vmatpush.xpose.msra.mxu0 0.0
        %1342 = vmatpush.xpose.msra.mxu0 0.0
        %v1343 = vand.u32 %v1202, 4294901760
        %1344 = vmatpush.xpose.msra.mxu0 %v1343
        %v1345 = vand.u32 %v1199, 4294901760
        %1346 = vmatmul.f32.gmra.mxu0 %v1345
        %v1347 = vpop.f32.mrf.mxu0
        %v1348 = vadd.f32 %v1326, %v1347
        %1349 = vdwg.mxu0
        %vm1350 = vcmask 60416
        %v1351 = vsel %vm1350, %v1348, -inf
        %1352 = vmax.xlane.f32.xlu0 %v1351
        %v1353 = vpop.xlane.xlu0 %1352
        %v1354 = vsub.f32 %v1348, %v1353
        %v1355 = vmul.f32 %v1354, 1.442695
        %v1356 = vpow.pop %v1355
        %v1357 = vsel %vm1350, %v1356, 0.0
        %1358 = vadd.xlane.f32.xlu0 %v1357
        %v1359 = vpop.xlane.xlu0 %1358
        %v1360 = vrcp.pop %v1359
        %v1361 = vmul.f32 %v1356, %v1360
        %vm1362 = vcmask 64512
        %v1364 = vsel %vm1362, %v1361, 0
        %1366 = vmatpush.msra.mxu0 0.0
        %1367 = vmatpush.msra.mxu0 0.0
        %1368 = vmatpush.msra.mxu0 0.0
        %1369 = vmatpush.msra.mxu0 0.0
        %1370 = vmatpush.msra.mxu0 0.0
        %1371 = vmatpush.msra.mxu0 0.0
        %1372 = vmatpush.msra.mxu0 0.0
        %1373 = vmatpush.msra.mxu0 0.0
        %1374 = vmatpush.msra.mxu0 0.0
        %1375 = vmatpush.msra.mxu0 0.0
        %1376 = vmatpush.msra.mxu0 0.0
        %1377 = vmatpush.msra.mxu0 0.0
        %1378 = vmatpush.msra.mxu0 0.0
        %1379 = vmatpush.msra.mxu0 0.0
        %1380 = vmatpush.msra.mxu0 0.0
        %v1381 = vand.u32 %v1191, 4294901760
        %1382 = vmatpush.msra.mxu0 %v1381
        %v1383 = vand.u32 %v1364, 4294901760
        %v1384 = vsub.f32 %v1364, %v1383
        %v1385 = vand.u32 %v1384, 4294901760
        %v1386 = vsub.f32 %v1384, %v1385
        %v1387 = vand.u32 %v1386, 4294901760
        %1388 = vmatmul.f32.gmra.mxu0 %v1387
        %v1389 = vpop.f32.mrf.mxu0
        %v1390 = vadd.f32 0.0, %v1389
        %1391 = vdwg.mxu0
        %1392 = vmatpush.msra.mxu0 0.0
        %1393 = vmatpush.msra.mxu0 0.0
        %1394 = vmatpush.msra.mxu0 0.0
        %1395 = vmatpush.msra.mxu0 0.0
        %1396 = vmatpush.msra.mxu0 0.0
        %1397 = vmatpush.msra.mxu0 0.0
        %1398 = vmatpush.msra.mxu0 0.0
        %1399 = vmatpush.msra.mxu0 0.0
        %1400 = vmatpush.msra.mxu0 0.0
        %1401 = vmatpush.msra.mxu0 0.0
        %1402 = vmatpush.msra.mxu0 0.0
        %1403 = vmatpush.msra.mxu0 0.0
        %1404 = vmatpush.msra.mxu0 0.0
        %1405 = vmatpush.msra.mxu0 0.0
        %1406 = vmatpush.msra.mxu0 0.0
        %v1407 = vand.u32 %v1191, 4294901760
        %v1408 = vsub.f32 %v1191, %v1407
        %v1409 = vand.u32 %v1408, 4294901760
        %v1410 = vsub.f32 %v1408, %v1409
        %v1411 = vand.u32 %v1410, 4294901760
        %1412 = vmatpush.msra.mxu0 %v1411
        %v1413 = vand.u32 %v1364, 4294901760
        %1414 = vmatmul.f32.gmra.mxu0 %v1413
        %v1415 = vpop.f32.mrf.mxu0
        %v1416 = vadd.f32 %v1390, %v1415
        %1417 = vdwg.mxu0
        %1418 = vmatpush.msra.mxu0 0.0
        %1419 = vmatpush.msra.mxu0 0.0
        %1420 = vmatpush.msra.mxu0 0.0
        %1421 = vmatpush.msra.mxu0 0.0
        %1422 = vmatpush.msra.mxu0 0.0
        %1423 = vmatpush.msra.mxu0 0.0
        %1424 = vmatpush.msra.mxu0 0.0
        %1425 = vmatpush.msra.mxu0 0.0
        %1426 = vmatpush.msra.mxu0 0.0
        %1427 = vmatpush.msra.mxu0 0.0
        %1428 = vmatpush.msra.mxu0 0.0
        %1429 = vmatpush.msra.mxu0 0.0
        %1430 = vmatpush.msra.mxu0 0.0
        %1431 = vmatpush.msra.mxu0 0.0
        %1432 = vmatpush.msra.mxu0 0.0
        %v1433 = vand.u32 %v1191, 4294901760
        %v1434 = vsub.f32 %v1191, %v1433
        %1435 = vmatpush.msra.mxu0 %v1434
        %v1436 = vand.u32 %v1364, 4294901760
        %v1437 = vsub.f32 %v1364, %v1436
        %1438 = vmatmul.f32.gmra.mxu0 %v1437
        %v1439 = vpop.f32.mrf.mxu0
        %v1440 = vadd.f32 %v1416, %v1439
        %1441 = vdwg.mxu0
        %1442 = vmatpush.msra.mxu0 0.0
        %1443 = vmatpush.msra.mxu0 0.0
        %1444 = vmatpush.msra.mxu0 0.0
        %1445 = vmatpush.msra.mxu0 0.0
        %1446 = vmatpush.msra.mxu0 0.0
        %1447 = vmatpush.msra.mxu0 0.0
        %1448 = vmatpush.msra.mxu0 0.0
        %1449 = vmatpush.msra.mxu0 0.0
        %1450 = vmatpush.msra.mxu0 0.0
        %1451 = vmatpush.msra.mxu0 0.0
        %1452 = vmatpush.msra.mxu0 0.0
        %1453 = vmatpush.msra.mxu0 0.0
        %1454 = vmatpush.msra.mxu0 0.0
        %1455 = vmatpush.msra.mxu0 0.0
        %1456 = vmatpush.msra.mxu0 0.0
        %v1457 = vand.u32 %v1191, 4294901760
        %1458 = vmatpush.msra.mxu0 %v1457
        %v1459 = vand.u32 %v1364, 4294901760
        %v1460 = vsub.f32 %v1364, %v1459
        %v1461 = vand.u32 %v1460, 4294901760
        %1462 = vmatmul.f32.gmra.mxu0 %v1461
        %v1463 = vpop.f32.mrf.mxu0
        %v1464 = vadd.f32 %v1440, %v1463
        %1465 = vdwg.mxu0
        %1466 = vmatpush.msra.mxu0 0.0
        %1467 = vmatpush.msra.mxu0 0.0
        %1468 = vmatpush.msra.mxu0 0.0
        %1469 = vmatpush.msra.mxu0 0.0
        %1470 = vmatpush.msra.mxu0 0.0
        %1471 = vmatpush.msra.mxu0 0.0
        %1472 = vmatpush.msra.mxu0 0.0
        %1473 = vmatpush.msra.mxu0 0.0
        %1474 = vmatpush.msra.mxu0 0.0
        %1475 = vmatpush.msra.mxu0 0.0
        %1476 = vmatpush.msra.mxu0 0.0
        %1477 = vmatpush.msra.mxu0 0.0
        %1478 = vmatpush.msra.mxu0 0.0
        %1479 = vmatpush.msra.mxu0 0.0
        %1480 = vmatpush.msra.mxu0 0.0
        %v1481 = vand.u32 %v1191, 4294901760
        %v1482 = vsub.f32 %v1191, %v1481
        %v1483 = vand.u32 %v1482, 4294901760
        %1484 = vmatpush.msra.mxu0 %v1483
        %v1485 = vand.u32 %v1364, 4294901760
        %1486 = vmatmul.f32.gmra.mxu0 %v1485
        %v1487 = vpop.f32.mrf.mxu0
        %v1488 = vadd.f32 %v1464, %v1487
        %1489 = vdwg.mxu0
        %1490 = vmatpush.msra.mxu0 0.0
        %1491 = vmatpush.msra.mxu0 0.0
        %1492 = vmatpush.msra.mxu0 0.0
        %1493 = vmatpush.msra.mxu0 0.0
        %1494 = vmatpush.msra.mxu0 0.0
        %1495 = vmatpush.msra.mxu0 0.0
        %1496 = vmatpush.msra.mxu0 0.0
        %1497 = vmatpush.msra.mxu0 0.0
        %1498 = vmatpush.msra.mxu0 0.0
        %1499 = vmatpush.msra.mxu0 0.0
        %1500 = vmatpush.msra.mxu0 0.0
        %1501 = vmatpush.msra.mxu0 0.0
        %1502 = vmatpush.msra.mxu0 0.0
        %1503 = vmatpush.msra.mxu0 0.0
        %1504 = vmatpush.msra.mxu0 0.0
        %v1505 = vand.u32 %v1191, 4294901760
        %1506 = vmatpush.msra.mxu0 %v1505
        %v1507 = vand.u32 %v1364, 4294901760
        %1508 = vmatmul.f32.gmra.mxu0 %v1507
        %v1509 = vpop.f32.mrf.mxu0
        %v1510 = vadd.f32 %v1488, %v1509
        %1511 = vdwg.mxu0
        %v1512 = vadd.f32 %v586, %v1510
        %1513 = vrot.lane.b32.xlu0 %v588, 96
        %v1514 = vpop.permute.xlu0 %1513
        %1515 = vrot.lane.b32.xlu0 %v915, 96
        %v1516 = vpop.permute.xlu0 %1515
        %v1517 = vsel %vm1197, %v1514, 0
        %v1519 = vsel %vm1197, %v1516, 0
        %1521 = vmatpush.xpose.msra.mxu0 0.0
        %1522 = vmatpush.xpose.msra.mxu0 0.0
        %1523 = vmatpush.xpose.msra.mxu0 0.0
        %1524 = vmatpush.xpose.msra.mxu0 0.0
        %1525 = vmatpush.xpose.msra.mxu0 0.0
        %1526 = vmatpush.xpose.msra.mxu0 0.0
        %1527 = vmatpush.xpose.msra.mxu0 0.0
        %1528 = vmatpush.xpose.msra.mxu0 0.0
        %1529 = vmatpush.xpose.msra.mxu0 0.0
        %1530 = vmatpush.xpose.msra.mxu0 0.0
        %1531 = vmatpush.xpose.msra.mxu0 0.0
        %1532 = vmatpush.xpose.msra.mxu0 0.0
        %1533 = vmatpush.xpose.msra.mxu0 0.0
        %1534 = vmatpush.xpose.msra.mxu0 0.0
        %1535 = vmatpush.xpose.msra.mxu0 0.0
        %v1536 = vand.u32 %v1519, 4294901760
        %1537 = vmatpush.xpose.msra.mxu0 %v1536
        %v1538 = vand.u32 %v1517, 4294901760
        %v1539 = vsub.f32 %v1517, %v1538
        %v1540 = vand.u32 %v1539, 4294901760
        %v1541 = vsub.f32 %v1539, %v1540
        %v1542 = vand.u32 %v1541, 4294901760
        %1543 = vmatmul.f32.gmra.mxu0 %v1542
        %v1544 = vpop.f32.mrf.mxu0
        %v1545 = vadd.f32 0.0, %v1544
        %1546 = vdwg.mxu0
        %1547 = vmatpush.xpose.msra.mxu0 0.0
        %1548 = vmatpush.xpose.msra.mxu0 0.0
        %1549 = vmatpush.xpose.msra.mxu0 0.0
        %1550 = vmatpush.xpose.msra.mxu0 0.0
        %1551 = vmatpush.xpose.msra.mxu0 0.0
        %1552 = vmatpush.xpose.msra.mxu0 0.0
        %1553 = vmatpush.xpose.msra.mxu0 0.0
        %1554 = vmatpush.xpose.msra.mxu0 0.0
        %1555 = vmatpush.xpose.msra.mxu0 0.0
        %1556 = vmatpush.xpose.msra.mxu0 0.0
        %1557 = vmatpush.xpose.msra.mxu0 0.0
        %1558 = vmatpush.xpose.msra.mxu0 0.0
        %1559 = vmatpush.xpose.msra.mxu0 0.0
        %1560 = vmatpush.xpose.msra.mxu0 0.0
        %1561 = vmatpush.xpose.msra.mxu0 0.0
        %v1562 = vand.u32 %v1519, 4294901760
        %v1563 = vsub.f32 %v1519, %v1562
        %v1564 = vand.u32 %v1563, 4294901760
        %v1565 = vsub.f32 %v1563, %v1564
        %v1566 = vand.u32 %v1565, 4294901760
        %1567 = vmatpush.xpose.msra.mxu0 %v1566
        %v1568 = vand.u32 %v1517, 4294901760
        %1569 = vmatmul.f32.gmra.mxu0 %v1568
        %v1570 = vpop.f32.mrf.mxu0
        %v1571 = vadd.f32 %v1545, %v1570
        %1572 = vdwg.mxu0
        %1573 = vmatpush.xpose.msra.mxu0 0.0
        %1574 = vmatpush.xpose.msra.mxu0 0.0
        %1575 = vmatpush.xpose.msra.mxu0 0.0
        %1576 = vmatpush.xpose.msra.mxu0 0.0
        %1577 = vmatpush.xpose.msra.mxu0 0.0
        %1578 = vmatpush.xpose.msra.mxu0 0.0
        %1579 = vmatpush.xpose.msra.mxu0 0.0
        %1580 = vmatpush.xpose.msra.mxu0 0.0
        %1581 = vmatpush.xpose.msra.mxu0 0.0
        %1582 = vmatpush.xpose.msra.mxu0 0.0
        %1583 = vmatpush.xpose.msra.mxu0 0.0
        %1584 = vmatpush.xpose.msra.mxu0 0.0
        %1585 = vmatpush.xpose.msra.mxu0 0.0
        %1586 = vmatpush.xpose.msra.mxu0 0.0
        %1587 = vmatpush.xpose.msra.mxu0 0.0
        %v1588 = vand.u32 %v1519, 4294901760
        %v1589 = vsub.f32 %v1519, %v1588
        %1590 = vmatpush.xpose.msra.mxu0 %v1589
        %v1591 = vand.u32 %v1517, 4294901760
        %v1592 = vsub.f32 %v1517, %v1591
        %1593 = vmatmul.f32.gmra.mxu0 %v1592
        %v1594 = vpop.f32.mrf.mxu0
        %v1595 = vadd.f32 %v1571, %v1594
        %1596 = vdwg.mxu0
        %1597 = vmatpush.xpose.msra.mxu0 0.0
        %1598 = vmatpush.xpose.msra.mxu0 0.0
        %1599 = vmatpush.xpose.msra.mxu0 0.0
        %1600 = vmatpush.xpose.msra.mxu0 0.0
        %1601 = vmatpush.xpose.msra.mxu0 0.0
        %1602 = vmatpush.xpose.msra.mxu0 0.0
        %1603 = vmatpush.xpose.msra.mxu0 0.0
        %1604 = vmatpush.xpose.msra.mxu0 0.0
        %1605 = vmatpush.xpose.msra.mxu0 0.0
        %1606 = vmatpush.xpose.msra.mxu0 0.0
        %1607 = vmatpush.xpose.msra.mxu0 0.0
        %1608 = vmatpush.xpose.msra.mxu0 0.0
        %1609 = vmatpush.xpose.msra.mxu0 0.0
        %1610 = vmatpush.xpose.msra.mxu0 0.0
        %1611 = vmatpush.xpose.msra.mxu0 0.0
        %v1612 = vand.u32 %v1519, 4294901760
        %1613 = vmatpush.xpose.msra.mxu0 %v1612
        %v1614 = vand.u32 %v1517, 4294901760
        %v1615 = vsub.f32 %v1517, %v1614
        %v1616 = vand.u32 %v1615, 4294901760
        %1617 = vmatmul.f32.gmra.mxu0 %v1616
        %v1618 = vpop.f32.mrf.mxu0
        %v1619 = vadd.f32 %v1595, %v1618
        %1620 = vdwg.mxu0
        %1621 = vmatpush.xpose.msra.mxu0 0.0
        %1622 = vmatpush.xpose.msra.mxu0 0.0
        %1623 = vmatpush.xpose.msra.mxu0 0.0
        %1624 = vmatpush.xpose.msra.mxu0 0.0
        %1625 = vmatpush.xpose.msra.mxu0 0.0
        %1626 = vmatpush.xpose.msra.mxu0 0.0
        %1627 = vmatpush.xpose.msra.mxu0 0.0
        %1628 = vmatpush.xpose.msra.mxu0 0.0
        %1629 = vmatpush.xpose.msra.mxu0 0.0
        %1630 = vmatpush.xpose.msra.mxu0 0.0
        %1631 = vmatpush.xpose.msra.mxu0 0.0
        %1632 = vmatpush.xpose.msra.mxu0 0.0
        %1633 = vmatpush.xpose.msra.mxu0 0.0
        %1634 = vmatpush.xpose.msra.mxu0 0.0
        %1635 = vmatpush.xpose.msra.mxu0 0.0
        %v1636 = vand.u32 %v1519, 4294901760
        %v1637 = vsub.f32 %v1519, %v1636
        %v1638 = vand.u32 %v1637, 4294901760
        %1639 = vmatpush.xpose.msra.mxu0 %v1638
        %v1640 = vand.u32 %v1517, 4294901760
        %1641 = vmatmul.f32.gmra.mxu0 %v1640
        %v1642 = vpop.f32.mrf.mxu0
        %v1643 = vadd.f32 %v1619, %v1642
        %1644 = vdwg.mxu0
        %1645 = vmatpush.xpose.msra.mxu0 0.0
        %1646 = vmatpush.xpose.msra.mxu0 0.0
        %1647 = vmatpush.xpose.msra.mxu0 0.0
        %1648 = vmatpush.xpose.msra.mxu0 0.0
        %1649 = vmatpush.xpose.msra.mxu0 0.0
        %1650 = vmatpush.xpose.msra.mxu0 0.0
        %1651 = vmatpush.xpose.msra.mxu0 0.0
        %1652 = vmatpush.xpose.msra.mxu0 0.0
        %1653 = vmatpush.xpose.msra.mxu0 0.0
        %1654 = vmatpush.xpose.msra.mxu0 0.0
        %1655 = vmatpush.xpose.msra.mxu0 0.0
        %1656 = vmatpush.xpose.msra.mxu0 0.0
        %1657 = vmatpush.xpose.msra.mxu0 0.0
        %1658 = vmatpush.xpose.msra.mxu0 0.0
        %1659 = vmatpush.xpose.msra.mxu0 0.0
        %v1660 = vand.u32 %v1519, 4294901760
        %1661 = vmatpush.xpose.msra.mxu0 %v1660
        %v1662 = vand.u32 %v1517, 4294901760
        %1663 = vmatmul.f32.gmra.mxu0 %v1662
        %v1664 = vpop.f32.mrf.mxu0
        %v1665 = vadd.f32 %v1643, %v1664
        %1666 = vdwg.mxu0
        %v1667 = vsel %vm1350, %v1665, -inf
        %1668 = vmax.xlane.f32.xlu0 %v1667
        %v1669 = vpop.xlane.xlu0 %1668
        %v1670 = vsub.f32 %v1665, %v1669
        %v1671 = vmul.f32 %v1670, 1.442695
        %v1672 = vpow.pop %v1671
        %v1673 = vsel %vm1350, %v1672, 0.0
        %1674 = vadd.xlane.f32.xlu0 %v1673
        %v1675 = vpop.xlane.xlu0 %1674
        %v1676 = vrcp.pop %v1675
        %v1677 = vmul.f32 %v1672, %v1676
        %1679 = vrot.lane.b32.xlu0 %v1191, 96
        %v1680 = vpop.permute.xlu0 %1679
        %v1683 = vsel %vm1362, %v1677, 0
        %1685 = vmatpush.msra.mxu0 0.0
        %1686 = vmatpush.msra.mxu0 0.0
        %1687 = vmatpush.msra.mxu0 0.0
        %1688 = vmatpush.msra.mxu0 0.0
        %1689 = vmatpush.msra.mxu0 0.0
        %1690 = vmatpush.msra.mxu0 0.0
        %1691 = vmatpush.msra.mxu0 0.0
        %1692 = vmatpush.msra.mxu0 0.0
        %1693 = vmatpush.msra.mxu0 0.0
        %1694 = vmatpush.msra.mxu0 0.0
        %1695 = vmatpush.msra.mxu0 0.0
        %1696 = vmatpush.msra.mxu0 0.0
        %1697 = vmatpush.msra.mxu0 0.0
        %1698 = vmatpush.msra.mxu0 0.0
        %1699 = vmatpush.msra.mxu0 0.0
        %v1700 = vand.u32 %v1680, 4294901760
        %1701 = vmatpush.msra.mxu0 %v1700
        %v1702 = vand.u32 %v1683, 4294901760
        %v1703 = vsub.f32 %v1683, %v1702
        %v1704 = vand.u32 %v1703, 4294901760
        %v1705 = vsub.f32 %v1703, %v1704
        %v1706 = vand.u32 %v1705, 4294901760
        %1707 = vmatmul.f32.gmra.mxu0 %v1706
        %v1708 = vpop.f32.mrf.mxu0
        %v1709 = vadd.f32 0.0, %v1708
        %1710 = vdwg.mxu0
        %1711 = vmatpush.msra.mxu0 0.0
        %1712 = vmatpush.msra.mxu0 0.0
        %1713 = vmatpush.msra.mxu0 0.0
        %1714 = vmatpush.msra.mxu0 0.0
        %1715 = vmatpush.msra.mxu0 0.0
        %1716 = vmatpush.msra.mxu0 0.0
        %1717 = vmatpush.msra.mxu0 0.0
        %1718 = vmatpush.msra.mxu0 0.0
        %1719 = vmatpush.msra.mxu0 0.0
        %1720 = vmatpush.msra.mxu0 0.0
        %1721 = vmatpush.msra.mxu0 0.0
        %1722 = vmatpush.msra.mxu0 0.0
        %1723 = vmatpush.msra.mxu0 0.0
        %1724 = vmatpush.msra.mxu0 0.0
        %1725 = vmatpush.msra.mxu0 0.0
        %v1726 = vand.u32 %v1680, 4294901760
        %v1727 = vsub.f32 %v1680, %v1726
        %v1728 = vand.u32 %v1727, 4294901760
        %v1729 = vsub.f32 %v1727, %v1728
        %v1730 = vand.u32 %v1729, 4294901760
        %1731 = vmatpush.msra.mxu0 %v1730
        %v1732 = vand.u32 %v1683, 4294901760
        %1733 = vmatmul.f32.gmra.mxu0 %v1732
        %v1734 = vpop.f32.mrf.mxu0
        %v1735 = vadd.f32 %v1709, %v1734
        %1736 = vdwg.mxu0
        %1737 = vmatpush.msra.mxu0 0.0
        %1738 = vmatpush.msra.mxu0 0.0
        %1739 = vmatpush.msra.mxu0 0.0
        %1740 = vmatpush.msra.mxu0 0.0
        %1741 = vmatpush.msra.mxu0 0.0
        %1742 = vmatpush.msra.mxu0 0.0
        %1743 = vmatpush.msra.mxu0 0.0
        %1744 = vmatpush.msra.mxu0 0.0
        %1745 = vmatpush.msra.mxu0 0.0
        %1746 = vmatpush.msra.mxu0 0.0
        %1747 = vmatpush.msra.mxu0 0.0
        %1748 = vmatpush.msra.mxu0 0.0
        %1749 = vmatpush.msra.mxu0 0.0
        %1750 = vmatpush.msra.mxu0 0.0
        %1751 = vmatpush.msra.mxu0 0.0
        %v1752 = vand.u32 %v1680, 4294901760
        %v1753 = vsub.f32 %v1680, %v1752
        %1754 = vmatpush.msra.mxu0 %v1753
        %v1755 = vand.u32 %v1683, 4294901760
        %v1756 = vsub.f32 %v1683, %v1755
        %1757 = vmatmul.f32.gmra.mxu0 %v1756
        %v1758 = vpop.f32.mrf.mxu0
        %v1759 = vadd.f32 %v1735, %v1758
        %1760 = vdwg.mxu0
        %1761 = vmatpush.msra.mxu0 0.0
        %1762 = vmatpush.msra.mxu0 0.0
        %1763 = vmatpush.msra.mxu0 0.0
        %1764 = vmatpush.msra.mxu0 0.0
        %1765 = vmatpush.msra.mxu0 0.0
        %1766 = vmatpush.msra.mxu0 0.0
        %1767 = vmatpush.msra.mxu0 0.0
        %1768 = vmatpush.msra.mxu0 0.0
        %1769 = vmatpush.msra.mxu0 0.0
        %1770 = vmatpush.msra.mxu0 0.0
        %1771 = vmatpush.msra.mxu0 0.0
        %1772 = vmatpush.msra.mxu0 0.0
        %1773 = vmatpush.msra.mxu0 0.0
        %1774 = vmatpush.msra.mxu0 0.0
        %1775 = vmatpush.msra.mxu0 0.0
        %v1776 = vand.u32 %v1680, 4294901760
        %1777 = vmatpush.msra.mxu0 %v1776
        %v1778 = vand.u32 %v1683, 4294901760
        %v1779 = vsub.f32 %v1683, %v1778
        %v1780 = vand.u32 %v1779, 4294901760
        %1781 = vmatmul.f32.gmra.mxu0 %v1780
        %v1782 = vpop.f32.mrf.mxu0
        %v1783 = vadd.f32 %v1759, %v1782
        %1784 = vdwg.mxu0
        %1785 = vmatpush.msra.mxu0 0.0
        %1786 = vmatpush.msra.mxu0 0.0
        %1787 = vmatpush.msra.mxu0 0.0
        %1788 = vmatpush.msra.mxu0 0.0
        %1789 = vmatpush.msra.mxu0 0.0
        %1790 = vmatpush.msra.mxu0 0.0
        %1791 = vmatpush.msra.mxu0 0.0
        %1792 = vmatpush.msra.mxu0 0.0
        %1793 = vmatpush.msra.mxu0 0.0
        %1794 = vmatpush.msra.mxu0 0.0
        %1795 = vmatpush.msra.mxu0 0.0
        %1796 = vmatpush.msra.mxu0 0.0
        %1797 = vmatpush.msra.mxu0 0.0
        %1798 = vmatpush.msra.mxu0 0.0
        %1799 = vmatpush.msra.mxu0 0.0
        %v1800 = vand.u32 %v1680, 4294901760
        %v1801 = vsub.f32 %v1680, %v1800
        %v1802 = vand.u32 %v1801, 4294901760
        %1803 = vmatpush.msra.mxu0 %v1802
        %v1804 = vand.u32 %v1683, 4294901760
        %1805 = vmatmul.f32.gmra.mxu0 %v1804
        %v1806 = vpop.f32.mrf.mxu0
        %v1807 = vadd.f32 %v1783, %v1806
        %1808 = vdwg.mxu0
        %1809 = vmatpush.msra.mxu0 0.0
        %1810 = vmatpush.msra.mxu0 0.0
        %1811 = vmatpush.msra.mxu0 0.0
        %1812 = vmatpush.msra.mxu0 0.0
        %1813 = vmatpush.msra.mxu0 0.0
        %1814 = vmatpush.msra.mxu0 0.0
        %1815 = vmatpush.msra.mxu0 0.0
        %1816 = vmatpush.msra.mxu0 0.0
        %1817 = vmatpush.msra.mxu0 0.0
        %1818 = vmatpush.msra.mxu0 0.0
        %1819 = vmatpush.msra.mxu0 0.0
        %1820 = vmatpush.msra.mxu0 0.0
        %1821 = vmatpush.msra.mxu0 0.0
        %1822 = vmatpush.msra.mxu0 0.0
        %1823 = vmatpush.msra.mxu0 0.0
        %v1824 = vand.u32 %v1680, 4294901760
        %1825 = vmatpush.msra.mxu0 %v1824
        %v1826 = vand.u32 %v1683, 4294901760
        %1827 = vmatmul.f32.gmra.mxu0 %v1826
        %v1828 = vpop.f32.mrf.mxu0
        %v1829 = vadd.f32 %v1807, %v1828
        %1830 = vdwg.mxu0
        %1832 = vrot.lane.b32.xlu0 %v1829, 32
        %v1833 = vpop.permute.xlu0 %1832
        %v1835 = vadd.f32 %v586, %v1833
        %1836 = vrot.lane.b32.xlu0 %v588, 64
        %v1837 = vpop.permute.xlu0 %1836
        %1838 = vrot.lane.b32.xlu0 %v915, 64
        %v1839 = vpop.permute.xlu0 %1838
        %v1840 = vsel %vm1197, %v1837, 0
        %v1842 = vsel %vm1197, %v1839, 0
        %1844 = vmatpush.xpose.msra.mxu0 0.0
        %1845 = vmatpush.xpose.msra.mxu0 0.0
        %1846 = vmatpush.xpose.msra.mxu0 0.0
        %1847 = vmatpush.xpose.msra.mxu0 0.0
        %1848 = vmatpush.xpose.msra.mxu0 0.0
        %1849 = vmatpush.xpose.msra.mxu0 0.0
        %1850 = vmatpush.xpose.msra.mxu0 0.0
        %1851 = vmatpush.xpose.msra.mxu0 0.0
        %1852 = vmatpush.xpose.msra.mxu0 0.0
        %1853 = vmatpush.xpose.msra.mxu0 0.0
        %1854 = vmatpush.xpose.msra.mxu0 0.0
        %1855 = vmatpush.xpose.msra.mxu0 0.0
        %1856 = vmatpush.xpose.msra.mxu0 0.0
        %1857 = vmatpush.xpose.msra.mxu0 0.0
        %1858 = vmatpush.xpose.msra.mxu0 0.0
        %v1859 = vand.u32 %v1842, 4294901760
        %1860 = vmatpush.xpose.msra.mxu0 %v1859
        %v1861 = vand.u32 %v1840, 4294901760
        %v1862 = vsub.f32 %v1840, %v1861
        %v1863 = vand.u32 %v1862, 4294901760
        %v1864 = vsub.f32 %v1862, %v1863
        %v1865 = vand.u32 %v1864, 4294901760
        %1866 = vmatmul.f32.gmra.mxu0 %v1865
        %v1867 = vpop.f32.mrf.mxu0
        %v1868 = vadd.f32 0.0, %v1867
        %1869 = vdwg.mxu0
        %1870 = vmatpush.xpose.msra.mxu0 0.0
        %1871 = vmatpush.xpose.msra.mxu0 0.0
        %1872 = vmatpush.xpose.msra.mxu0 0.0
        %1873 = vmatpush.xpose.msra.mxu0 0.0
        %1874 = vmatpush.xpose.msra.mxu0 0.0
        %1875 = vmatpush.xpose.msra.mxu0 0.0
        %1876 = vmatpush.xpose.msra.mxu0 0.0
        %1877 = vmatpush.xpose.msra.mxu0 0.0
        %1878 = vmatpush.xpose.msra.mxu0 0.0
        %1879 = vmatpush.xpose.msra.mxu0 0.0
        %1880 = vmatpush.xpose.msra.mxu0 0.0
        %1881 = vmatpush.xpose.msra.mxu0 0.0
        %1882 = vmatpush.xpose.msra.mxu0 0.0
        %1883 = vmatpush.xpose.msra.mxu0 0.0
        %1884 = vmatpush.xpose.msra.mxu0 0.0
        %v1885 = vand.u32 %v1842, 4294901760
        %v1886 = vsub.f32 %v1842, %v1885
        %v1887 = vand.u32 %v1886, 4294901760
        %v1888 = vsub.f32 %v1886, %v1887
        %v1889 = vand.u32 %v1888, 4294901760
        %1890 = vmatpush.xpose.msra.mxu0 %v1889
        %v1891 = vand.u32 %v1840, 4294901760
        %1892 = vmatmul.f32.gmra.mxu0 %v1891
        %v1893 = vpop.f32.mrf.mxu0
        %v1894 = vadd.f32 %v1868, %v1893
        %1895 = vdwg.mxu0
        %1896 = vmatpush.xpose.msra.mxu0 0.0
        %1897 = vmatpush.xpose.msra.mxu0 0.0
        %1898 = vmatpush.xpose.msra.mxu0 0.0
        %1899 = vmatpush.xpose.msra.mxu0 0.0
        %1900 = vmatpush.xpose.msra.mxu0 0.0
        %1901 = vmatpush.xpose.msra.mxu0 0.0
        %1902 = vmatpush.xpose.msra.mxu0 0.0
        %1903 = vmatpush.xpose.msra.mxu0 0.0
        %1904 = vmatpush.xpose.msra.mxu0 0.0
        %1905 = vmatpush.xpose.msra.mxu0 0.0
        %1906 = vmatpush.xpose.msra.mxu0 0.0
        %1907 = vmatpush.xpose.msra.mxu0 0.0
        %1908 = vmatpush.xpose.msra.mxu0 0.0
        %1909 = vmatpush.xpose.msra.mxu0 0.0
        %1910 = vmatpush.xpose.msra.mxu0 0.0
        %v1911 = vand.u32 %v1842, 4294901760
        %v1912 = vsub.f32 %v1842, %v1911
        %1913 = vmatpush.xpose.msra.mxu0 %v1912
        %v1914 = vand.u32 %v1840, 4294901760
        %v1915 = vsub.f32 %v1840, %v1914
        %1916 = vmatmul.f32.gmra.mxu0 %v1915
        %v1917 = vpop.f32.mrf.mxu0
        %v1918 = vadd.f32 %v1894, %v1917
        %1919 = vdwg.mxu0
        %1920 = vmatpush.xpose.msra.mxu0 0.0
        %1921 = vmatpush.xpose.msra.mxu0 0.0
        %1922 = vmatpush.xpose.msra.mxu0 0.0
        %1923 = vmatpush.xpose.msra.mxu0 0.0
        %1924 = vmatpush.xpose.msra.mxu0 0.0
        %1925 = vmatpush.xpose.msra.mxu0 0.0
        %1926 = vmatpush.xpose.msra.mxu0 0.0
        %1927 = vmatpush.xpose.msra.mxu0 0.0
        %1928 = vmatpush.xpose.msra.mxu0 0.0
        %1929 = vmatpush.xpose.msra.mxu0 0.0
        %1930 = vmatpush.xpose.msra.mxu0 0.0
        %1931 = vmatpush.xpose.msra.mxu0 0.0
        %1932 = vmatpush.xpose.msra.mxu0 0.0
        %1933 = vmatpush.xpose.msra.mxu0 0.0
        %1934 = vmatpush.xpose.msra.mxu0 0.0
        %v1935 = vand.u32 %v1842, 4294901760
        %1936 = vmatpush.xpose.msra.mxu0 %v1935
        %v1937 = vand.u32 %v1840, 4294901760
        %v1938 = vsub.f32 %v1840, %v1937
        %v1939 = vand.u32 %v1938, 4294901760
        %1940 = vmatmul.f32.gmra.mxu0 %v1939
        %v1941 = vpop.f32.mrf.mxu0
        %v1942 = vadd.f32 %v1918, %v1941
        %1943 = vdwg.mxu0
        %1944 = vmatpush.xpose.msra.mxu0 0.0
        %1945 = vmatpush.xpose.msra.mxu0 0.0
        %1946 = vmatpush.xpose.msra.mxu0 0.0
        %1947 = vmatpush.xpose.msra.mxu0 0.0
        %1948 = vmatpush.xpose.msra.mxu0 0.0
        %1949 = vmatpush.xpose.msra.mxu0 0.0
        %1950 = vmatpush.xpose.msra.mxu0 0.0
        %1951 = vmatpush.xpose.msra.mxu0 0.0
        %1952 = vmatpush.xpose.msra.mxu0 0.0
        %1953 = vmatpush.xpose.msra.mxu0 0.0
        %1954 = vmatpush.xpose.msra.mxu0 0.0
        %1955 = vmatpush.xpose.msra.mxu0 0.0
        %1956 = vmatpush.xpose.msra.mxu0 0.0
        %1957 = vmatpush.xpose.msra.mxu0 0.0
        %1958 = vmatpush.xpose.msra.mxu0 0.0
        %v1959 = vand.u32 %v1842, 4294901760
        %v1960 = vsub.f32 %v1842, %v1959
        %v1961 = vand.u32 %v1960, 4294901760
        %1962 = vmatpush.xpose.msra.mxu0 %v1961
        %v1963 = vand.u32 %v1840, 4294901760
        %1964 = vmatmul.f32.gmra.mxu0 %v1963
        %v1965 = vpop.f32.mrf.mxu0
        %v1966 = vadd.f32 %v1942, %v1965
        %1967 = vdwg.mxu0
        %1968 = vmatpush.xpose.msra.mxu0 0.0
        %1969 = vmatpush.xpose.msra.mxu0 0.0
        %1970 = vmatpush.xpose.msra.mxu0 0.0
        %1971 = vmatpush.xpose.msra.mxu0 0.0
        %1972 = vmatpush.xpose.msra.mxu0 0.0
        %1973 = vmatpush.xpose.msra.mxu0 0.0
        %1974 = vmatpush.xpose.msra.mxu0 0.0
        %1975 = vmatpush.xpose.msra.mxu0 0.0
        %1976 = vmatpush.xpose.msra.mxu0 0.0
        %1977 = vmatpush.xpose.msra.mxu0 0.0
        %1978 = vmatpush.xpose.msra.mxu0 0.0
        %1979 = vmatpush.xpose.msra.mxu0 0.0
        %1980 = vmatpush.xpose.msra.mxu0 0.0
        %1981 = vmatpush.xpose.msra.mxu0 0.0
        %1982 = vmatpush.xpose.msra.mxu0 0.0
        %v1983 = vand.u32 %v1842, 4294901760
        %1984 = vmatpush.xpose.msra.mxu0 %v1983
        %v1985 = vand.u32 %v1840, 4294901760
        %1986 = vmatmul.f32.gmra.mxu0 %v1985
        %v1987 = vpop.f32.mrf.mxu0
        %v1988 = vadd.f32 %v1966, %v1987
        %1989 = vdwg.mxu0
        %v1990 = vsel %vm1350, %v1988, -inf
        %1991 = vmax.xlane.f32.xlu0 %v1990
        %v1992 = vpop.xlane.xlu0 %1991
        %v1993 = vsub.f32 %v1988, %v1992
        %v1994 = vmul.f32 %v1993, 1.442695
        %v1995 = vpow.pop %v1994
        %v1996 = vsel %vm1350, %v1995, 0.0
        %1997 = vadd.xlane.f32.xlu0 %v1996
        %v1998 = vpop.xlane.xlu0 %1997
        %v1999 = vrcp.pop %v1998
        %v2000 = vmul.f32 %v1995, %v1999
        %2001 = vrot.lane.b32.xlu0 %v1191, 64
        %v2002 = vpop.permute.xlu0 %2001
        %v2005 = vsel %vm1362, %v2000, 0
        %2007 = vmatpush.msra.mxu0 0.0
        %2008 = vmatpush.msra.mxu0 0.0
        %2009 = vmatpush.msra.mxu0 0.0
        %2010 = vmatpush.msra.mxu0 0.0
        %2011 = vmatpush.msra.mxu0 0.0
        %2012 = vmatpush.msra.mxu0 0.0
        %2013 = vmatpush.msra.mxu0 0.0
        %2014 = vmatpush.msra.mxu0 0.0
        %2015 = vmatpush.msra.mxu0 0.0
        %2016 = vmatpush.msra.mxu0 0.0
        %2017 = vmatpush.msra.mxu0 0.0
        %2018 = vmatpush.msra.mxu0 0.0
        %2019 = vmatpush.msra.mxu0 0.0
        %2020 = vmatpush.msra.mxu0 0.0
        %2021 = vmatpush.msra.mxu0 0.0
        %v2022 = vand.u32 %v2002, 4294901760
        %2023 = vmatpush.msra.mxu0 %v2022
        %v2024 = vand.u32 %v2005, 4294901760
        %v2025 = vsub.f32 %v2005, %v2024
        %v2026 = vand.u32 %v2025, 4294901760
        %v2027 = vsub.f32 %v2025, %v2026
        %v2028 = vand.u32 %v2027, 4294901760
        %2029 = vmatmul.f32.gmra.mxu0 %v2028
        %v2030 = vpop.f32.mrf.mxu0
        %v2031 = vadd.f32 0.0, %v2030
        %2032 = vdwg.mxu0
        %2033 = vmatpush.msra.mxu0 0.0
        %2034 = vmatpush.msra.mxu0 0.0
        %2035 = vmatpush.msra.mxu0 0.0
        %2036 = vmatpush.msra.mxu0 0.0
        %2037 = vmatpush.msra.mxu0 0.0
        %2038 = vmatpush.msra.mxu0 0.0
        %2039 = vmatpush.msra.mxu0 0.0
        %2040 = vmatpush.msra.mxu0 0.0
        %2041 = vmatpush.msra.mxu0 0.0
        %2042 = vmatpush.msra.mxu0 0.0
        %2043 = vmatpush.msra.mxu0 0.0
        %2044 = vmatpush.msra.mxu0 0.0
        %2045 = vmatpush.msra.mxu0 0.0
        %2046 = vmatpush.msra.mxu0 0.0
        %2047 = vmatpush.msra.mxu0 0.0
        %v2048 = vand.u32 %v2002, 4294901760
        %v2049 = vsub.f32 %v2002, %v2048
        %v2050 = vand.u32 %v2049, 4294901760
        %v2051 = vsub.f32 %v2049, %v2050
        %v2052 = vand.u32 %v2051, 4294901760
        %2053 = vmatpush.msra.mxu0 %v2052
        %v2054 = vand.u32 %v2005, 4294901760
        %2055 = vmatmul.f32.gmra.mxu0 %v2054
        %v2056 = vpop.f32.mrf.mxu0
        %v2057 = vadd.f32 %v2031, %v2056
        %2058 = vdwg.mxu0
        %2059 = vmatpush.msra.mxu0 0.0
        %2060 = vmatpush.msra.mxu0 0.0
        %2061 = vmatpush.msra.mxu0 0.0
        %2062 = vmatpush.msra.mxu0 0.0
        %2063 = vmatpush.msra.mxu0 0.0
        %2064 = vmatpush.msra.mxu0 0.0
        %2065 = vmatpush.msra.mxu0 0.0
        %2066 = vmatpush.msra.mxu0 0.0
        %2067 = vmatpush.msra.mxu0 0.0
        %2068 = vmatpush.msra.mxu0 0.0
        %2069 = vmatpush.msra.mxu0 0.0
        %2070 = vmatpush.msra.mxu0 0.0
        %2071 = vmatpush.msra.mxu0 0.0
        %2072 = vmatpush.msra.mxu0 0.0
        %2073 = vmatpush.msra.mxu0 0.0
        %v2074 = vand.u32 %v2002, 4294901760
        %v2075 = vsub.f32 %v2002, %v2074
        %2076 = vmatpush.msra.mxu0 %v2075
        %v2077 = vand.u32 %v2005, 4294901760
        %v2078 = vsub.f32 %v2005, %v2077
        %2079 = vmatmul.f32.gmra.mxu0 %v2078
        %v2080 = vpop.f32.mrf.mxu0
        %v2081 = vadd.f32 %v2057, %v2080
        %2082 = vdwg.mxu0
        %2083 = vmatpush.msra.mxu0 0.0
        %2084 = vmatpush.msra.mxu0 0.0
        %2085 = vmatpush.msra.mxu0 0.0
        %2086 = vmatpush.msra.mxu0 0.0
        %2087 = vmatpush.msra.mxu0 0.0
        %2088 = vmatpush.msra.mxu0 0.0
        %2089 = vmatpush.msra.mxu0 0.0
        %2090 = vmatpush.msra.mxu0 0.0
        %2091 = vmatpush.msra.mxu0 0.0
        %2092 = vmatpush.msra.mxu0 0.0
        %2093 = vmatpush.msra.mxu0 0.0
        %2094 = vmatpush.msra.mxu0 0.0
        %2095 = vmatpush.msra.mxu0 0.0
        %2096 = vmatpush.msra.mxu0 0.0
        %2097 = vmatpush.msra.mxu0 0.0
        %v2098 = vand.u32 %v2002, 4294901760
        %2099 = vmatpush.msra.mxu0 %v2098
        %v2100 = vand.u32 %v2005, 4294901760
        %v2101 = vsub.f32 %v2005, %v2100
        %v2102 = vand.u32 %v2101, 4294901760
        %2103 = vmatmul.f32.gmra.mxu0 %v2102
        %v2104 = vpop.f32.mrf.mxu0
        %v2105 = vadd.f32 %v2081, %v2104
        %2106 = vdwg.mxu0
        %2107 = vmatpush.msra.mxu0 0.0
        %2108 = vmatpush.msra.mxu0 0.0
        %2109 = vmatpush.msra.mxu0 0.0
        %2110 = vmatpush.msra.mxu0 0.0
        %2111 = vmatpush.msra.mxu0 0.0
        %2112 = vmatpush.msra.mxu0 0.0
        %2113 = vmatpush.msra.mxu0 0.0
        %2114 = vmatpush.msra.mxu0 0.0
        %2115 = vmatpush.msra.mxu0 0.0
        %2116 = vmatpush.msra.mxu0 0.0
        %2117 = vmatpush.msra.mxu0 0.0
        %2118 = vmatpush.msra.mxu0 0.0
        %2119 = vmatpush.msra.mxu0 0.0
        %2120 = vmatpush.msra.mxu0 0.0
        %2121 = vmatpush.msra.mxu0 0.0
        %v2122 = vand.u32 %v2002, 4294901760
        %v2123 = vsub.f32 %v2002, %v2122
        %v2124 = vand.u32 %v2123, 4294901760
        %2125 = vmatpush.msra.mxu0 %v2124
        %v2126 = vand.u32 %v2005, 4294901760
        %2127 = vmatmul.f32.gmra.mxu0 %v2126
        %v2128 = vpop.f32.mrf.mxu0
        %v2129 = vadd.f32 %v2105, %v2128
        %2130 = vdwg.mxu0
        %2131 = vmatpush.msra.mxu0 0.0
        %2132 = vmatpush.msra.mxu0 0.0
        %2133 = vmatpush.msra.mxu0 0.0
        %2134 = vmatpush.msra.mxu0 0.0
        %2135 = vmatpush.msra.mxu0 0.0
        %2136 = vmatpush.msra.mxu0 0.0
        %2137 = vmatpush.msra.mxu0 0.0
        %2138 = vmatpush.msra.mxu0 0.0
        %2139 = vmatpush.msra.mxu0 0.0
        %2140 = vmatpush.msra.mxu0 0.0
        %2141 = vmatpush.msra.mxu0 0.0
        %2142 = vmatpush.msra.mxu0 0.0
        %2143 = vmatpush.msra.mxu0 0.0
        %2144 = vmatpush.msra.mxu0 0.0
        %2145 = vmatpush.msra.mxu0 0.0
        %v2146 = vand.u32 %v2002, 4294901760
        %2147 = vmatpush.msra.mxu0 %v2146
        %v2148 = vand.u32 %v2005, 4294901760
        %2149 = vmatmul.f32.gmra.mxu0 %v2148
        %v2150 = vpop.f32.mrf.mxu0
        %v2151 = vadd.f32 %v2129, %v2150
        %2152 = vdwg.mxu0
        %2154 = vrot.lane.b32.xlu0 %v2151, 64
        %v2155 = vpop.permute.xlu0 %2154
        %v2157 = vadd.f32 %v586, %v2155
        %2158 = vrot.lane.b32.xlu0 %v588, 32
        %v2159 = vpop.permute.xlu0 %2158
        %2160 = vrot.lane.b32.xlu0 %v915, 32
        %v2161 = vpop.permute.xlu0 %2160
        %v2162 = vsel %vm1197, %v2159, 0
        %v2164 = vsel %vm1197, %v2161, 0
        %2166 = vmatpush.xpose.msra.mxu0 0.0
        %2167 = vmatpush.xpose.msra.mxu0 0.0
        %2168 = vmatpush.xpose.msra.mxu0 0.0
        %2169 = vmatpush.xpose.msra.mxu0 0.0
        %2170 = vmatpush.xpose.msra.mxu0 0.0
        %2171 = vmatpush.xpose.msra.mxu0 0.0
        %2172 = vmatpush.xpose.msra.mxu0 0.0
        %2173 = vmatpush.xpose.msra.mxu0 0.0
        %2174 = vmatpush.xpose.msra.mxu0 0.0
        %2175 = vmatpush.xpose.msra.mxu0 0.0
        %2176 = vmatpush.xpose.msra.mxu0 0.0
        %2177 = vmatpush.xpose.msra.mxu0 0.0
        %2178 = vmatpush.xpose.msra.mxu0 0.0
        %2179 = vmatpush.xpose.msra.mxu0 0.0
        %2180 = vmatpush.xpose.msra.mxu0 0.0
        %v2181 = vand.u32 %v2164, 4294901760
        %2182 = vmatpush.xpose.msra.mxu0 %v2181
        %v2183 = vand.u32 %v2162, 4294901760
        %v2184 = vsub.f32 %v2162, %v2183
        %v2185 = vand.u32 %v2184, 4294901760
        %v2186 = vsub.f32 %v2184, %v2185
        %v2187 = vand.u32 %v2186, 4294901760
        %2188 = vmatmul.f32.gmra.mxu0 %v2187
        %v2189 = vpop.f32.mrf.mxu0
        %v2190 = vadd.f32 0.0, %v2189
        %2191 = vdwg.mxu0
        %2192 = vmatpush.xpose.msra.mxu0 0.0
        %2193 = vmatpush.xpose.msra.mxu0 0.0
        %2194 = vmatpush.xpose.msra.mxu0 0.0
        %2195 = vmatpush.xpose.msra.mxu0 0.0
        %2196 = vmatpush.xpose.msra.mxu0 0.0
        %2197 = vmatpush.xpose.msra.mxu0 0.0
        %2198 = vmatpush.xpose.msra.mxu0 0.0
        %2199 = vmatpush.xpose.msra.mxu0 0.0
        %2200 = vmatpush.xpose.msra.mxu0 0.0
        %2201 = vmatpush.xpose.msra.mxu0 0.0
        %2202 = vmatpush.xpose.msra.mxu0 0.0
        %2203 = vmatpush.xpose.msra.mxu0 0.0
        %2204 = vmatpush.xpose.msra.mxu0 0.0
        %2205 = vmatpush.xpose.msra.mxu0 0.0
        %2206 = vmatpush.xpose.msra.mxu0 0.0
        %v2207 = vand.u32 %v2164, 4294901760
        %v2208 = vsub.f32 %v2164, %v2207
        %v2209 = vand.u32 %v2208, 4294901760
        %v2210 = vsub.f32 %v2208, %v2209
        %v2211 = vand.u32 %v2210, 4294901760
        %2212 = vmatpush.xpose.msra.mxu0 %v2211
        %v2213 = vand.u32 %v2162, 4294901760
        %2214 = vmatmul.f32.gmra.mxu0 %v2213
        %v2215 = vpop.f32.mrf.mxu0
        %v2216 = vadd.f32 %v2190, %v2215
        %2217 = vdwg.mxu0
        %2218 = vmatpush.xpose.msra.mxu0 0.0
        %2219 = vmatpush.xpose.msra.mxu0 0.0
        %2220 = vmatpush.xpose.msra.mxu0 0.0
        %2221 = vmatpush.xpose.msra.mxu0 0.0
        %2222 = vmatpush.xpose.msra.mxu0 0.0
        %2223 = vmatpush.xpose.msra.mxu0 0.0
        %2224 = vmatpush.xpose.msra.mxu0 0.0
        %2225 = vmatpush.xpose.msra.mxu0 0.0
        %2226 = vmatpush.xpose.msra.mxu0 0.0
        %2227 = vmatpush.xpose.msra.mxu0 0.0
        %2228 = vmatpush.xpose.msra.mxu0 0.0
        %2229 = vmatpush.xpose.msra.mxu0 0.0
        %2230 = vmatpush.xpose.msra.mxu0 0.0
        %2231 = vmatpush.xpose.msra.mxu0 0.0
        %2232 = vmatpush.xpose.msra.mxu0 0.0
        %v2233 = vand.u32 %v2164, 4294901760
        %v2234 = vsub.f32 %v2164, %v2233
        %2235 = vmatpush.xpose.msra.mxu0 %v2234
        %v2236 = vand.u32 %v2162, 4294901760
        %v2237 = vsub.f32 %v2162, %v2236
        %2238 = vmatmul.f32.gmra.mxu0 %v2237
        %v2239 = vpop.f32.mrf.mxu0
        %v2240 = vadd.f32 %v2216, %v2239
        %2241 = vdwg.mxu0
        %2242 = vmatpush.xpose.msra.mxu0 0.0
        %2243 = vmatpush.xpose.msra.mxu0 0.0
        %2244 = vmatpush.xpose.msra.mxu0 0.0
        %2245 = vmatpush.xpose.msra.mxu0 0.0
        %2246 = vmatpush.xpose.msra.mxu0 0.0
        %2247 = vmatpush.xpose.msra.mxu0 0.0
        %2248 = vmatpush.xpose.msra.mxu0 0.0
        %2249 = vmatpush.xpose.msra.mxu0 0.0
        %2250 = vmatpush.xpose.msra.mxu0 0.0
        %2251 = vmatpush.xpose.msra.mxu0 0.0
        %2252 = vmatpush.xpose.msra.mxu0 0.0
        %2253 = vmatpush.xpose.msra.mxu0 0.0
        %2254 = vmatpush.xpose.msra.mxu0 0.0
        %2255 = vmatpush.xpose.msra.mxu0 0.0
        %2256 = vmatpush.xpose.msra.mxu0 0.0
        %v2257 = vand.u32 %v2164, 4294901760
        %2258 = vmatpush.xpose.msra.mxu0 %v2257
        %v2259 = vand.u32 %v2162, 4294901760
        %v2260 = vsub.f32 %v2162, %v2259
        %v2261 = vand.u32 %v2260, 4294901760
        %2262 = vmatmul.f32.gmra.mxu0 %v2261
        %v2263 = vpop.f32.mrf.mxu0
        %v2264 = vadd.f32 %v2240, %v2263
        %2265 = vdwg.mxu0
        %2266 = vmatpush.xpose.msra.mxu0 0.0
        %2267 = vmatpush.xpose.msra.mxu0 0.0
        %2268 = vmatpush.xpose.msra.mxu0 0.0
        %2269 = vmatpush.xpose.msra.mxu0 0.0
        %2270 = vmatpush.xpose.msra.mxu0 0.0
        %2271 = vmatpush.xpose.msra.mxu0 0.0
        %2272 = vmatpush.xpose.msra.mxu0 0.0
        %2273 = vmatpush.xpose.msra.mxu0 0.0
        %2274 = vmatpush.xpose.msra.mxu0 0.0
        %2275 = vmatpush.xpose.msra.mxu0 0.0
        %2276 = vmatpush.xpose.msra.mxu0 0.0
        %2277 = vmatpush.xpose.msra.mxu0 0.0
        %2278 = vmatpush.xpose.msra.mxu0 0.0
        %2279 = vmatpush.xpose.msra.mxu0 0.0
        %2280 = vmatpush.xpose.msra.mxu0 0.0
        %v2281 = vand.u32 %v2164, 4294901760
        %v2282 = vsub.f32 %v2164, %v2281
        %v2283 = vand.u32 %v2282, 4294901760
        %2284 = vmatpush.xpose.msra.mxu0 %v2283
        %v2285 = vand.u32 %v2162, 4294901760
        %2286 = vmatmul.f32.gmra.mxu0 %v2285
        %v2287 = vpop.f32.mrf.mxu0
        %v2288 = vadd.f32 %v2264, %v2287
        %2289 = vdwg.mxu0
        %2290 = vmatpush.xpose.msra.mxu0 0.0
        %2291 = vmatpush.xpose.msra.mxu0 0.0
        %2292 = vmatpush.xpose.msra.mxu0 0.0
        %2293 = vmatpush.xpose.msra.mxu0 0.0
        %2294 = vmatpush.xpose.msra.mxu0 0.0
        %2295 = vmatpush.xpose.msra.mxu0 0.0
        %2296 = vmatpush.xpose.msra.mxu0 0.0
        %2297 = vmatpush.xpose.msra.mxu0 0.0
        %2298 = vmatpush.xpose.msra.mxu0 0.0
        %2299 = vmatpush.xpose.msra.mxu0 0.0
        %2300 = vmatpush.xpose.msra.mxu0 0.0
        %2301 = vmatpush.xpose.msra.mxu0 0.0
        %2302 = vmatpush.xpose.msra.mxu0 0.0
        %2303 = vmatpush.xpose.msra.mxu0 0.0
        %2304 = vmatpush.xpose.msra.mxu0 0.0
        %v2305 = vand.u32 %v2164, 4294901760
        %2306 = vmatpush.xpose.msra.mxu0 %v2305
        %v2307 = vand.u32 %v2162, 4294901760
        %2308 = vmatmul.f32.gmra.mxu0 %v2307
        %v2309 = vpop.f32.mrf.mxu0
        %v2310 = vadd.f32 %v2288, %v2309
        %2311 = vdwg.mxu0
        %v2312 = vsel %vm1350, %v2310, -inf
        %2313 = vmax.xlane.f32.xlu0 %v2312
        %v2314 = vpop.xlane.xlu0 %2313
        %v2315 = vsub.f32 %v2310, %v2314
        %v2316 = vmul.f32 %v2315, 1.442695
        %v2317 = vpow.pop %v2316
        %v2318 = vsel %vm1350, %v2317, 0.0
        %2319 = vadd.xlane.f32.xlu0 %v2318
        %v2320 = vpop.xlane.xlu0 %2319
        %v2321 = vrcp.pop %v2320
        %v2322 = vmul.f32 %v2317, %v2321
        %2323 = vrot.lane.b32.xlu0 %v1191, 32
        %v2324 = vpop.permute.xlu0 %2323
        %v2327 = vsel %vm1362, %v2322, 0
        %2329 = vmatpush.msra.mxu0 0.0
        %2330 = vmatpush.msra.mxu0 0.0
        %2331 = vmatpush.msra.mxu0 0.0
        %2332 = vmatpush.msra.mxu0 0.0
        %2333 = vmatpush.msra.mxu0 0.0
        %2334 = vmatpush.msra.mxu0 0.0
        %2335 = vmatpush.msra.mxu0 0.0
        %2336 = vmatpush.msra.mxu0 0.0
        %2337 = vmatpush.msra.mxu0 0.0
        %2338 = vmatpush.msra.mxu0 0.0
        %2339 = vmatpush.msra.mxu0 0.0
        %2340 = vmatpush.msra.mxu0 0.0
        %2341 = vmatpush.msra.mxu0 0.0
        %2342 = vmatpush.msra.mxu0 0.0
        %2343 = vmatpush.msra.mxu0 0.0
        %v2344 = vand.u32 %v2324, 4294901760
        %2345 = vmatpush.msra.mxu0 %v2344
        %v2346 = vand.u32 %v2327, 4294901760
        %v2347 = vsub.f32 %v2327, %v2346
        %v2348 = vand.u32 %v2347, 4294901760
        %v2349 = vsub.f32 %v2347, %v2348
        %v2350 = vand.u32 %v2349, 4294901760
        %2351 = vmatmul.f32.gmra.mxu0 %v2350
        %v2352 = vpop.f32.mrf.mxu0
        %v2353 = vadd.f32 0.0, %v2352
        %2354 = vdwg.mxu0
        %2355 = vmatpush.msra.mxu0 0.0
        %2356 = vmatpush.msra.mxu0 0.0
        %2357 = vmatpush.msra.mxu0 0.0
        %2358 = vmatpush.msra.mxu0 0.0
        %2359 = vmatpush.msra.mxu0 0.0
        %2360 = vmatpush.msra.mxu0 0.0
        %2361 = vmatpush.msra.mxu0 0.0
        %2362 = vmatpush.msra.mxu0 0.0
        %2363 = vmatpush.msra.mxu0 0.0
        %2364 = vmatpush.msra.mxu0 0.0
        %2365 = vmatpush.msra.mxu0 0.0
        %2366 = vmatpush.msra.mxu0 0.0
        %2367 = vmatpush.msra.mxu0 0.0
        %2368 = vmatpush.msra.mxu0 0.0
        %2369 = vmatpush.msra.mxu0 0.0
        %v2370 = vand.u32 %v2324, 4294901760
        %v2371 = vsub.f32 %v2324, %v2370
        %v2372 = vand.u32 %v2371, 4294901760
        %v2373 = vsub.f32 %v2371, %v2372
        %v2374 = vand.u32 %v2373, 4294901760
        %2375 = vmatpush.msra.mxu0 %v2374
        %v2376 = vand.u32 %v2327, 4294901760
        %2377 = vmatmul.f32.gmra.mxu0 %v2376
        %v2378 = vpop.f32.mrf.mxu0
        %v2379 = vadd.f32 %v2353, %v2378
        %2380 = vdwg.mxu0
        %2381 = vmatpush.msra.mxu0 0.0
        %2382 = vmatpush.msra.mxu0 0.0
        %2383 = vmatpush.msra.mxu0 0.0
        %2384 = vmatpush.msra.mxu0 0.0
        %2385 = vmatpush.msra.mxu0 0.0
        %2386 = vmatpush.msra.mxu0 0.0
        %2387 = vmatpush.msra.mxu0 0.0
        %2388 = vmatpush.msra.mxu0 0.0
        %2389 = vmatpush.msra.mxu0 0.0
        %2390 = vmatpush.msra.mxu0 0.0
        %2391 = vmatpush.msra.mxu0 0.0
        %2392 = vmatpush.msra.mxu0 0.0
        %2393 = vmatpush.msra.mxu0 0.0
        %2394 = vmatpush.msra.mxu0 0.0
        %2395 = vmatpush.msra.mxu0 0.0
        %v2396 = vand.u32 %v2324, 4294901760
        %v2397 = vsub.f32 %v2324, %v2396
        %2398 = vmatpush.msra.mxu0 %v2397
        %v2399 = vand.u32 %v2327, 4294901760
        %v2400 = vsub.f32 %v2327, %v2399
        %2401 = vmatmul.f32.gmra.mxu0 %v2400
        %v2402 = vpop.f32.mrf.mxu0
        %v2403 = vadd.f32 %v2379, %v2402
        %2404 = vdwg.mxu0
        %2405 = vmatpush.msra.mxu0 0.0
        %2406 = vmatpush.msra.mxu0 0.0
        %2407 = vmatpush.msra.mxu0 0.0
        %2408 = vmatpush.msra.mxu0 0.0
        %2409 = vmatpush.msra.mxu0 0.0
        %2410 = vmatpush.msra.mxu0 0.0
        %2411 = vmatpush.msra.mxu0 0.0
        %2412 = vmatpush.msra.mxu0 0.0
        %2413 = vmatpush.msra.mxu0 0.0
        %2414 = vmatpush.msra.mxu0 0.0
        %2415 = vmatpush.msra.mxu0 0.0
        %2416 = vmatpush.msra.mxu0 0.0
        %2417 = vmatpush.msra.mxu0 0.0
        %2418 = vmatpush.msra.mxu0 0.0
        %2419 = vmatpush.msra.mxu0 0.0
        %v2420 = vand.u32 %v2324, 4294901760
        %2421 = vmatpush.msra.mxu0 %v2420
        %v2422 = vand.u32 %v2327, 4294901760
        %v2423 = vsub.f32 %v2327, %v2422
        %v2424 = vand.u32 %v2423, 4294901760
        %2425 = vmatmul.f32.gmra.mxu0 %v2424
        %v2426 = vpop.f32.mrf.mxu0
        %v2427 = vadd.f32 %v2403, %v2426
        %2428 = vdwg.mxu0
        %2429 = vmatpush.msra.mxu0 0.0
        %2430 = vmatpush.msra.mxu0 0.0
        %2431 = vmatpush.msra.mxu0 0.0
        %2432 = vmatpush.msra.mxu0 0.0
        %2433 = vmatpush.msra.mxu0 0.0
        %2434 = vmatpush.msra.mxu0 0.0
        %2435 = vmatpush.msra.mxu0 0.0
        %2436 = vmatpush.msra.mxu0 0.0
        %2437 = vmatpush.msra.mxu0 0.0
        %2438 = vmatpush.msra.mxu0 0.0
        %2439 = vmatpush.msra.mxu0 0.0
        %2440 = vmatpush.msra.mxu0 0.0
        %2441 = vmatpush.msra.mxu0 0.0
        %2442 = vmatpush.msra.mxu0 0.0
        %2443 = vmatpush.msra.mxu0 0.0
        %v2444 = vand.u32 %v2324, 4294901760
        %v2445 = vsub.f32 %v2324, %v2444
        %v2446 = vand.u32 %v2445, 4294901760
        %2447 = vmatpush.msra.mxu0 %v2446
        %v2448 = vand.u32 %v2327, 4294901760
        %2449 = vmatmul.f32.gmra.mxu0 %v2448
        %v2450 = vpop.f32.mrf.mxu0
        %v2451 = vadd.f32 %v2427, %v2450
        %2452 = vdwg.mxu0
        %2453 = vmatpush.msra.mxu0 0.0
        %2454 = vmatpush.msra.mxu0 0.0
        %2455 = vmatpush.msra.mxu0 0.0
        %2456 = vmatpush.msra.mxu0 0.0
        %2457 = vmatpush.msra.mxu0 0.0
        %2458 = vmatpush.msra.mxu0 0.0
        %2459 = vmatpush.msra.mxu0 0.0
        %2460 = vmatpush.msra.mxu0 0.0
        %2461 = vmatpush.msra.mxu0 0.0
        %2462 = vmatpush.msra.mxu0 0.0
        %2463 = vmatpush.msra.mxu0 0.0
        %2464 = vmatpush.msra.mxu0 0.0
        %2465 = vmatpush.msra.mxu0 0.0
        %2466 = vmatpush.msra.mxu0 0.0
        %2467 = vmatpush.msra.mxu0 0.0
        %v2468 = vand.u32 %v2324, 4294901760
        %2469 = vmatpush.msra.mxu0 %v2468
        %v2470 = vand.u32 %v2327, 4294901760
        %2471 = vmatmul.f32.gmra.mxu0 %v2470
        %v2472 = vpop.f32.mrf.mxu0
        %v2473 = vadd.f32 %v2451, %v2472
        %2474 = vdwg.mxu0
        %2476 = vrot.lane.b32.xlu0 %v2473, 96
        %v2477 = vpop.permute.xlu0 %2476
        %v2479 = vadd.f32 %v586, %v2477
        %v2480 = vsel %vm1197, %v1512, %v1835
        %vm2481 = vcmask 523264
        %v2482 = vsel %vm2481, %v2480, %v2157
        %vm2483 = vcmask 785408
        %v2484 = vsel %vm2483, %v2482, %v2479
        %v2486 = vsel %vm1197, %v919, 0
        %2488 = vmatpush.xpose.msra.mxu0 0.0
        %2489 = vmatpush.xpose.msra.mxu0 0.0
        %2490 = vmatpush.xpose.msra.mxu0 0.0
        %2491 = vmatpush.xpose.msra.mxu0 0.0
        %2492 = vmatpush.xpose.msra.mxu0 0.0
        %2493 = vmatpush.xpose.msra.mxu0 0.0
        %2494 = vmatpush.xpose.msra.mxu0 0.0
        %2495 = vmatpush.xpose.msra.mxu0 0.0
        %2496 = vmatpush.xpose.msra.mxu0 0.0
        %2497 = vmatpush.xpose.msra.mxu0 0.0
        %2498 = vmatpush.xpose.msra.mxu0 0.0
        %2499 = vmatpush.xpose.msra.mxu0 0.0
        %2500 = vmatpush.xpose.msra.mxu0 0.0
        %2501 = vmatpush.xpose.msra.mxu0 0.0
        %2502 = vmatpush.xpose.msra.mxu0 0.0
        %v2503 = vand.u32 %v2486, 4294901760
        %2504 = vmatpush.xpose.msra.mxu0 %v2503
        %v2505 = vand.u32 %v1199, 4294901760
        %v2506 = vsub.f32 %v1199, %v2505
        %v2507 = vand.u32 %v2506, 4294901760
        %v2508 = vsub.f32 %v2506, %v2507
        %v2509 = vand.u32 %v2508, 4294901760
        %2510 = vmatmul.f32.gmra.mxu0 %v2509
        %v2511 = vpop.f32.mrf.mxu0
        %v2512 = vadd.f32 0.0, %v2511
        %2513 = vdwg.mxu0
        %2514 = vmatpush.xpose.msra.mxu0 0.0
        %2515 = vmatpush.xpose.msra.mxu0 0.0
        %2516 = vmatpush.xpose.msra.mxu0 0.0
        %2517 = vmatpush.xpose.msra.mxu0 0.0
        %2518 = vmatpush.xpose.msra.mxu0 0.0
        %2519 = vmatpush.xpose.msra.mxu0 0.0
        %2520 = vmatpush.xpose.msra.mxu0 0.0
        %2521 = vmatpush.xpose.msra.mxu0 0.0
        %2522 = vmatpush.xpose.msra.mxu0 0.0
        %2523 = vmatpush.xpose.msra.mxu0 0.0
        %2524 = vmatpush.xpose.msra.mxu0 0.0
        %2525 = vmatpush.xpose.msra.mxu0 0.0
        %2526 = vmatpush.xpose.msra.mxu0 0.0
        %2527 = vmatpush.xpose.msra.mxu0 0.0
        %2528 = vmatpush.xpose.msra.mxu0 0.0
        %v2529 = vand.u32 %v2486, 4294901760
        %v2530 = vsub.f32 %v2486, %v2529
        %v2531 = vand.u32 %v2530, 4294901760
        %v2532 = vsub.f32 %v2530, %v2531
        %v2533 = vand.u32 %v2532, 4294901760
        %2534 = vmatpush.xpose.msra.mxu0 %v2533
        %v2535 = vand.u32 %v1199, 4294901760
        %2536 = vmatmul.f32.gmra.mxu0 %v2535
        %v2537 = vpop.f32.mrf.mxu0
        %v2538 = vadd.f32 %v2512, %v2537
        %2539 = vdwg.mxu0
        %2540 = vmatpush.xpose.msra.mxu0 0.0
        %2541 = vmatpush.xpose.msra.mxu0 0.0
        %2542 = vmatpush.xpose.msra.mxu0 0.0
        %2543 = vmatpush.xpose.msra.mxu0 0.0
        %2544 = vmatpush.xpose.msra.mxu0 0.0
        %2545 = vmatpush.xpose.msra.mxu0 0.0
        %2546 = vmatpush.xpose.msra.mxu0 0.0
        %2547 = vmatpush.xpose.msra.mxu0 0.0
        %2548 = vmatpush.xpose.msra.mxu0 0.0
        %2549 = vmatpush.xpose.msra.mxu0 0.0
        %2550 = vmatpush.xpose.msra.mxu0 0.0
        %2551 = vmatpush.xpose.msra.mxu0 0.0
        %2552 = vmatpush.xpose.msra.mxu0 0.0
        %2553 = vmatpush.xpose.msra.mxu0 0.0
        %2554 = vmatpush.xpose.msra.mxu0 0.0
        %v2555 = vand.u32 %v2486, 4294901760
        %v2556 = vsub.f32 %v2486, %v2555
        %2557 = vmatpush.xpose.msra.mxu0 %v2556
        %v2558 = vand.u32 %v1199, 4294901760
        %v2559 = vsub.f32 %v1199, %v2558
        %2560 = vmatmul.f32.gmra.mxu0 %v2559
        %v2561 = vpop.f32.mrf.mxu0
        %v2562 = vadd.f32 %v2538, %v2561
        %2563 = vdwg.mxu0
        %2564 = vmatpush.xpose.msra.mxu0 0.0
        %2565 = vmatpush.xpose.msra.mxu0 0.0
        %2566 = vmatpush.xpose.msra.mxu0 0.0
        %2567 = vmatpush.xpose.msra.mxu0 0.0
        %2568 = vmatpush.xpose.msra.mxu0 0.0
        %2569 = vmatpush.xpose.msra.mxu0 0.0
        %2570 = vmatpush.xpose.msra.mxu0 0.0
        %2571 = vmatpush.xpose.msra.mxu0 0.0
        %2572 = vmatpush.xpose.msra.mxu0 0.0
        %2573 = vmatpush.xpose.msra.mxu0 0.0
        %2574 = vmatpush.xpose.msra.mxu0 0.0
        %2575 = vmatpush.xpose.msra.mxu0 0.0
        %2576 = vmatpush.xpose.msra.mxu0 0.0
        %2577 = vmatpush.xpose.msra.mxu0 0.0
        %2578 = vmatpush.xpose.msra.mxu0 0.0
        %v2579 = vand.u32 %v2486, 4294901760
        %2580 = vmatpush.xpose.msra.mxu0 %v2579
        %v2581 = vand.u32 %v1199, 4294901760
        %v2582 = vsub.f32 %v1199, %v2581
        %v2583 = vand.u32 %v2582, 4294901760
        %2584 = vmatmul.f32.gmra.mxu0 %v2583
        %v2585 = vpop.f32.mrf.mxu0
        %v2586 = vadd.f32 %v2562, %v2585
        %2587 = vdwg.mxu0
        %2588 = vmatpush.xpose.msra.mxu0 0.0
        %2589 = vmatpush.xpose.msra.mxu0 0.0
        %2590 = vmatpush.xpose.msra.mxu0 0.0
        %2591 = vmatpush.xpose.msra.mxu0 0.0
        %2592 = vmatpush.xpose.msra.mxu0 0.0
        %2593 = vmatpush.xpose.msra.mxu0 0.0
        %2594 = vmatpush.xpose.msra.mxu0 0.0
        %2595 = vmatpush.xpose.msra.mxu0 0.0
        %2596 = vmatpush.xpose.msra.mxu0 0.0
        %2597 = vmatpush.xpose.msra.mxu0 0.0
        %2598 = vmatpush.xpose.msra.mxu0 0.0
        %2599 = vmatpush.xpose.msra.mxu0 0.0
        %2600 = vmatpush.xpose.msra.mxu0 0.0
        %2601 = vmatpush.xpose.msra.mxu0 0.0
        %2602 = vmatpush.xpose.msra.mxu0 0.0
        %v2603 = vand.u32 %v2486, 4294901760
        %v2604 = vsub.f32 %v2486, %v2603
        %v2605 = vand.u32 %v2604, 4294901760
        %2606 = vmatpush.xpose.msra.mxu0 %v2605
        %v2607 = vand.u32 %v1199, 4294901760
        %2608 = vmatmul.f32.gmra.mxu0 %v2607
        %v2609 = vpop.f32.mrf.mxu0
        %v2610 = vadd.f32 %v2586, %v2609
        %2611 = vdwg.mxu0
        %2612 = vmatpush.xpose.msra.mxu0 0.0
        %2613 = vmatpush.xpose.msra.mxu0 0.0
        %2614 = vmatpush.xpose.msra.mxu0 0.0
        %2615 = vmatpush.xpose.msra.mxu0 0.0
        %2616 = vmatpush.xpose.msra.mxu0 0.0
        %2617 = vmatpush.xpose.msra.mxu0 0.0
        %2618 = vmatpush.xpose.msra.mxu0 0.0
        %2619 = vmatpush.xpose.msra.mxu0 0.0
        %2620 = vmatpush.xpose.msra.mxu0 0.0
        %2621 = vmatpush.xpose.msra.mxu0 0.0
        %2622 = vmatpush.xpose.msra.mxu0 0.0
        %2623 = vmatpush.xpose.msra.mxu0 0.0
        %2624 = vmatpush.xpose.msra.mxu0 0.0
        %2625 = vmatpush.xpose.msra.mxu0 0.0
        %2626 = vmatpush.xpose.msra.mxu0 0.0
        %v2627 = vand.u32 %v2486, 4294901760
        %2628 = vmatpush.xpose.msra.mxu0 %v2627
        %v2629 = vand.u32 %v1199, 4294901760
        %2630 = vmatmul.f32.gmra.mxu0 %v2629
        %v2631 = vpop.f32.mrf.mxu0
        %v2632 = vadd.f32 %v2610, %v2631
        %2633 = vdwg.mxu0
        %v2634 = vsel %vm1350, %v2632, -inf
        %2635 = vmax.xlane.f32.xlu0 %v2634
        %v2636 = vpop.xlane.xlu0 %2635
        %v2637 = vsub.f32 %v2632, %v2636
        %v2638 = vmul.f32 %v2637, 1.442695
        %v2639 = vpow.pop %v2638
        %v2640 = vsel %vm1350, %v2639, 0.0
        %2641 = vadd.xlane.f32.xlu0 %v2640
        %v2642 = vpop.xlane.xlu0 %2641
        %v2643 = vrcp.pop %v2642
        %v2644 = vmul.f32 %v2639, %v2643
        %v2646 = vsel %vm1362, %v2644, 0
        %2648 = vmatpush.msra.mxu0 0.0
        %2649 = vmatpush.msra.mxu0 0.0
        %2650 = vmatpush.msra.mxu0 0.0
        %2651 = vmatpush.msra.mxu0 0.0
        %2652 = vmatpush.msra.mxu0 0.0
        %2653 = vmatpush.msra.mxu0 0.0
        %2654 = vmatpush.msra.mxu0 0.0
        %2655 = vmatpush.msra.mxu0 0.0
        %2656 = vmatpush.msra.mxu0 0.0
        %2657 = vmatpush.msra.mxu0 0.0
        %2658 = vmatpush.msra.mxu0 0.0
        %2659 = vmatpush.msra.mxu0 0.0
        %2660 = vmatpush.msra.mxu0 0.0
        %2661 = vmatpush.msra.mxu0 0.0
        %2662 = vmatpush.msra.mxu0 0.0
        %v2663 = vand.u32 %v1195, 4294901760
        %2664 = vmatpush.msra.mxu0 %v2663
        %v2665 = vand.u32 %v2646, 4294901760
        %v2666 = vsub.f32 %v2646, %v2665
        %v2667 = vand.u32 %v2666, 4294901760
        %v2668 = vsub.f32 %v2666, %v2667
        %v2669 = vand.u32 %v2668, 4294901760
        %2670 = vmatmul.f32.gmra.mxu0 %v2669
        %v2671 = vpop.f32.mrf.mxu0
        %v2672 = vadd.f32 0.0, %v2671
        %2673 = vdwg.mxu0
        %2674 = vmatpush.msra.mxu0 0.0
        %2675 = vmatpush.msra.mxu0 0.0
        %2676 = vmatpush.msra.mxu0 0.0
        %2677 = vmatpush.msra.mxu0 0.0
        %2678 = vmatpush.msra.mxu0 0.0
        %2679 = vmatpush.msra.mxu0 0.0
        %2680 = vmatpush.msra.mxu0 0.0
        %2681 = vmatpush.msra.mxu0 0.0
        %2682 = vmatpush.msra.mxu0 0.0
        %2683 = vmatpush.msra.mxu0 0.0
        %2684 = vmatpush.msra.mxu0 0.0
        %2685 = vmatpush.msra.mxu0 0.0
        %2686 = vmatpush.msra.mxu0 0.0
        %2687 = vmatpush.msra.mxu0 0.0
        %2688 = vmatpush.msra.mxu0 0.0
        %v2689 = vand.u32 %v1195, 4294901760
        %v2690 = vsub.f32 %v1195, %v2689
        %v2691 = vand.u32 %v2690, 4294901760
        %v2692 = vsub.f32 %v2690, %v2691
        %v2693 = vand.u32 %v2692, 4294901760
        %2694 = vmatpush.msra.mxu0 %v2693
        %v2695 = vand.u32 %v2646, 4294901760
        %2696 = vmatmul.f32.gmra.mxu0 %v2695
        %v2697 = vpop.f32.mrf.mxu0
        %v2698 = vadd.f32 %v2672, %v2697
        %2699 = vdwg.mxu0
        %2700 = vmatpush.msra.mxu0 0.0
        %2701 = vmatpush.msra.mxu0 0.0
        %2702 = vmatpush.msra.mxu0 0.0
        %2703 = vmatpush.msra.mxu0 0.0
        %2704 = vmatpush.msra.mxu0 0.0
        %2705 = vmatpush.msra.mxu0 0.0
        %2706 = vmatpush.msra.mxu0 0.0
        %2707 = vmatpush.msra.mxu0 0.0
        %2708 = vmatpush.msra.mxu0 0.0
        %2709 = vmatpush.msra.mxu0 0.0
        %2710 = vmatpush.msra.mxu0 0.0
        %2711 = vmatpush.msra.mxu0 0.0
        %2712 = vmatpush.msra.mxu0 0.0
        %2713 = vmatpush.msra.mxu0 0.0
        %2714 = vmatpush.msra.mxu0 0.0
        %v2715 = vand.u32 %v1195, 4294901760
        %v2716 = vsub.f32 %v1195, %v2715
        %2717 = vmatpush.msra.mxu0 %v2716
        %v2718 = vand.u32 %v2646, 4294901760
        %v2719 = vsub.f32 %v2646, %v2718
        %2720 = vmatmul.f32.gmra.mxu0 %v2719
        %v2721 = vpop.f32.mrf.mxu0
        %v2722 = vadd.f32 %v2698, %v2721
        %2723 = vdwg.mxu0
        %2724 = vmatpush.msra.mxu0 0.0
        %2725 = vmatpush.msra.mxu0 0.0
        %2726 = vmatpush.msra.mxu0 0.0
        %2727 = vmatpush.msra.mxu0 0.0
        %2728 = vmatpush.msra.mxu0 0.0
        %2729 = vmatpush.msra.mxu0 0.0
        %2730 = vmatpush.msra.mxu0 0.0
        %2731 = vmatpush.msra.mxu0 0.0
        %2732 = vmatpush.msra.mxu0 0.0
        %2733 = vmatpush.msra.mxu0 0.0
        %2734 = vmatpush.msra.mxu0 0.0
        %2735 = vmatpush.msra.mxu0 0.0
        %2736 = vmatpush.msra.mxu0 0.0
        %2737 = vmatpush.msra.mxu0 0.0
        %2738 = vmatpush.msra.mxu0 0.0
        %v2739 = vand.u32 %v1195, 4294901760
        %2740 = vmatpush.msra.mxu0 %v2739
        %v2741 = vand.u32 %v2646, 4294901760
        %v2742 = vsub.f32 %v2646, %v2741
        %v2743 = vand.u32 %v2742, 4294901760
        %2744 = vmatmul.f32.gmra.mxu0 %v2743
        %v2745 = vpop.f32.mrf.mxu0
        %v2746 = vadd.f32 %v2722, %v2745
        %2747 = vdwg.mxu0
        %2748 = vmatpush.msra.mxu0 0.0
        %2749 = vmatpush.msra.mxu0 0.0
        %2750 = vmatpush.msra.mxu0 0.0
        %2751 = vmatpush.msra.mxu0 0.0
        %2752 = vmatpush.msra.mxu0 0.0
        %2753 = vmatpush.msra.mxu0 0.0
        %2754 = vmatpush.msra.mxu0 0.0
        %2755 = vmatpush.msra.mxu0 0.0
        %2756 = vmatpush.msra.mxu0 0.0
        %2757 = vmatpush.msra.mxu0 0.0
        %2758 = vmatpush.msra.mxu0 0.0
        %2759 = vmatpush.msra.mxu0 0.0
        %2760 = vmatpush.msra.mxu0 0.0
        %2761 = vmatpush.msra.mxu0 0.0
        %2762 = vmatpush.msra.mxu0 0.0
        %v2763 = vand.u32 %v1195, 4294901760
        %v2764 = vsub.f32 %v1195, %v2763
        %v2765 = vand.u32 %v2764, 4294901760
        %2766 = vmatpush.msra.mxu0 %v2765
        %v2767 = vand.u32 %v2646, 4294901760
        %2768 = vmatmul.f32.gmra.mxu0 %v2767
        %v2769 = vpop.f32.mrf.mxu0
        %v2770 = vadd.f32 %v2746, %v2769
        %2771 = vdwg.mxu0
        %2772 = vmatpush.msra.mxu0 0.0
        %2773 = vmatpush.msra.mxu0 0.0
        %2774 = vmatpush.msra.mxu0 0.0
        %2775 = vmatpush.msra.mxu0 0.0
        %2776 = vmatpush.msra.mxu0 0.0
        %2777 = vmatpush.msra.mxu0 0.0
        %2778 = vmatpush.msra.mxu0 0.0
        %2779 = vmatpush.msra.mxu0 0.0
        %2780 = vmatpush.msra.mxu0 0.0
        %2781 = vmatpush.msra.mxu0 0.0
        %2782 = vmatpush.msra.mxu0 0.0
        %2783 = vmatpush.msra.mxu0 0.0
        %2784 = vmatpush.msra.mxu0 0.0
        %2785 = vmatpush.msra.mxu0 0.0
        %2786 = vmatpush.msra.mxu0 0.0
        %v2787 = vand.u32 %v1195, 4294901760
        %2788 = vmatpush.msra.mxu0 %v2787
        %v2789 = vand.u32 %v2646, 4294901760
        %2790 = vmatmul.f32.gmra.mxu0 %v2789
        %v2791 = vpop.f32.mrf.mxu0
        %v2792 = vadd.f32 %v2770, %v2791
        %2793 = vdwg.mxu0
        %v2794 = vadd.f32 %v586, %v2792
        %2795 = vrot.lane.b32.xlu0 %v919, 96
        %v2796 = vpop.permute.xlu0 %2795
        %v2797 = vsel %vm1197, %v2796, 0
        %2799 = vmatpush.xpose.msra.mxu0 0.0
        %2800 = vmatpush.xpose.msra.mxu0 0.0
        %2801 = vmatpush.xpose.msra.mxu0 0.0
        %2802 = vmatpush.xpose.msra.mxu0 0.0
        %2803 = vmatpush.xpose.msra.mxu0 0.0
        %2804 = vmatpush.xpose.msra.mxu0 0.0
        %2805 = vmatpush.xpose.msra.mxu0 0.0
        %2806 = vmatpush.xpose.msra.mxu0 0.0
        %2807 = vmatpush.xpose.msra.mxu0 0.0
        %2808 = vmatpush.xpose.msra.mxu0 0.0
        %2809 = vmatpush.xpose.msra.mxu0 0.0
        %2810 = vmatpush.xpose.msra.mxu0 0.0
        %2811 = vmatpush.xpose.msra.mxu0 0.0
        %2812 = vmatpush.xpose.msra.mxu0 0.0
        %2813 = vmatpush.xpose.msra.mxu0 0.0
        %v2814 = vand.u32 %v2797, 4294901760
        %2815 = vmatpush.xpose.msra.mxu0 %v2814
        %v2816 = vand.u32 %v1517, 4294901760
        %v2817 = vsub.f32 %v1517, %v2816
        %v2818 = vand.u32 %v2817, 4294901760
        %v2819 = vsub.f32 %v2817, %v2818
        %v2820 = vand.u32 %v2819, 4294901760
        %2821 = vmatmul.f32.gmra.mxu0 %v2820
        %v2822 = vpop.f32.mrf.mxu0
        %v2823 = vadd.f32 0.0, %v2822
        %2824 = vdwg.mxu0
        %2825 = vmatpush.xpose.msra.mxu0 0.0
        %2826 = vmatpush.xpose.msra.mxu0 0.0
        %2827 = vmatpush.xpose.msra.mxu0 0.0
        %2828 = vmatpush.xpose.msra.mxu0 0.0
        %2829 = vmatpush.xpose.msra.mxu0 0.0
        %2830 = vmatpush.xpose.msra.mxu0 0.0
        %2831 = vmatpush.xpose.msra.mxu0 0.0
        %2832 = vmatpush.xpose.msra.mxu0 0.0
        %2833 = vmatpush.xpose.msra.mxu0 0.0
        %2834 = vmatpush.xpose.msra.mxu0 0.0
        %2835 = vmatpush.xpose.msra.mxu0 0.0
        %2836 = vmatpush.xpose.msra.mxu0 0.0
        %2837 = vmatpush.xpose.msra.mxu0 0.0
        %2838 = vmatpush.xpose.msra.mxu0 0.0
        %2839 = vmatpush.xpose.msra.mxu0 0.0
        %v2840 = vand.u32 %v2797, 4294901760
        %v2841 = vsub.f32 %v2797, %v2840
        %v2842 = vand.u32 %v2841, 4294901760
        %v2843 = vsub.f32 %v2841, %v2842
        %v2844 = vand.u32 %v2843, 4294901760
        %2845 = vmatpush.xpose.msra.mxu0 %v2844
        %v2846 = vand.u32 %v1517, 4294901760
        %2847 = vmatmul.f32.gmra.mxu0 %v2846
        %v2848 = vpop.f32.mrf.mxu0
        %v2849 = vadd.f32 %v2823, %v2848
        %2850 = vdwg.mxu0
        %2851 = vmatpush.xpose.msra.mxu0 0.0
        %2852 = vmatpush.xpose.msra.mxu0 0.0
        %2853 = vmatpush.xpose.msra.mxu0 0.0
        %2854 = vmatpush.xpose.msra.mxu0 0.0
        %2855 = vmatpush.xpose.msra.mxu0 0.0
        %2856 = vmatpush.xpose.msra.mxu0 0.0
        %2857 = vmatpush.xpose.msra.mxu0 0.0
        %2858 = vmatpush.xpose.msra.mxu0 0.0
        %2859 = vmatpush.xpose.msra.mxu0 0.0
        %2860 = vmatpush.xpose.msra.mxu0 0.0
        %2861 = vmatpush.xpose.msra.mxu0 0.0
        %2862 = vmatpush.xpose.msra.mxu0 0.0
        %2863 = vmatpush.xpose.msra.mxu0 0.0
        %2864 = vmatpush.xpose.msra.mxu0 0.0
        %2865 = vmatpush.xpose.msra.mxu0 0.0
        %v2866 = vand.u32 %v2797, 4294901760
        %v2867 = vsub.f32 %v2797, %v2866
        %2868 = vmatpush.xpose.msra.mxu0 %v2867
        %v2869 = vand.u32 %v1517, 4294901760
        %v2870 = vsub.f32 %v1517, %v2869
        %2871 = vmatmul.f32.gmra.mxu0 %v2870
        %v2872 = vpop.f32.mrf.mxu0
        %v2873 = vadd.f32 %v2849, %v2872
        %2874 = vdwg.mxu0
        %2875 = vmatpush.xpose.msra.mxu0 0.0
        %2876 = vmatpush.xpose.msra.mxu0 0.0
        %2877 = vmatpush.xpose.msra.mxu0 0.0
        %2878 = vmatpush.xpose.msra.mxu0 0.0
        %2879 = vmatpush.xpose.msra.mxu0 0.0
        %2880 = vmatpush.xpose.msra.mxu0 0.0
        %2881 = vmatpush.xpose.msra.mxu0 0.0
        %2882 = vmatpush.xpose.msra.mxu0 0.0
        %2883 = vmatpush.xpose.msra.mxu0 0.0
        %2884 = vmatpush.xpose.msra.mxu0 0.0
        %2885 = vmatpush.xpose.msra.mxu0 0.0
        %2886 = vmatpush.xpose.msra.mxu0 0.0
        %2887 = vmatpush.xpose.msra.mxu0 0.0
        %2888 = vmatpush.xpose.msra.mxu0 0.0
        %2889 = vmatpush.xpose.msra.mxu0 0.0
        %v2890 = vand.u32 %v2797, 4294901760
        %2891 = vmatpush.xpose.msra.mxu0 %v2890
        %v2892 = vand.u32 %v1517, 4294901760
        %v2893 = vsub.f32 %v1517, %v2892
        %v2894 = vand.u32 %v2893, 4294901760
        %2895 = vmatmul.f32.gmra.mxu0 %v2894
        %v2896 = vpop.f32.mrf.mxu0
        %v2897 = vadd.f32 %v2873, %v2896
        %2898 = vdwg.mxu0
        %2899 = vmatpush.xpose.msra.mxu0 0.0
        %2900 = vmatpush.xpose.msra.mxu0 0.0
        %2901 = vmatpush.xpose.msra.mxu0 0.0
        %2902 = vmatpush.xpose.msra.mxu0 0.0
        %2903 = vmatpush.xpose.msra.mxu0 0.0
        %2904 = vmatpush.xpose.msra.mxu0 0.0
        %2905 = vmatpush.xpose.msra.mxu0 0.0
        %2906 = vmatpush.xpose.msra.mxu0 0.0
        %2907 = vmatpush.xpose.msra.mxu0 0.0
        %2908 = vmatpush.xpose.msra.mxu0 0.0
        %2909 = vmatpush.xpose.msra.mxu0 0.0
        %2910 = vmatpush.xpose.msra.mxu0 0.0
        %2911 = vmatpush.xpose.msra.mxu0 0.0
        %2912 = vmatpush.xpose.msra.mxu0 0.0
        %2913 = vmatpush.xpose.msra.mxu0 0.0
        %v2914 = vand.u32 %v2797, 4294901760
        %v2915 = vsub.f32 %v2797, %v2914
        %v2916 = vand.u32 %v2915, 4294901760
        %2917 = vmatpush.xpose.msra.mxu0 %v2916
        %v2918 = vand.u32 %v1517, 4294901760
        %2919 = vmatmul.f32.gmra.mxu0 %v2918
        %v2920 = vpop.f32.mrf.mxu0
        %v2921 = vadd.f32 %v2897, %v2920
        %2922 = vdwg.mxu0
        %2923 = vmatpush.xpose.msra.mxu0 0.0
        %2924 = vmatpush.xpose.msra.mxu0 0.0
        %2925 = vmatpush.xpose.msra.mxu0 0.0
        %2926 = vmatpush.xpose.msra.mxu0 0.0
        %2927 = vmatpush.xpose.msra.mxu0 0.0
        %2928 = vmatpush.xpose.msra.mxu0 0.0
        %2929 = vmatpush.xpose.msra.mxu0 0.0
        %2930 = vmatpush.xpose.msra.mxu0 0.0
        %2931 = vmatpush.xpose.msra.mxu0 0.0
        %2932 = vmatpush.xpose.msra.mxu0 0.0
        %2933 = vmatpush.xpose.msra.mxu0 0.0
        %2934 = vmatpush.xpose.msra.mxu0 0.0
        %2935 = vmatpush.xpose.msra.mxu0 0.0
        %2936 = vmatpush.xpose.msra.mxu0 0.0
        %2937 = vmatpush.xpose.msra.mxu0 0.0
        %v2938 = vand.u32 %v2797, 4294901760
        %2939 = vmatpush.xpose.msra.mxu0 %v2938
        %v2940 = vand.u32 %v1517, 4294901760
        %2941 = vmatmul.f32.gmra.mxu0 %v2940
        %v2942 = vpop.f32.mrf.mxu0
        %v2943 = vadd.f32 %v2921, %v2942
        %2944 = vdwg.mxu0
        %v2945 = vsel %vm1350, %v2943, -inf
        %2946 = vmax.xlane.f32.xlu0 %v2945
        %v2947 = vpop.xlane.xlu0 %2946
        %v2948 = vsub.f32 %v2943, %v2947
        %v2949 = vmul.f32 %v2948, 1.442695
        %v2950 = vpow.pop %v2949
        %v2951 = vsel %vm1350, %v2950, 0.0
        %2952 = vadd.xlane.f32.xlu0 %v2951
        %v2953 = vpop.xlane.xlu0 %2952
        %v2954 = vrcp.pop %v2953
        %v2955 = vmul.f32 %v2950, %v2954
        %2957 = vrot.lane.b32.xlu0 %v1195, 96
        %v2958 = vpop.permute.xlu0 %2957
        %v2961 = vsel %vm1362, %v2955, 0
        %2963 = vmatpush.msra.mxu0 0.0
        %2964 = vmatpush.msra.mxu0 0.0
        %2965 = vmatpush.msra.mxu0 0.0
        %2966 = vmatpush.msra.mxu0 0.0
        %2967 = vmatpush.msra.mxu0 0.0
        %2968 = vmatpush.msra.mxu0 0.0
        %2969 = vmatpush.msra.mxu0 0.0
        %2970 = vmatpush.msra.mxu0 0.0
        %2971 = vmatpush.msra.mxu0 0.0
        %2972 = vmatpush.msra.mxu0 0.0
        %2973 = vmatpush.msra.mxu0 0.0
        %2974 = vmatpush.msra.mxu0 0.0
        %2975 = vmatpush.msra.mxu0 0.0
        %2976 = vmatpush.msra.mxu0 0.0
        %2977 = vmatpush.msra.mxu0 0.0
        %v2978 = vand.u32 %v2958, 4294901760
        %2979 = vmatpush.msra.mxu0 %v2978
        %v2980 = vand.u32 %v2961, 4294901760
        %v2981 = vsub.f32 %v2961, %v2980
        %v2982 = vand.u32 %v2981, 4294901760
        %v2983 = vsub.f32 %v2981, %v2982
        %v2984 = vand.u32 %v2983, 4294901760
        %2985 = vmatmul.f32.gmra.mxu0 %v2984
        %v2986 = vpop.f32.mrf.mxu0
        %v2987 = vadd.f32 0.0, %v2986
        %2988 = vdwg.mxu0
        %2989 = vmatpush.msra.mxu0 0.0
        %2990 = vmatpush.msra.mxu0 0.0
        %2991 = vmatpush.msra.mxu0 0.0
        %2992 = vmatpush.msra.mxu0 0.0
        %2993 = vmatpush.msra.mxu0 0.0
        %2994 = vmatpush.msra.mxu0 0.0
        %2995 = vmatpush.msra.mxu0 0.0
        %2996 = vmatpush.msra.mxu0 0.0
        %2997 = vmatpush.msra.mxu0 0.0
        %2998 = vmatpush.msra.mxu0 0.0
        %2999 = vmatpush.msra.mxu0 0.0
        %3000 = vmatpush.msra.mxu0 0.0
        %3001 = vmatpush.msra.mxu0 0.0
        %3002 = vmatpush.msra.mxu0 0.0
        %3003 = vmatpush.msra.mxu0 0.0
        %v3004 = vand.u32 %v2958, 4294901760
        %v3005 = vsub.f32 %v2958, %v3004
        %v3006 = vand.u32 %v3005, 4294901760
        %v3007 = vsub.f32 %v3005, %v3006
        %v3008 = vand.u32 %v3007, 4294901760
        %3009 = vmatpush.msra.mxu0 %v3008
        %v3010 = vand.u32 %v2961, 4294901760
        %3011 = vmatmul.f32.gmra.mxu0 %v3010
        %v3012 = vpop.f32.mrf.mxu0
        %v3013 = vadd.f32 %v2987, %v3012
        %3014 = vdwg.mxu0
        %3015 = vmatpush.msra.mxu0 0.0
        %3016 = vmatpush.msra.mxu0 0.0
        %3017 = vmatpush.msra.mxu0 0.0
        %3018 = vmatpush.msra.mxu0 0.0
        %3019 = vmatpush.msra.mxu0 0.0
        %3020 = vmatpush.msra.mxu0 0.0
        %3021 = vmatpush.msra.mxu0 0.0
        %3022 = vmatpush.msra.mxu0 0.0
        %3023 = vmatpush.msra.mxu0 0.0
        %3024 = vmatpush.msra.mxu0 0.0
        %3025 = vmatpush.msra.mxu0 0.0
        %3026 = vmatpush.msra.mxu0 0.0
        %3027 = vmatpush.msra.mxu0 0.0
        %3028 = vmatpush.msra.mxu0 0.0
        %3029 = vmatpush.msra.mxu0 0.0
        %v3030 = vand.u32 %v2958, 4294901760
        %v3031 = vsub.f32 %v2958, %v3030
        %3032 = vmatpush.msra.mxu0 %v3031
        %v3033 = vand.u32 %v2961, 4294901760
        %v3034 = vsub.f32 %v2961, %v3033
        %3035 = vmatmul.f32.gmra.mxu0 %v3034
        %v3036 = vpop.f32.mrf.mxu0
        %v3037 = vadd.f32 %v3013, %v3036
        %3038 = vdwg.mxu0
        %3039 = vmatpush.msra.mxu0 0.0
        %3040 = vmatpush.msra.mxu0 0.0
        %3041 = vmatpush.msra.mxu0 0.0
        %3042 = vmatpush.msra.mxu0 0.0
        %3043 = vmatpush.msra.mxu0 0.0
        %3044 = vmatpush.msra.mxu0 0.0
        %3045 = vmatpush.msra.mxu0 0.0
        %3046 = vmatpush.msra.mxu0 0.0
        %3047 = vmatpush.msra.mxu0 0.0
        %3048 = vmatpush.msra.mxu0 0.0
        %3049 = vmatpush.msra.mxu0 0.0
        %3050 = vmatpush.msra.mxu0 0.0
        %3051 = vmatpush.msra.mxu0 0.0
        %3052 = vmatpush.msra.mxu0 0.0
        %3053 = vmatpush.msra.mxu0 0.0
        %v3054 = vand.u32 %v2958, 4294901760
        %3055 = vmatpush.msra.mxu0 %v3054
        %v3056 = vand.u32 %v2961, 4294901760
        %v3057 = vsub.f32 %v2961, %v3056
        %v3058 = vand.u32 %v3057, 4294901760
        %3059 = vmatmul.f32.gmra.mxu0 %v3058
        %v3060 = vpop.f32.mrf.mxu0
        %v3061 = vadd.f32 %v3037, %v3060
        %3062 = vdwg.mxu0
        %3063 = vmatpush.msra.mxu0 0.0
        %3064 = vmatpush.msra.mxu0 0.0
        %3065 = vmatpush.msra.mxu0 0.0
        %3066 = vmatpush.msra.mxu0 0.0
        %3067 = vmatpush.msra.mxu0 0.0
        %3068 = vmatpush.msra.mxu0 0.0
        %3069 = vmatpush.msra.mxu0 0.0
        %3070 = vmatpush.msra.mxu0 0.0
        %3071 = vmatpush.msra.mxu0 0.0
        %3072 = vmatpush.msra.mxu0 0.0
        %3073 = vmatpush.msra.mxu0 0.0
        %3074 = vmatpush.msra.mxu0 0.0
        %3075 = vmatpush.msra.mxu0 0.0
        %3076 = vmatpush.msra.mxu0 0.0
        %3077 = vmatpush.msra.mxu0 0.0
        %v3078 = vand.u32 %v2958, 4294901760
        %v3079 = vsub.f32 %v2958, %v3078
        %v3080 = vand.u32 %v3079, 4294901760
        %3081 = vmatpush.msra.mxu0 %v3080
        %v3082 = vand.u32 %v2961, 4294901760
        %3083 = vmatmul.f32.gmra.mxu0 %v3082
        %v3084 = vpop.f32.mrf.mxu0
        %v3085 = vadd.f32 %v3061, %v3084
        %3086 = vdwg.mxu0
        %3087 = vmatpush.msra.mxu0 0.0
        %3088 = vmatpush.msra.mxu0 0.0
        %3089 = vmatpush.msra.mxu0 0.0
        %3090 = vmatpush.msra.mxu0 0.0
        %3091 = vmatpush.msra.mxu0 0.0
        %3092 = vmatpush.msra.mxu0 0.0
        %3093 = vmatpush.msra.mxu0 0.0
        %3094 = vmatpush.msra.mxu0 0.0
        %3095 = vmatpush.msra.mxu0 0.0
        %3096 = vmatpush.msra.mxu0 0.0
        %3097 = vmatpush.msra.mxu0 0.0
        %3098 = vmatpush.msra.mxu0 0.0
        %3099 = vmatpush.msra.mxu0 0.0
        %3100 = vmatpush.msra.mxu0 0.0
        %3101 = vmatpush.msra.mxu0 0.0
        %v3102 = vand.u32 %v2958, 4294901760
        %3103 = vmatpush.msra.mxu0 %v3102
        %v3104 = vand.u32 %v2961, 4294901760
        %3105 = vmatmul.f32.gmra.mxu0 %v3104
        %v3106 = vpop.f32.mrf.mxu0
        %v3107 = vadd.f32 %v3085, %v3106
        %3108 = vdwg.mxu0
        %3110 = vrot.lane.b32.xlu0 %v3107, 32
        %v3111 = vpop.permute.xlu0 %3110
        %v3113 = vadd.f32 %v586, %v3111
        %3114 = vrot.lane.b32.xlu0 %v919, 64
        %v3115 = vpop.permute.xlu0 %3114
        %v3116 = vsel %vm1197, %v3115, 0
        %3118 = vmatpush.xpose.msra.mxu0 0.0
        %3119 = vmatpush.xpose.msra.mxu0 0.0
        %3120 = vmatpush.xpose.msra.mxu0 0.0
        %3121 = vmatpush.xpose.msra.mxu0 0.0
        %3122 = vmatpush.xpose.msra.mxu0 0.0
        %3123 = vmatpush.xpose.msra.mxu0 0.0
        %3124 = vmatpush.xpose.msra.mxu0 0.0
        %3125 = vmatpush.xpose.msra.mxu0 0.0
        %3126 = vmatpush.xpose.msra.mxu0 0.0
        %3127 = vmatpush.xpose.msra.mxu0 0.0
        %3128 = vmatpush.xpose.msra.mxu0 0.0
        %3129 = vmatpush.xpose.msra.mxu0 0.0
        %3130 = vmatpush.xpose.msra.mxu0 0.0
        %3131 = vmatpush.xpose.msra.mxu0 0.0
        %3132 = vmatpush.xpose.msra.mxu0 0.0
        %v3133 = vand.u32 %v3116, 4294901760
        %3134 = vmatpush.xpose.msra.mxu0 %v3133
        %v3135 = vand.u32 %v1840, 4294901760
        %v3136 = vsub.f32 %v1840, %v3135
        %v3137 = vand.u32 %v3136, 4294901760
        %v3138 = vsub.f32 %v3136, %v3137
        %v3139 = vand.u32 %v3138, 4294901760
        %3140 = vmatmul.f32.gmra.mxu0 %v3139
        %v3141 = vpop.f32.mrf.mxu0
        %v3142 = vadd.f32 0.0, %v3141
        %3143 = vdwg.mxu0
        %3144 = vmatpush.xpose.msra.mxu0 0.0
        %3145 = vmatpush.xpose.msra.mxu0 0.0
        %3146 = vmatpush.xpose.msra.mxu0 0.0
        %3147 = vmatpush.xpose.msra.mxu0 0.0
        %3148 = vmatpush.xpose.msra.mxu0 0.0
        %3149 = vmatpush.xpose.msra.mxu0 0.0
        %3150 = vmatpush.xpose.msra.mxu0 0.0
        %3151 = vmatpush.xpose.msra.mxu0 0.0
        %3152 = vmatpush.xpose.msra.mxu0 0.0
        %3153 = vmatpush.xpose.msra.mxu0 0.0
        %3154 = vmatpush.xpose.msra.mxu0 0.0
        %3155 = vmatpush.xpose.msra.mxu0 0.0
        %3156 = vmatpush.xpose.msra.mxu0 0.0
        %3157 = vmatpush.xpose.msra.mxu0 0.0
        %3158 = vmatpush.xpose.msra.mxu0 0.0
        %v3159 = vand.u32 %v3116, 4294901760
        %v3160 = vsub.f32 %v3116, %v3159
        %v3161 = vand.u32 %v3160, 4294901760
        %v3162 = vsub.f32 %v3160, %v3161
        %v3163 = vand.u32 %v3162, 4294901760
        %3164 = vmatpush.xpose.msra.mxu0 %v3163
        %v3165 = vand.u32 %v1840, 4294901760
        %3166 = vmatmul.f32.gmra.mxu0 %v3165
        %v3167 = vpop.f32.mrf.mxu0
        %v3168 = vadd.f32 %v3142, %v3167
        %3169 = vdwg.mxu0
        %3170 = vmatpush.xpose.msra.mxu0 0.0
        %3171 = vmatpush.xpose.msra.mxu0 0.0
        %3172 = vmatpush.xpose.msra.mxu0 0.0
        %3173 = vmatpush.xpose.msra.mxu0 0.0
        %3174 = vmatpush.xpose.msra.mxu0 0.0
        %3175 = vmatpush.xpose.msra.mxu0 0.0
        %3176 = vmatpush.xpose.msra.mxu0 0.0
        %3177 = vmatpush.xpose.msra.mxu0 0.0
        %3178 = vmatpush.xpose.msra.mxu0 0.0
        %3179 = vmatpush.xpose.msra.mxu0 0.0
        %3180 = vmatpush.xpose.msra.mxu0 0.0
        %3181 = vmatpush.xpose.msra.mxu0 0.0
        %3182 = vmatpush.xpose.msra.mxu0 0.0
        %3183 = vmatpush.xpose.msra.mxu0 0.0
        %3184 = vmatpush.xpose.msra.mxu0 0.0
        %v3185 = vand.u32 %v3116, 4294901760
        %v3186 = vsub.f32 %v3116, %v3185
        %3187 = vmatpush.xpose.msra.mxu0 %v3186
        %v3188 = vand.u32 %v1840, 4294901760
        %v3189 = vsub.f32 %v1840, %v3188
        %3190 = vmatmul.f32.gmra.mxu0 %v3189
        %v3191 = vpop.f32.mrf.mxu0
        %v3192 = vadd.f32 %v3168, %v3191
        %3193 = vdwg.mxu0
        %3194 = vmatpush.xpose.msra.mxu0 0.0
        %3195 = vmatpush.xpose.msra.mxu0 0.0
        %3196 = vmatpush.xpose.msra.mxu0 0.0
        %3197 = vmatpush.xpose.msra.mxu0 0.0
        %3198 = vmatpush.xpose.msra.mxu0 0.0
        %3199 = vmatpush.xpose.msra.mxu0 0.0
        %3200 = vmatpush.xpose.msra.mxu0 0.0
        %3201 = vmatpush.xpose.msra.mxu0 0.0
        %3202 = vmatpush.xpose.msra.mxu0 0.0
        %3203 = vmatpush.xpose.msra.mxu0 0.0
        %3204 = vmatpush.xpose.msra.mxu0 0.0
        %3205 = vmatpush.xpose.msra.mxu0 0.0
        %3206 = vmatpush.xpose.msra.mxu0 0.0
        %3207 = vmatpush.xpose.msra.mxu0 0.0
        %3208 = vmatpush.xpose.msra.mxu0 0.0
        %v3209 = vand.u32 %v3116, 4294901760
        %3210 = vmatpush.xpose.msra.mxu0 %v3209
        %v3211 = vand.u32 %v1840, 4294901760
        %v3212 = vsub.f32 %v1840, %v3211
        %v3213 = vand.u32 %v3212, 4294901760
        %3214 = vmatmul.f32.gmra.mxu0 %v3213
        %v3215 = vpop.f32.mrf.mxu0
        %v3216 = vadd.f32 %v3192, %v3215
        %3217 = vdwg.mxu0
        %3218 = vmatpush.xpose.msra.mxu0 0.0
        %3219 = vmatpush.xpose.msra.mxu0 0.0
        %3220 = vmatpush.xpose.msra.mxu0 0.0
        %3221 = vmatpush.xpose.msra.mxu0 0.0
        %3222 = vmatpush.xpose.msra.mxu0 0.0
        %3223 = vmatpush.xpose.msra.mxu0 0.0
        %3224 = vmatpush.xpose.msra.mxu0 0.0
        %3225 = vmatpush.xpose.msra.mxu0 0.0
        %3226 = vmatpush.xpose.msra.mxu0 0.0
        %3227 = vmatpush.xpose.msra.mxu0 0.0
        %3228 = vmatpush.xpose.msra.mxu0 0.0
        %3229 = vmatpush.xpose.msra.mxu0 0.0
        %3230 = vmatpush.xpose.msra.mxu0 0.0
        %3231 = vmatpush.xpose.msra.mxu0 0.0
        %3232 = vmatpush.xpose.msra.mxu0 0.0
        %v3233 = vand.u32 %v3116, 4294901760
        %v3234 = vsub.f32 %v3116, %v3233
        %v3235 = vand.u32 %v3234, 4294901760
        %3236 = vmatpush.xpose.msra.mxu0 %v3235
        %v3237 = vand.u32 %v1840, 4294901760
        %3238 = vmatmul.f32.gmra.mxu0 %v3237
        %v3239 = vpop.f32.mrf.mxu0
        %v3240 = vadd.f32 %v3216, %v3239
        %3241 = vdwg.mxu0
        %3242 = vmatpush.xpose.msra.mxu0 0.0
        %3243 = vmatpush.xpose.msra.mxu0 0.0
        %3244 = vmatpush.xpose.msra.mxu0 0.0
        %3245 = vmatpush.xpose.msra.mxu0 0.0
        %3246 = vmatpush.xpose.msra.mxu0 0.0
        %3247 = vmatpush.xpose.msra.mxu0 0.0
        %3248 = vmatpush.xpose.msra.mxu0 0.0
        %3249 = vmatpush.xpose.msra.mxu0 0.0
        %3250 = vmatpush.xpose.msra.mxu0 0.0
        %3251 = vmatpush.xpose.msra.mxu0 0.0
        %3252 = vmatpush.xpose.msra.mxu0 0.0
        %3253 = vmatpush.xpose.msra.mxu0 0.0
        %3254 = vmatpush.xpose.msra.mxu0 0.0
        %3255 = vmatpush.xpose.msra.mxu0 0.0
        %3256 = vmatpush.xpose.msra.mxu0 0.0
        %v3257 = vand.u32 %v3116, 4294901760
        %3258 = vmatpush.xpose.msra.mxu0 %v3257
        %v3259 = vand.u32 %v1840, 4294901760
        %3260 = vmatmul.f32.gmra.mxu0 %v3259
        %v3261 = vpop.f32.mrf.mxu0
        %v3262 = vadd.f32 %v3240, %v3261
        %3263 = vdwg.mxu0
        %v3264 = vsel %vm1350, %v3262, -inf
        %3265 = vmax.xlane.f32.xlu0 %v3264
        %v3266 = vpop.xlane.xlu0 %3265
        %v3267 = vsub.f32 %v3262, %v3266
        %v3268 = vmul.f32 %v3267, 1.442695
        %v3269 = vpow.pop %v3268
        %v3270 = vsel %vm1350, %v3269, 0.0
        %3271 = vadd.xlane.f32.xlu0 %v3270
        %v3272 = vpop.xlane.xlu0 %3271
        %v3273 = vrcp.pop %v3272
        %v3274 = vmul.f32 %v3269, %v3273
        %3275 = vrot.lane.b32.xlu0 %v1195, 64
        %v3276 = vpop.permute.xlu0 %3275
        %v3279 = vsel %vm1362, %v3274, 0
        %3281 = vmatpush.msra.mxu0 0.0
        %3282 = vmatpush.msra.mxu0 0.0
        %3283 = vmatpush.msra.mxu0 0.0
        %3284 = vmatpush.msra.mxu0 0.0
        %3285 = vmatpush.msra.mxu0 0.0
        %3286 = vmatpush.msra.mxu0 0.0
        %3287 = vmatpush.msra.mxu0 0.0
        %3288 = vmatpush.msra.mxu0 0.0
        %3289 = vmatpush.msra.mxu0 0.0
        %3290 = vmatpush.msra.mxu0 0.0
        %3291 = vmatpush.msra.mxu0 0.0
        %3292 = vmatpush.msra.mxu0 0.0
        %3293 = vmatpush.msra.mxu0 0.0
        %3294 = vmatpush.msra.mxu0 0.0
        %3295 = vmatpush.msra.mxu0 0.0
        %v3296 = vand.u32 %v3276, 4294901760
        %3297 = vmatpush.msra.mxu0 %v3296
        %v3298 = vand.u32 %v3279, 4294901760
        %v3299 = vsub.f32 %v3279, %v3298
        %v3300 = vand.u32 %v3299, 4294901760
        %v3301 = vsub.f32 %v3299, %v3300
        %v3302 = vand.u32 %v3301, 4294901760
        %3303 = vmatmul.f32.gmra.mxu0 %v3302
        %v3304 = vpop.f32.mrf.mxu0
        %v3305 = vadd.f32 0.0, %v3304
        %3306 = vdwg.mxu0
        %3307 = vmatpush.msra.mxu0 0.0
        %3308 = vmatpush.msra.mxu0 0.0
        %3309 = vmatpush.msra.mxu0 0.0
        %3310 = vmatpush.msra.mxu0 0.0
        %3311 = vmatpush.msra.mxu0 0.0
        %3312 = vmatpush.msra.mxu0 0.0
        %3313 = vmatpush.msra.mxu0 0.0
        %3314 = vmatpush.msra.mxu0 0.0
        %3315 = vmatpush.msra.mxu0 0.0
        %3316 = vmatpush.msra.mxu0 0.0
        %3317 = vmatpush.msra.mxu0 0.0
        %3318 = vmatpush.msra.mxu0 0.0
        %3319 = vmatpush.msra.mxu0 0.0
        %3320 = vmatpush.msra.mxu0 0.0
        %3321 = vmatpush.msra.mxu0 0.0
        %v3322 = vand.u32 %v3276, 4294901760
        %v3323 = vsub.f32 %v3276, %v3322
        %v3324 = vand.u32 %v3323, 4294901760
        %v3325 = vsub.f32 %v3323, %v3324
        %v3326 = vand.u32 %v3325, 4294901760
        %3327 = vmatpush.msra.mxu0 %v3326
        %v3328 = vand.u32 %v3279, 4294901760
        %3329 = vmatmul.f32.gmra.mxu0 %v3328
        %v3330 = vpop.f32.mrf.mxu0
        %v3331 = vadd.f32 %v3305, %v3330
        %3332 = vdwg.mxu0
        %3333 = vmatpush.msra.mxu0 0.0
        %3334 = vmatpush.msra.mxu0 0.0
        %3335 = vmatpush.msra.mxu0 0.0
        %3336 = vmatpush.msra.mxu0 0.0
        %3337 = vmatpush.msra.mxu0 0.0
        %3338 = vmatpush.msra.mxu0 0.0
        %3339 = vmatpush.msra.mxu0 0.0
        %3340 = vmatpush.msra.mxu0 0.0
        %3341 = vmatpush.msra.mxu0 0.0
        %3342 = vmatpush.msra.mxu0 0.0
        %3343 = vmatpush.msra.mxu0 0.0
        %3344 = vmatpush.msra.mxu0 0.0
        %3345 = vmatpush.msra.mxu0 0.0
        %3346 = vmatpush.msra.mxu0 0.0
        %3347 = vmatpush.msra.mxu0 0.0
        %v3348 = vand.u32 %v3276, 4294901760
        %v3349 = vsub.f32 %v3276, %v3348
        %3350 = vmatpush.msra.mxu0 %v3349
        %v3351 = vand.u32 %v3279, 4294901760
        %v3352 = vsub.f32 %v3279, %v3351
        %3353 = vmatmul.f32.gmra.mxu0 %v3352
        %v3354 = vpop.f32.mrf.mxu0
        %v3355 = vadd.f32 %v3331, %v3354
        %3356 = vdwg.mxu0
        %3357 = vmatpush.msra.mxu0 0.0
        %3358 = vmatpush.msra.mxu0 0.0
        %3359 = vmatpush.msra.mxu0 0.0
        %3360 = vmatpush.msra.mxu0 0.0
        %3361 = vmatpush.msra.mxu0 0.0
        %3362 = vmatpush.msra.mxu0 0.0
        %3363 = vmatpush.msra.mxu0 0.0
        %3364 = vmatpush.msra.mxu0 0.0
        %3365 = vmatpush.msra.mxu0 0.0
        %3366 = vmatpush.msra.mxu0 0.0
        %3367 = vmatpush.msra.mxu0 0.0
        %3368 = vmatpush.msra.mxu0 0.0
        %3369 = vmatpush.msra.mxu0 0.0
        %3370 = vmatpush.msra.mxu0 0.0
        %3371 = vmatpush.msra.mxu0 0.0
        %v3372 = vand.u32 %v3276, 4294901760
        %3373 = vmatpush.msra.mxu0 %v3372
        %v3374 = vand.u32 %v3279, 4294901760
        %v3375 = vsub.f32 %v3279, %v3374
        %v3376 = vand.u32 %v3375, 4294901760
        %3377 = vmatmul.f32.gmra.mxu0 %v3376
        %v3378 = vpop.f32.mrf.mxu0
        %v3379 = vadd.f32 %v3355, %v3378
        %3380 = vdwg.mxu0
        %3381 = vmatpush.msra.mxu0 0.0
        %3382 = vmatpush.msra.mxu0 0.0
        %3383 = vmatpush.msra.mxu0 0.0
        %3384 = vmatpush.msra.mxu0 0.0
        %3385 = vmatpush.msra.mxu0 0.0
        %3386 = vmatpush.msra.mxu0 0.0
        %3387 = vmatpush.msra.mxu0 0.0
        %3388 = vmatpush.msra.mxu0 0.0
        %3389 = vmatpush.msra.mxu0 0.0
        %3390 = vmatpush.msra.mxu0 0.0
        %3391 = vmatpush.msra.mxu0 0.0
        %3392 = vmatpush.msra.mxu0 0.0
        %3393 = vmatpush.msra.mxu0 0.0
        %3394 = vmatpush.msra.mxu0 0.0
        %3395 = vmatpush.msra.mxu0 0.0
        %v3396 = vand.u32 %v3276, 4294901760
        %v3397 = vsub.f32 %v3276, %v3396
        %v3398 = vand.u32 %v3397, 4294901760
        %3399 = vmatpush.msra.mxu0 %v3398
        %v3400 = vand.u32 %v3279, 4294901760
        %3401 = vmatmul.f32.gmra.mxu0 %v3400
        %v3402 = vpop.f32.mrf.mxu0
        %v3403 = vadd.f32 %v3379, %v3402
        %3404 = vdwg.mxu0
        %3405 = vmatpush.msra.mxu0 0.0
        %3406 = vmatpush.msra.mxu0 0.0
        %3407 = vmatpush.msra.mxu0 0.0
        %3408 = vmatpush.msra.mxu0 0.0
        %3409 = vmatpush.msra.mxu0 0.0
        %3410 = vmatpush.msra.mxu0 0.0
        %3411 = vmatpush.msra.mxu0 0.0
        %3412 = vmatpush.msra.mxu0 0.0
        %3413 = vmatpush.msra.mxu0 0.0
        %3414 = vmatpush.msra.mxu0 0.0
        %3415 = vmatpush.msra.mxu0 0.0
        %3416 = vmatpush.msra.mxu0 0.0
        %3417 = vmatpush.msra.mxu0 0.0
        %3418 = vmatpush.msra.mxu0 0.0
        %3419 = vmatpush.msra.mxu0 0.0
        %v3420 = vand.u32 %v3276, 4294901760
        %3421 = vmatpush.msra.mxu0 %v3420
        %v3422 = vand.u32 %v3279, 4294901760
        %3423 = vmatmul.f32.gmra.mxu0 %v3422
        %v3424 = vpop.f32.mrf.mxu0
        %v3425 = vadd.f32 %v3403, %v3424
        %3426 = vdwg.mxu0
        %3428 = vrot.lane.b32.xlu0 %v3425, 64
        %v3429 = vpop.permute.xlu0 %3428
        %v3431 = vadd.f32 %v586, %v3429
        %3432 = vrot.lane.b32.xlu0 %v919, 32
        %v3433 = vpop.permute.xlu0 %3432
        %v3434 = vsel %vm1197, %v3433, 0
        %3436 = vmatpush.xpose.msra.mxu0 0.0
        %3437 = vmatpush.xpose.msra.mxu0 0.0
        %3438 = vmatpush.xpose.msra.mxu0 0.0
        %3439 = vmatpush.xpose.msra.mxu0 0.0
        %3440 = vmatpush.xpose.msra.mxu0 0.0
        %3441 = vmatpush.xpose.msra.mxu0 0.0
        %3442 = vmatpush.xpose.msra.mxu0 0.0
        %3443 = vmatpush.xpose.msra.mxu0 0.0
        %3444 = vmatpush.xpose.msra.mxu0 0.0
        %3445 = vmatpush.xpose.msra.mxu0 0.0
        %3446 = vmatpush.xpose.msra.mxu0 0.0
        %3447 = vmatpush.xpose.msra.mxu0 0.0
        %3448 = vmatpush.xpose.msra.mxu0 0.0
        %3449 = vmatpush.xpose.msra.mxu0 0.0
        %3450 = vmatpush.xpose.msra.mxu0 0.0
        %v3451 = vand.u32 %v3434, 4294901760
        %3452 = vmatpush.xpose.msra.mxu0 %v3451
        %v3453 = vand.u32 %v2162, 4294901760
        %v3454 = vsub.f32 %v2162, %v3453
        %v3455 = vand.u32 %v3454, 4294901760
        %v3456 = vsub.f32 %v3454, %v3455
        %v3457 = vand.u32 %v3456, 4294901760
        %3458 = vmatmul.f32.gmra.mxu0 %v3457
        %v3459 = vpop.f32.mrf.mxu0
        %v3460 = vadd.f32 0.0, %v3459
        %3461 = vdwg.mxu0
        %3462 = vmatpush.xpose.msra.mxu0 0.0
        %3463 = vmatpush.xpose.msra.mxu0 0.0
        %3464 = vmatpush.xpose.msra.mxu0 0.0
        %3465 = vmatpush.xpose.msra.mxu0 0.0
        %3466 = vmatpush.xpose.msra.mxu0 0.0
        %3467 = vmatpush.xpose.msra.mxu0 0.0
        %3468 = vmatpush.xpose.msra.mxu0 0.0
        %3469 = vmatpush.xpose.msra.mxu0 0.0
        %3470 = vmatpush.xpose.msra.mxu0 0.0
        %3471 = vmatpush.xpose.msra.mxu0 0.0
        %3472 = vmatpush.xpose.msra.mxu0 0.0
        %3473 = vmatpush.xpose.msra.mxu0 0.0
        %3474 = vmatpush.xpose.msra.mxu0 0.0
        %3475 = vmatpush.xpose.msra.mxu0 0.0
        %3476 = vmatpush.xpose.msra.mxu0 0.0
        %v3477 = vand.u32 %v3434, 4294901760
        %v3478 = vsub.f32 %v3434, %v3477
        %v3479 = vand.u32 %v3478, 4294901760
        %v3480 = vsub.f32 %v3478, %v3479
        %v3481 = vand.u32 %v3480, 4294901760
        %3482 = vmatpush.xpose.msra.mxu0 %v3481
        %v3483 = vand.u32 %v2162, 4294901760
        %3484 = vmatmul.f32.gmra.mxu0 %v3483
        %v3485 = vpop.f32.mrf.mxu0
        %v3486 = vadd.f32 %v3460, %v3485
        %3487 = vdwg.mxu0
        %3488 = vmatpush.xpose.msra.mxu0 0.0
        %3489 = vmatpush.xpose.msra.mxu0 0.0
        %3490 = vmatpush.xpose.msra.mxu0 0.0
        %3491 = vmatpush.xpose.msra.mxu0 0.0
        %3492 = vmatpush.xpose.msra.mxu0 0.0
        %3493 = vmatpush.xpose.msra.mxu0 0.0
        %3494 = vmatpush.xpose.msra.mxu0 0.0
        %3495 = vmatpush.xpose.msra.mxu0 0.0
        %3496 = vmatpush.xpose.msra.mxu0 0.0
        %3497 = vmatpush.xpose.msra.mxu0 0.0
        %3498 = vmatpush.xpose.msra.mxu0 0.0
        %3499 = vmatpush.xpose.msra.mxu0 0.0
        %3500 = vmatpush.xpose.msra.mxu0 0.0
        %3501 = vmatpush.xpose.msra.mxu0 0.0
        %3502 = vmatpush.xpose.msra.mxu0 0.0
        %v3503 = vand.u32 %v3434, 4294901760
        %v3504 = vsub.f32 %v3434, %v3503
        %3505 = vmatpush.xpose.msra.mxu0 %v3504
        %v3506 = vand.u32 %v2162, 4294901760
        %v3507 = vsub.f32 %v2162, %v3506
        %3508 = vmatmul.f32.gmra.mxu0 %v3507
        %v3509 = vpop.f32.mrf.mxu0
        %v3510 = vadd.f32 %v3486, %v3509
        %3511 = vdwg.mxu0
        %3512 = vmatpush.xpose.msra.mxu0 0.0
        %3513 = vmatpush.xpose.msra.mxu0 0.0
        %3514 = vmatpush.xpose.msra.mxu0 0.0
        %3515 = vmatpush.xpose.msra.mxu0 0.0
        %3516 = vmatpush.xpose.msra.mxu0 0.0
        %3517 = vmatpush.xpose.msra.mxu0 0.0
        %3518 = vmatpush.xpose.msra.mxu0 0.0
        %3519 = vmatpush.xpose.msra.mxu0 0.0
        %3520 = vmatpush.xpose.msra.mxu0 0.0
        %3521 = vmatpush.xpose.msra.mxu0 0.0
        %3522 = vmatpush.xpose.msra.mxu0 0.0
        %3523 = vmatpush.xpose.msra.mxu0 0.0
        %3524 = vmatpush.xpose.msra.mxu0 0.0
        %3525 = vmatpush.xpose.msra.mxu0 0.0
        %3526 = vmatpush.xpose.msra.mxu0 0.0
        %v3527 = vand.u32 %v3434, 4294901760
        %3528 = vmatpush.xpose.msra.mxu0 %v3527
        %v3529 = vand.u32 %v2162, 4294901760
        %v3530 = vsub.f32 %v2162, %v3529
        %v3531 = vand.u32 %v3530, 4294901760
        %3532 = vmatmul.f32.gmra.mxu0 %v3531
        %v3533 = vpop.f32.mrf.mxu0
        %v3534 = vadd.f32 %v3510, %v3533
        %3535 = vdwg.mxu0
        %3536 = vmatpush.xpose.msra.mxu0 0.0
        %3537 = vmatpush.xpose.msra.mxu0 0.0
        %3538 = vmatpush.xpose.msra.mxu0 0.0
        %3539 = vmatpush.xpose.msra.mxu0 0.0
        %3540 = vmatpush.xpose.msra.mxu0 0.0
        %3541 = vmatpush.xpose.msra.mxu0 0.0
        %3542 = vmatpush.xpose.msra.mxu0 0.0
        %3543 = vmatpush.xpose.msra.mxu0 0.0
        %3544 = vmatpush.xpose.msra.mxu0 0.0
        %3545 = vmatpush.xpose.msra.mxu0 0.0
        %3546 = vmatpush.xpose.msra.mxu0 0.0
        %3547 = vmatpush.xpose.msra.mxu0 0.0
        %3548 = vmatpush.xpose.msra.mxu0 0.0
        %3549 = vmatpush.xpose.msra.mxu0 0.0
        %3550 = vmatpush.xpose.msra.mxu0 0.0
        %v3551 = vand.u32 %v3434, 4294901760
        %v3552 = vsub.f32 %v3434, %v3551
        %v3553 = vand.u32 %v3552, 4294901760
        %3554 = vmatpush.xpose.msra.mxu0 %v3553
        %v3555 = vand.u32 %v2162, 4294901760
        %3556 = vmatmul.f32.gmra.mxu0 %v3555
        %v3557 = vpop.f32.mrf.mxu0
        %v3558 = vadd.f32 %v3534, %v3557
        %3559 = vdwg.mxu0
        %3560 = vmatpush.xpose.msra.mxu0 0.0
        %3561 = vmatpush.xpose.msra.mxu0 0.0
        %3562 = vmatpush.xpose.msra.mxu0 0.0
        %3563 = vmatpush.xpose.msra.mxu0 0.0
        %3564 = vmatpush.xpose.msra.mxu0 0.0
        %3565 = vmatpush.xpose.msra.mxu0 0.0
        %3566 = vmatpush.xpose.msra.mxu0 0.0
        %3567 = vmatpush.xpose.msra.mxu0 0.0
        %3568 = vmatpush.xpose.msra.mxu0 0.0
        %3569 = vmatpush.xpose.msra.mxu0 0.0
        %3570 = vmatpush.xpose.msra.mxu0 0.0
        %3571 = vmatpush.xpose.msra.mxu0 0.0
        %3572 = vmatpush.xpose.msra.mxu0 0.0
        %3573 = vmatpush.xpose.msra.mxu0 0.0
        %3574 = vmatpush.xpose.msra.mxu0 0.0
        %v3575 = vand.u32 %v3434, 4294901760
        %3576 = vmatpush.xpose.msra.mxu0 %v3575
        %v3577 = vand.u32 %v2162, 4294901760
        %3578 = vmatmul.f32.gmra.mxu0 %v3577
        %v3579 = vpop.f32.mrf.mxu0
        %v3580 = vadd.f32 %v3558, %v3579
        %3581 = vdwg.mxu0
        %v3582 = vsel %vm1350, %v3580, -inf
        %3583 = vmax.xlane.f32.xlu0 %v3582
        %v3584 = vpop.xlane.xlu0 %3583
        %v3585 = vsub.f32 %v3580, %v3584
        %v3586 = vmul.f32 %v3585, 1.442695
        %v3587 = vpow.pop %v3586
        %v3588 = vsel %vm1350, %v3587, 0.0
        %3589 = vadd.xlane.f32.xlu0 %v3588
        %v3590 = vpop.xlane.xlu0 %3589
        %v3591 = vrcp.pop %v3590
        %v3592 = vmul.f32 %v3587, %v3591
        %3593 = vrot.lane.b32.xlu0 %v1195, 32
        %v3594 = vpop.permute.xlu0 %3593
        %v3597 = vsel %vm1362, %v3592, 0
        %3599 = vmatpush.msra.mxu0 0.0
        %3600 = vmatpush.msra.mxu0 0.0
        %3601 = vmatpush.msra.mxu0 0.0
        %3602 = vmatpush.msra.mxu0 0.0
        %3603 = vmatpush.msra.mxu0 0.0
        %3604 = vmatpush.msra.mxu0 0.0
        %3605 = vmatpush.msra.mxu0 0.0
        %3606 = vmatpush.msra.mxu0 0.0
        %3607 = vmatpush.msra.mxu0 0.0
        %3608 = vmatpush.msra.mxu0 0.0
        %3609 = vmatpush.msra.mxu0 0.0
        %3610 = vmatpush.msra.mxu0 0.0
        %3611 = vmatpush.msra.mxu0 0.0
        %3612 = vmatpush.msra.mxu0 0.0
        %3613 = vmatpush.msra.mxu0 0.0
        %v3614 = vand.u32 %v3594, 4294901760
        %3615 = vmatpush.msra.mxu0 %v3614
        %v3616 = vand.u32 %v3597, 4294901760
        %v3617 = vsub.f32 %v3597, %v3616
        %v3618 = vand.u32 %v3617, 4294901760
        %v3619 = vsub.f32 %v3617, %v3618
        %v3620 = vand.u32 %v3619, 4294901760
        %3621 = vmatmul.f32.gmra.mxu0 %v3620
        %v3622 = vpop.f32.mrf.mxu0
        %v3623 = vadd.f32 0.0, %v3622
        %3624 = vdwg.mxu0
        %3625 = vmatpush.msra.mxu0 0.0
        %3626 = vmatpush.msra.mxu0 0.0
        %3627 = vmatpush.msra.mxu0 0.0
        %3628 = vmatpush.msra.mxu0 0.0
        %3629 = vmatpush.msra.mxu0 0.0
        %3630 = vmatpush.msra.mxu0 0.0
        %3631 = vmatpush.msra.mxu0 0.0
        %3632 = vmatpush.msra.mxu0 0.0
        %3633 = vmatpush.msra.mxu0 0.0
        %3634 = vmatpush.msra.mxu0 0.0
        %3635 = vmatpush.msra.mxu0 0.0
        %3636 = vmatpush.msra.mxu0 0.0
        %3637 = vmatpush.msra.mxu0 0.0
        %3638 = vmatpush.msra.mxu0 0.0
        %3639 = vmatpush.msra.mxu0 0.0
        %v3640 = vand.u32 %v3594, 4294901760
        %v3641 = vsub.f32 %v3594, %v3640
        %v3642 = vand.u32 %v3641, 4294901760
        %v3643 = vsub.f32 %v3641, %v3642
        %v3644 = vand.u32 %v3643, 4294901760
        %3645 = vmatpush.msra.mxu0 %v3644
        %v3646 = vand.u32 %v3597, 4294901760
        %3647 = vmatmul.f32.gmra.mxu0 %v3646
        %v3648 = vpop.f32.mrf.mxu0
        %v3649 = vadd.f32 %v3623, %v3648
        %3650 = vdwg.mxu0
        %3651 = vmatpush.msra.mxu0 0.0
        %3652 = vmatpush.msra.mxu0 0.0
        %3653 = vmatpush.msra.mxu0 0.0
        %3654 = vmatpush.msra.mxu0 0.0
        %3655 = vmatpush.msra.mxu0 0.0
        %3656 = vmatpush.msra.mxu0 0.0
        %3657 = vmatpush.msra.mxu0 0.0
        %3658 = vmatpush.msra.mxu0 0.0
        %3659 = vmatpush.msra.mxu0 0.0
        %3660 = vmatpush.msra.mxu0 0.0
        %3661 = vmatpush.msra.mxu0 0.0
        %3662 = vmatpush.msra.mxu0 0.0
        %3663 = vmatpush.msra.mxu0 0.0
        %3664 = vmatpush.msra.mxu0 0.0
        %3665 = vmatpush.msra.mxu0 0.0
        %v3666 = vand.u32 %v3594, 4294901760
        %v3667 = vsub.f32 %v3594, %v3666
        %3668 = vmatpush.msra.mxu0 %v3667
        %v3669 = vand.u32 %v3597, 4294901760
        %v3670 = vsub.f32 %v3597, %v3669
        %3671 = vmatmul.f32.gmra.mxu0 %v3670
        %v3672 = vpop.f32.mrf.mxu0
        %v3673 = vadd.f32 %v3649, %v3672
        %3674 = vdwg.mxu0
        %3675 = vmatpush.msra.mxu0 0.0
        %3676 = vmatpush.msra.mxu0 0.0
        %3677 = vmatpush.msra.mxu0 0.0
        %3678 = vmatpush.msra.mxu0 0.0
        %3679 = vmatpush.msra.mxu0 0.0
        %3680 = vmatpush.msra.mxu0 0.0
        %3681 = vmatpush.msra.mxu0 0.0
        %3682 = vmatpush.msra.mxu0 0.0
        %3683 = vmatpush.msra.mxu0 0.0
        %3684 = vmatpush.msra.mxu0 0.0
        %3685 = vmatpush.msra.mxu0 0.0
        %3686 = vmatpush.msra.mxu0 0.0
        %3687 = vmatpush.msra.mxu0 0.0
        %3688 = vmatpush.msra.mxu0 0.0
        %3689 = vmatpush.msra.mxu0 0.0
        %v3690 = vand.u32 %v3594, 4294901760
        %3691 = vmatpush.msra.mxu0 %v3690
        %v3692 = vand.u32 %v3597, 4294901760
        %v3693 = vsub.f32 %v3597, %v3692
        %v3694 = vand.u32 %v3693, 4294901760
        %3695 = vmatmul.f32.gmra.mxu0 %v3694
        %v3696 = vpop.f32.mrf.mxu0
        %v3697 = vadd.f32 %v3673, %v3696
        %3698 = vdwg.mxu0
        %3699 = vmatpush.msra.mxu0 0.0
        %3700 = vmatpush.msra.mxu0 0.0
        %3701 = vmatpush.msra.mxu0 0.0
        %3702 = vmatpush.msra.mxu0 0.0
        %3703 = vmatpush.msra.mxu0 0.0
        %3704 = vmatpush.msra.mxu0 0.0
        %3705 = vmatpush.msra.mxu0 0.0
        %3706 = vmatpush.msra.mxu0 0.0
        %3707 = vmatpush.msra.mxu0 0.0
        %3708 = vmatpush.msra.mxu0 0.0
        %3709 = vmatpush.msra.mxu0 0.0
        %3710 = vmatpush.msra.mxu0 0.0
        %3711 = vmatpush.msra.mxu0 0.0
        %3712 = vmatpush.msra.mxu0 0.0
        %3713 = vmatpush.msra.mxu0 0.0
        %v3714 = vand.u32 %v3594, 4294901760
        %v3715 = vsub.f32 %v3594, %v3714
        %v3716 = vand.u32 %v3715, 4294901760
        %3717 = vmatpush.msra.mxu0 %v3716
        %v3718 = vand.u32 %v3597, 4294901760
        %3719 = vmatmul.f32.gmra.mxu0 %v3718
        %v3720 = vpop.f32.mrf.mxu0
        %v3721 = vadd.f32 %v3697, %v3720
        %3722 = vdwg.mxu0
        %3723 = vmatpush.msra.mxu0 0.0
        %3724 = vmatpush.msra.mxu0 0.0
        %3725 = vmatpush.msra.mxu0 0.0
        %3726 = vmatpush.msra.mxu0 0.0
        %3727 = vmatpush.msra.mxu0 0.0
        %3728 = vmatpush.msra.mxu0 0.0
        %3729 = vmatpush.msra.mxu0 0.0
        %3730 = vmatpush.msra.mxu0 0.0
        %3731 = vmatpush.msra.mxu0 0.0
        %3732 = vmatpush.msra.mxu0 0.0
        %3733 = vmatpush.msra.mxu0 0.0
        %3734 = vmatpush.msra.mxu0 0.0
        %3735 = vmatpush.msra.mxu0 0.0
        %3736 = vmatpush.msra.mxu0 0.0
        %3737 = vmatpush.msra.mxu0 0.0
        %v3738 = vand.u32 %v3594, 4294901760
        %3739 = vmatpush.msra.mxu0 %v3738
        %v3740 = vand.u32 %v3597, 4294901760
        %3741 = vmatmul.f32.gmra.mxu0 %v3740
        %v3742 = vpop.f32.mrf.mxu0
        %v3743 = vadd.f32 %v3721, %v3742
        %3744 = vdwg.mxu0
        %3746 = vrot.lane.b32.xlu0 %v3743, 96
        %v3747 = vpop.permute.xlu0 %3746
        %v3749 = vadd.f32 %v586, %v3747
        %v3750 = vsel %vm1197, %v2794, %v3113
        %v3751 = vsel %vm2481, %v3750, %v3431
        %v3752 = vsel %vm2483, %v3751, %v3749
        %v3754 = vrot.slane %v3752, 4
        %vm3756 = vcmask 1043456
        %v3757 = vsel %vm3756, %v2484, %v3754
        %v3758 = vld [vmem:[%s6] sm:$0xf]
        %v3759 = vld [vmem:[%s6 + $0x4] sm:$0xf]
        %v3760 = vld [vmem:[%s6 + $0x8] sm:$0xf]
        %v3761 = vld [vmem:[%s6 + $0xc] sm:$0xf]
        %v3762 = vld [vmem:[%s6 + $0x10] sm:$0xf]
        %v3763 = vld [vmem:[%s6 + $0x14] sm:$0xf]
        %v3764 = vld [vmem:[%s6 + $0x18] sm:$0xf]
        %v3765 = vld [vmem:[%s6 + $0x1c] sm:$0xf]
        %v3766 = vld [vmem:[%s6 + $0x20] sm:$0xf]
        %v3767 = vld [vmem:[%s6 + $0x24] sm:$0xf]
        %v3768 = vld [vmem:[%s6 + $0x28] sm:$0xf]
        %v3769 = vld [vmem:[%s6 + $0x2c] sm:$0xf]
        %v3770 = vld [vmem:[%s6 + $0x30] sm:$0xf]
        %v3771 = vld [vmem:[%s6 + $0x34] sm:$0xf]
        %v3772 = vld [vmem:[%s6 + $0x38] sm:$0xf]
        %v3773 = vld [vmem:[%s6 + $0x3c] sm:$0xf]
        %v3774 = vunpack.c.l.bf16 %v3758
        %v3775 = vunpack.c.l.bf16 %v3759
        %v3776 = vunpack.c.l.bf16 %v3760
        %v3777 = vunpack.c.l.bf16 %v3761
        %v3778 = vunpack.c.l.bf16 %v3762
        %v3779 = vunpack.c.l.bf16 %v3763
        %v3780 = vunpack.c.l.bf16 %v3764
        %v3781 = vunpack.c.l.bf16 %v3765
        %v3782 = vunpack.c.l.bf16 %v3766
        %v3783 = vunpack.c.l.bf16 %v3767
        %v3784 = vunpack.c.l.bf16 %v3768
        %v3785 = vunpack.c.l.bf16 %v3769
        %v3786 = vunpack.c.l.bf16 %v3770
        %v3787 = vunpack.c.l.bf16 %v3771
        %v3788 = vunpack.c.l.bf16 %v3772
        %v3789 = vunpack.c.l.bf16 %v3773
        %v3790 = vld [vmem:[%s7] sm:$0x1]
        %v3792 = vperm.slane %v3790, 0
        %3794 = vmatpush.msra.mxu0 %v3789
        %3795 = vmatpush.msra.mxu0 %v3788
        %3796 = vmatpush.msra.mxu0 %v3787
        %3797 = vmatpush.msra.mxu0 %v3786
        %3798 = vmatpush.msra.mxu0 %v3785
        %3799 = vmatpush.msra.mxu0 %v3784
        %3800 = vmatpush.msra.mxu0 %v3783
        %3801 = vmatpush.msra.mxu0 %v3782
        %3802 = vmatpush.msra.mxu0 %v3781
        %3803 = vmatpush.msra.mxu0 %v3780
        %3804 = vmatpush.msra.mxu0 %v3779
        %3805 = vmatpush.msra.mxu0 %v3778
        %3806 = vmatpush.msra.mxu0 %v3777
        %3807 = vmatpush.msra.mxu0 %v3776
        %3808 = vmatpush.msra.mxu0 %v3775
        %3809 = vmatpush.msra.mxu0 %v3774
        %v3810 = vand.u32 %v3757, 4294901760
        %v3811 = vsub.f32 %v3757, %v3810
        %v3812 = vand.u32 %v3811, 4294901760
        %v3813 = vsub.f32 %v3811, %v3812
        %v3814 = vand.u32 %v3813, 4294901760
        %3815 = vmatmul.f32.gmra.mxu0 %v3814
        %v3816 = vpop.f32.mrf.mxu0
        %v3817 = vadd.f32 %v3792, %v3816
        %3818 = vdwg.mxu0
        %v3819 = vsub.f32 %v3789, %v3789
        %v3820 = vand.u32 %v3819, 4294901760
        %v3821 = vsub.f32 %v3819, %v3820
        %v3822 = vand.u32 %v3821, 4294901760
        %3823 = vmatpush.msra.mxu0 %v3822
        %v3824 = vsub.f32 %v3788, %v3788
        %v3825 = vand.u32 %v3824, 4294901760
        %v3826 = vsub.f32 %v3824, %v3825
        %v3827 = vand.u32 %v3826, 4294901760
        %3828 = vmatpush.msra.mxu0 %v3827
        %v3829 = vsub.f32 %v3787, %v3787
        %v3830 = vand.u32 %v3829, 4294901760
        %v3831 = vsub.f32 %v3829, %v3830
        %v3832 = vand.u32 %v3831, 4294901760
        %3833 = vmatpush.msra.mxu0 %v3832
        %v3834 = vsub.f32 %v3786, %v3786
        %v3835 = vand.u32 %v3834, 4294901760
        %v3836 = vsub.f32 %v3834, %v3835
        %v3837 = vand.u32 %v3836, 4294901760
        %3838 = vmatpush.msra.mxu0 %v3837
        %v3839 = vsub.f32 %v3785, %v3785
        %v3840 = vand.u32 %v3839, 4294901760
        %v3841 = vsub.f32 %v3839, %v3840
        %v3842 = vand.u32 %v3841, 4294901760
        %3843 = vmatpush.msra.mxu0 %v3842
        %v3844 = vsub.f32 %v3784, %v3784
        %v3845 = vand.u32 %v3844, 4294901760
        %v3846 = vsub.f32 %v3844, %v3845
        %v3847 = vand.u32 %v3846, 4294901760
        %3848 = vmatpush.msra.mxu0 %v3847
        %v3849 = vsub.f32 %v3783, %v3783
        %v3850 = vand.u32 %v3849, 4294901760
        %v3851 = vsub.f32 %v3849, %v3850
        %v3852 = vand.u32 %v3851, 4294901760
        %3853 = vmatpush.msra.mxu0 %v3852
        %v3854 = vsub.f32 %v3782, %v3782
        %v3855 = vand.u32 %v3854, 4294901760
        %v3856 = vsub.f32 %v3854, %v3855
        %v3857 = vand.u32 %v3856, 4294901760
        %3858 = vmatpush.msra.mxu0 %v3857
        %v3859 = vsub.f32 %v3781, %v3781
        %v3860 = vand.u32 %v3859, 4294901760
        %v3861 = vsub.f32 %v3859, %v3860
        %v3862 = vand.u32 %v3861, 4294901760
        %3863 = vmatpush.msra.mxu0 %v3862
        %v3864 = vsub.f32 %v3780, %v3780
        %v3865 = vand.u32 %v3864, 4294901760
        %v3866 = vsub.f32 %v3864, %v3865
        %v3867 = vand.u32 %v3866, 4294901760
        %3868 = vmatpush.msra.mxu0 %v3867
        %v3869 = vsub.f32 %v3779, %v3779
        %v3870 = vand.u32 %v3869, 4294901760
        %v3871 = vsub.f32 %v3869, %v3870
        %v3872 = vand.u32 %v3871, 4294901760
        %3873 = vmatpush.msra.mxu0 %v3872
        %v3874 = vsub.f32 %v3778, %v3778
        %v3875 = vand.u32 %v3874, 4294901760
        %v3876 = vsub.f32 %v3874, %v3875
        %v3877 = vand.u32 %v3876, 4294901760
        %3878 = vmatpush.msra.mxu0 %v3877
        %v3879 = vsub.f32 %v3777, %v3777
        %v3880 = vand.u32 %v3879, 4294901760
        %v3881 = vsub.f32 %v3879, %v3880
        %v3882 = vand.u32 %v3881, 4294901760
        %3883 = vmatpush.msra.mxu0 %v3882
        %v3884 = vsub.f32 %v3776, %v3776
        %v3885 = vand.u32 %v3884, 4294901760
        %v3886 = vsub.f32 %v3884, %v3885
        %v3887 = vand.u32 %v3886, 4294901760
        %3888 = vmatpush.msra.mxu0 %v3887
        %v3889 = vsub.f32 %v3775, %v3775
        %v3890 = vand.u32 %v3889, 4294901760
        %v3891 = vsub.f32 %v3889, %v3890
        %v3892 = vand.u32 %v3891, 4294901760
        %3893 = vmatpush.msra.mxu0 %v3892
        %v3894 = vsub.f32 %v3774, %v3774
        %v3895 = vand.u32 %v3894, 4294901760
        %v3896 = vsub.f32 %v3894, %v3895
        %v3897 = vand.u32 %v3896, 4294901760
        %3898 = vmatpush.msra.mxu0 %v3897
        %v3899 = vand.u32 %v3757, 4294901760
        %3900 = vmatmul.f32.gmra.mxu0 %v3899
        %v3901 = vpop.f32.mrf.mxu0
        %v3902 = vadd.f32 %v3817, %v3901
        %3903 = vdwg.mxu0
        %v3904 = vsub.f32 %v3789, %v3789
        %3905 = vmatpush.msra.mxu0 %v3904
        %v3906 = vsub.f32 %v3788, %v3788
        %3907 = vmatpush.msra.mxu0 %v3906
        %v3908 = vsub.f32 %v3787, %v3787
        %3909 = vmatpush.msra.mxu0 %v3908
        %v3910 = vsub.f32 %v3786, %v3786
        %3911 = vmatpush.msra.mxu0 %v3910
        %v3912 = vsub.f32 %v3785, %v3785
        %3913 = vmatpush.msra.mxu0 %v3912
        %v3914 = vsub.f32 %v3784, %v3784
        %3915 = vmatpush.msra.mxu0 %v3914
        %v3916 = vsub.f32 %v3783, %v3783
        %3917 = vmatpush.msra.mxu0 %v3916
        %v3918 = vsub.f32 %v3782, %v3782
        %3919 = vmatpush.msra.mxu0 %v3918
        %v3920 = vsub.f32 %v3781, %v3781
        %3921 = vmatpush.msra.mxu0 %v3920
        %v3922 = vsub.f32 %v3780, %v3780
        %3923 = vmatpush.msra.mxu0 %v3922
        %v3924 = vsub.f32 %v3779, %v3779
        %3925 = vmatpush.msra.mxu0 %v3924
        %v3926 = vsub.f32 %v3778, %v3778
        %3927 = vmatpush.msra.mxu0 %v3926
        %v3928 = vsub.f32 %v3777, %v3777
        %3929 = vmatpush.msra.mxu0 %v3928
        %v3930 = vsub.f32 %v3776, %v3776
        %3931 = vmatpush.msra.mxu0 %v3930
        %v3932 = vsub.f32 %v3775, %v3775
        %3933 = vmatpush.msra.mxu0 %v3932
        %v3934 = vsub.f32 %v3774, %v3774
        %3935 = vmatpush.msra.mxu0 %v3934
        %v3936 = vand.u32 %v3757, 4294901760
        %v3937 = vsub.f32 %v3757, %v3936
        %3938 = vmatmul.f32.gmra.mxu0 %v3937
        %v3939 = vpop.f32.mrf.mxu0
        %v3940 = vadd.f32 %v3902, %v3939
        %3941 = vdwg.mxu0
        %3942 = vmatpush.msra.mxu0 %v3789
        %3943 = vmatpush.msra.mxu0 %v3788
        %3944 = vmatpush.msra.mxu0 %v3787
        %3945 = vmatpush.msra.mxu0 %v3786
        %3946 = vmatpush.msra.mxu0 %v3785
        %3947 = vmatpush.msra.mxu0 %v3784
        %3948 = vmatpush.msra.mxu0 %v3783
        %3949 = vmatpush.msra.mxu0 %v3782
        %3950 = vmatpush.msra.mxu0 %v3781
        %3951 = vmatpush.msra.mxu0 %v3780
        %3952 = vmatpush.msra.mxu0 %v3779
        %3953 = vmatpush.msra.mxu0 %v3778
        %3954 = vmatpush.msra.mxu0 %v3777
        %3955 = vmatpush.msra.mxu0 %v3776
        %3956 = vmatpush.msra.mxu0 %v3775
        %3957 = vmatpush.msra.mxu0 %v3774
        %v3958 = vand.u32 %v3757, 4294901760
        %v3959 = vsub.f32 %v3757, %v3958
        %v3960 = vand.u32 %v3959, 4294901760
        %3961 = vmatmul.f32.gmra.mxu0 %v3960
        %v3962 = vpop.f32.mrf.mxu0
        %v3963 = vadd.f32 %v3940, %v3962
        %3964 = vdwg.mxu0
        %v3965 = vsub.f32 %v3789, %v3789
        %v3966 = vand.u32 %v3965, 4294901760
        %3967 = vmatpush.msra.mxu0 %v3966
        %v3968 = vsub.f32 %v3788, %v3788
        %v3969 = vand.u32 %v3968, 4294901760
        %3970 = vmatpush.msra.mxu0 %v3969
        %v3971 = vsub.f32 %v3787, %v3787
        %v3972 = vand.u32 %v3971, 4294901760
        %3973 = vmatpush.msra.mxu0 %v3972
        %v3974 = vsub.f32 %v3786, %v3786
        %v3975 = vand.u32 %v3974, 4294901760
        %3976 = vmatpush.msra.mxu0 %v3975
        %v3977 = vsub.f32 %v3785, %v3785
        %v3978 = vand.u32 %v3977, 4294901760
        %3979 = vmatpush.msra.mxu0 %v3978
        %v3980 = vsub.f32 %v3784, %v3784
        %v3981 = vand.u32 %v3980, 4294901760
        %3982 = vmatpush.msra.mxu0 %v3981
        %v3983 = vsub.f32 %v3783, %v3783
        %v3984 = vand.u32 %v3983, 4294901760
        %3985 = vmatpush.msra.mxu0 %v3984
        %v3986 = vsub.f32 %v3782, %v3782
        %v3987 = vand.u32 %v3986, 4294901760
        %3988 = vmatpush.msra.mxu0 %v3987
        %v3989 = vsub.f32 %v3781, %v3781
        %v3990 = vand.u32 %v3989, 4294901760
        %3991 = vmatpush.msra.mxu0 %v3990
        %v3992 = vsub.f32 %v3780, %v3780
        %v3993 = vand.u32 %v3992, 4294901760
        %3994 = vmatpush.msra.mxu0 %v3993
        %v3995 = vsub.f32 %v3779, %v3779
        %v3996 = vand.u32 %v3995, 4294901760
        %3997 = vmatpush.msra.mxu0 %v3996
        %v3998 = vsub.f32 %v3778, %v3778
        %v3999 = vand.u32 %v3998, 4294901760
        %4000 = vmatpush.msra.mxu0 %v3999
        %v4001 = vsub.f32 %v3777, %v3777
        %v4002 = vand.u32 %v4001, 4294901760
        %4003 = vmatpush.msra.mxu0 %v4002
        %v4004 = vsub.f32 %v3776, %v3776
        %v4005 = vand.u32 %v4004, 4294901760
        %4006 = vmatpush.msra.mxu0 %v4005
        %v4007 = vsub.f32 %v3775, %v3775
        %v4008 = vand.u32 %v4007, 4294901760
        %4009 = vmatpush.msra.mxu0 %v4008
        %v4010 = vsub.f32 %v3774, %v3774
        %v4011 = vand.u32 %v4010, 4294901760
        %4012 = vmatpush.msra.mxu0 %v4011
        %v4013 = vand.u32 %v3757, 4294901760
        %4014 = vmatmul.f32.gmra.mxu0 %v4013
        %v4015 = vpop.f32.mrf.mxu0
        %v4016 = vadd.f32 %v3963, %v4015
        %4017 = vdwg.mxu0
        %4018 = vmatpush.msra.mxu0 %v3789
        %4019 = vmatpush.msra.mxu0 %v3788
        %4020 = vmatpush.msra.mxu0 %v3787
        %4021 = vmatpush.msra.mxu0 %v3786
        %4022 = vmatpush.msra.mxu0 %v3785
        %4023 = vmatpush.msra.mxu0 %v3784
        %4024 = vmatpush.msra.mxu0 %v3783
        %4025 = vmatpush.msra.mxu0 %v3782
        %4026 = vmatpush.msra.mxu0 %v3781
        %4027 = vmatpush.msra.mxu0 %v3780
        %4028 = vmatpush.msra.mxu0 %v3779
        %4029 = vmatpush.msra.mxu0 %v3778
        %4030 = vmatpush.msra.mxu0 %v3777
        %4031 = vmatpush.msra.mxu0 %v3776
        %4032 = vmatpush.msra.mxu0 %v3775
        %4033 = vmatpush.msra.mxu0 %v3774
        %v4034 = vand.u32 %v3757, 4294901760
        %4035 = vmatmul.f32.gmra.mxu0 %v4034
        %v4036 = vpop.f32.mrf.mxu0
        %v4037 = vadd.f32 %v4016, %v4036
        %4038 = vdwg.mxu0
        %v4039 = vmax.f32 %v4037, 0.0
        %v4040 = vadd.f32 %v3757, %v4039
        %4041 = vst [vmem:[%s299] sm:$0xff] %v4040
        %s4042 = sand.u32 %s203, 1
        %s4043 = scalar_lea.sflag [#allocation3], %s4042
        %s4044 = sand.u32 %s203, 1
        %s4045 = smul.addr %s4044, 8
        %s4046 = scalar_lea.vmem [#allocation2], %s4045
        // Predicated region
        $region53: #{_lambda_.1} parent=51 // pred_check
          %p4047 = pneg %p213
        $region54: #{_lambda_.1} parent=51 // pred_check_branch
          %4049 = sbr.rel (%p4047) target = $region56
        $region55: #{_lambda_.1} parent=51 // pred_region
          %4051 = vsyncadd %s4043, 0
          %s4052 = smul.addr %s22, 8
          %s4053 = scalar_lea.hbm %s8, %s4052
          %s4055 = sshll.u32 %s4046, 4
          %s4056 = int_to_ptr.vmem [resolvable:$true] %s4055
          %s4057 = sshll.u32 %s4053, 4
          %s4058 = int_to_ptr.hbm [resolvable:$true] %s4057
          %4060 = dma.vmem_to_hbm [thread:$0]  %s4056, 128, %s4058, %s4043
        $region56: #{_lambda_.1} parent=51 // pred_fallthru
          _
      $region52: #{_lambda_.1} parent=5 // pred_fallthru
        _
      %p4061 = scmp.le.s32.totalorder 2, %s17
      // Predicated region
      $region57: #{_lambda_.1} parent=5 // pred_check
        %p4062 = pneg %p4061
      $region58: #{_lambda_.1} parent=5 // pred_check_branch
        %4064 = sbr.rel (%p4062) target = $region60
      $region59: #{_lambda_.1} parent=5 // pred_region
        %s4065 = ssub.s32 %s17, 2
        // Predicated region
        $region61: #{_lambda_.1} parent=59 // pred_check
          %p4066 = pneg %p219
        $region62: #{_lambda_.1} parent=59 // pred_check_branch
          %4068 = sbr.rel (%p4066) target = $region64
        $region63: #{_lambda_.1} parent=59 // pred_region
          %s4069 = sand.u32 %s204, 1
          %s4070 = scalar_lea.sflag [#allocation3], %s4069
          %s4071 = sand.u32 %s204, 1
          %s4072 = smul.addr %s4071, 8
          %s4073 = scalar_lea.vmem [#allocation2], %s4072
          %4075 = dma.done %s4070, 128
        $region64: #{_lambda_.1} parent=59 // pred_fallthru
          _
      $region60: #{_lambda_.1} parent=5 // pred_fallthru
        _
    $region6: #{_lambda_.1} parent=1 // loop_footer
      %s21 = sadd.s32 1, %s17
    $region7: #{_lambda_.1} parent=1 // loop_footer_branch
      %16 = sbr.rel target = $region3
    $region8: #{_lambda_.1} parent=1 // loop_exit
      _
    %4076 = vsyncpa [#allocation3], 1
    %s4077 = scalar_lea.sflag [#allocation3], 1
    %4078 = vsyncpa %s4077, 1

</llo_original>
